<compile_context>
chip_gen: v6e
topology: v6e:2x2x1
jax: 0.10.0
libtpu: 0.0.40
codegen_flags: <defaults>
</compile_context>

<pallas_src>
import numpy as np
import jax
import jax.numpy as jnp
from jax import lax
from jax.experimental import pallas as pl
from jax.experimental.pallas import tpu as pltpu

ACTION_LEN = 5
STATE_MEMORY_LEN = 8
N_CONV = 128   # vectorOutDim
N_FC = 128     # scalarOutDim
N_FC1 = 128    # numFcOutput
KSIZE = 4
T_CONV = STATE_MEMORY_LEN - KSIZE + 1   # 5
C_CONV = ACTION_LEN - KSIZE + 1         # 2
NUM_FC_INPUT = 2 * N_CONV * T_CONV + 3 * N_FC + N_CONV * C_CONV   # 1920
NUM_FC_PAD = 2048                       # pad K to a multiple of 256
D_IN = 6 * STATE_MEMORY_LEN             # 48


def _round_up(v, m):
    return ((v + m - 1) // m) * m


# ----------------------------- kernel -----------------------------
def critic_kernel(x_ref, wpre_ref, bpre_ref, wfc_ref, bfc_ref,
                  wout_ref, bout_ref, o_ref):
    # x: [TILE_B, 48] bf16
    x = x_ref[...]

    # Fused conv/scalar-head stage: one MXU matmul, fused bias + ReLU.
    feat = jnp.dot(x, wpre_ref[...], preferred_element_type=jnp.float32)
    feat = jnp.maximum(feat + bpre_ref[...], 0.0)              # [TILE_B, 2048] f32

    # fullyConnected: [TILE_B, 2048] @ [2048, 128], fused bias + ReLU.
    fc = jnp.dot(feat.astype(jnp.bfloat16), wfc_ref[...],
                 preferred_element_type=jnp.float32)
    fc = jnp.maximum(fc + bfc_ref[...], 0.0)                   # [TILE_B, 128] f32

    # outputLayer as wout [1,128] contracted against fc's lane dim -> [1, TILE_B]
    # (keeps the stored output lane-dense).
    out = lax.dot_general(wout_ref[...], fc.astype(jnp.bfloat16),
                          dimension_numbers=(((1,), (1,)), ((), ())),
                          preferred_element_type=jnp.float32)  # [1, TILE_B]
    o_ref[...] = out + bout_ref[...]


# ------------------------- weight folding -------------------------
def _conv_toeplitz(w, length):
    """w: [N_CONV, 1, KSIZE].  Returns [length, N_CONV * (length-K+1)] whose
    column ordering matches torch's channel-major flatten (col = co*T + t)."""
    T = length - KSIZE + 1
    m = jnp.zeros((length, N_CONV, T), jnp.float32)
    for t in range(T):
        for k in range(KSIZE):
            m = m.at[t + k, :, t].set(w[:, 0, k])
    return m.reshape(length, N_CONV * T)


def _build_fused_weights(p):
    """Fold conv + scalar heads into W_pre [48, 2048], b_pre [1, 2048] and
    return wfc [2048, 128] (fullyConnected weight, transposed + K-padded)."""
    W = jnp.zeros((D_IN, NUM_FC_INPUT), jnp.float32)
    b_parts = []
    col = 0

    # bitrateFc: input x[:, 0, -1]  (flat index 7)
    W = W.at[0 * STATE_MEMORY_LEN + STATE_MEMORY_LEN - 1,
             col:col + N_FC].set(p["bitrate_w"][:, 0])
    b_parts.append(p["bitrate_b"]); col += N_FC

    # bufferFc: input x[:, 1, -1]  (flat index 15)
    W = W.at[1 * STATE_MEMORY_LEN + STATE_MEMORY_LEN - 1,
             col:col + N_FC].set(p["buffer_w"][:, 0])
    b_parts.append(p["buffer_b"]); col += N_FC

    # tConv1d on channel 2 (flat 16..23)
    W = W.at[2 * STATE_MEMORY_LEN:3 * STATE_MEMORY_LEN,
             col:col + N_CONV * T_CONV].set(
        _conv_toeplitz(p["tConv_w"], STATE_MEMORY_LEN))
    b_parts.append(jnp.repeat(p["tConv_b"], T_CONV)); col += N_CONV * T_CONV

    # dConv1d on channel 3 (flat 24..31)
    W = W.at[3 * STATE_MEMORY_LEN:4 * STATE_MEMORY_LEN,
             col:col + N_CONV * T_CONV].set(
        _conv_toeplitz(p["dConv_w"], STATE_MEMORY_LEN))
    b_parts.append(jnp.repeat(p["dConv_b"], T_CONV)); col += N_CONV * T_CONV

    # cConv1d on channel 4, first ACTION_LEN steps (flat 32..36)
    W = W.at[4 * STATE_MEMORY_LEN:4 * STATE_MEMORY_LEN + ACTION_LEN,
             col:col + N_CONV * C_CONV].set(
        _conv_toeplitz(p["cConv_w"], ACTION_LEN))
    b_parts.append(jnp.repeat(p["cConv_b"], C_CONV)); col += N_CONV * C_CONV

    # leftChunkFc: input x[:, 5, -1]  (flat index 47)
    W = W.at[5 * STATE_MEMORY_LEN + STATE_MEMORY_LEN - 1,
             col:col + N_FC].set(p["left_w"][:, 0])
    b_parts.append(p["left_b"]); col += N_FC

    b = jnp.concatenate(b_parts).reshape(1, NUM_FC_INPUT)

    # Pad the contraction dimension 1920 -> 2048 (zeros: no effect on result).
    pad = NUM_FC_PAD - NUM_FC_INPUT
    W = jnp.pad(W, ((0, 0), (0, pad)))
    b = jnp.pad(b, ((0, 0), (0, pad)))
    wfc = jnp.pad(jnp.transpose(p["fc_w"], (1, 0)), ((0, pad), (0, 0)))  # [2048,128]
    return W, b, wfc


# ----------------------------- wrapper -----------------------------
def critic_forward(x, params, *, tile_b=512):
    """x: [B, 6, 8] float32 (torch NCW).  Returns [B, 1] float32."""
    B = x.shape[0]
    W_pre, b_pre, wfc = _build_fused_weights(params)

    # Flatten to lane-contiguous [B, 48] (channel-major, matches flat idx c*8+t).
    x_flat = x.reshape(B, D_IN).astype(jnp.float32)

    # Batch tile: lane-dense output wants a multiple of 128; cap for VMEM
    # (<=512 rows keeps f32 feat ~4 MB — safe on v7x's 64 MiB VMEM too).
    tb = min(tile_b, _round_up(max(B, 1), 128))
    b_pad = _round_up(B, tb)
    if b_pad != B:
        x_flat = jnp.pad(x_flat, ((0, b_pad - B), (0, 0)))
    grid = (b_pad // tb,)

    args = (
        x_flat.astype(jnp.bfloat16),                        # [B_pad, 48]
        W_pre.astype(jnp.bfloat16),                         # [48, 2048]
        b_pre,                                              # [1, 2048] f32
        wfc.astype(jnp.bfloat16),                           # [2048, 128]
        params["fc_b"].reshape(1, N_FC1).astype(jnp.float32),
        params["out_w"].astype(jnp.bfloat16),               # [1, 128]
        params["out_b"].reshape(1, 1).astype(jnp.float32),
    )

    out = pl.pallas_call(
        critic_kernel,
        out_shape=jax.ShapeDtypeStruct((grid[0], 1, tb), jnp.float32),
        grid=grid,
        in_specs=[
            pl.BlockSpec((tb, D_IN), lambda i: (i, 0)),            # x tile
            pl.BlockSpec((D_IN, NUM_FC_PAD), lambda i: (0, 0)),    # W_pre (resident)
            pl.BlockSpec((1, NUM_FC_PAD), lambda i: (0, 0)),       # b_pre
            pl.BlockSpec((NUM_FC_PAD, N_FC1), lambda i: (0, 0)),   # wfc
            pl.BlockSpec((1, N_FC1), lambda i: (0, 0)),            # bfc
            pl.BlockSpec((1, N_FC1), lambda i: (0, 0)),            # wout
            pl.BlockSpec((1, 1), lambda i: (0, 0)),                # bout
        ],
        out_specs=pl.BlockSpec((None, 1, tb), lambda i: (i, 0, 0)),
        compiler_params=pltpu.CompilerParams(
            dimension_semantics=("parallel",),
        ),
    )(*args)

    return out.reshape(b_pad)[:B].reshape(B, 1)


# ----------------- pure-JAX reference (torch semantics, f32) -----------------
def critic_reference(x, p):
    def lin1(s, w, b):                       # s [B,1], w [128,1], b [128]
        return jax.nn.relu(s @ w.T + b)

    def conv(xr, w, b):                      # xr [B,L], w [128,1,4], b [128]
        L = xr.shape[1]
        cols = [xr[:, t:t + KSIZE] @ w[:, 0, :].T + b for t in range(L - KSIZE + 1)]
        return jax.nn.relu(jnp.stack(cols, axis=2))          # [B, 128, L-3]

    B = x.shape[0]
    bitrate = lin1(x[:, 0:1, -1], p["bitrate_w"], p["bitrate_b"])
    buffer_ = lin1(x[:, 1:2, -1], p["buffer_w"], p["buffer_b"])
    t_out = conv(x[:, 2, :], p["tConv_w"], p["tConv_b"])
    d_out = conv(x[:, 3, :], p["dConv_w"], p["dConv_b"])
    c_out = conv(x[:, 4, :ACTION_LEN], p["cConv_w"], p["cConv_b"])
    left = lin1(x[:, 5:6, -1], p["left_w"], p["left_b"])
    feat = jnp.concatenate(
        [bitrate, buffer_,
         t_out.reshape(B, -1), d_out.reshape(B, -1), c_out.reshape(B, -1),
         left], axis=1)
    fc = jax.nn.relu(feat @ p["fc_w"].T + p["fc_b"])
    return fc @ p["out_w"].T + p["out_b"]


# ----------------------- deterministic parameter init -----------------------
def make_params(key):
    def xavier(key, shape, fan_in, fan_out):
        bound = np.sqrt(6.0 / (fan_in + fan_out))
        return jax.random.uniform(key, shape, jnp.float32, -bound, bound)

    ks = jax.random.split(key, 10)
    return {
        "tConv_w": xavier(ks[0], (N_CONV, 1, KSIZE), KSIZE, N_CONV * KSIZE),
        "tConv_b": jnp.zeros((N_CONV,), jnp.float32),
        "dConv_w": xavier(ks[1], (N_CONV, 1, KSIZE), KSIZE, N_CONV * KSIZE),
        "dConv_b": jnp.zeros((N_CONV,), jnp.float32),
        "cConv_w": 0.1 * jax.random.normal(ks[2], (N_CONV, 1, KSIZE), jnp.float32),
        "cConv_b": jnp.zeros((N_CONV,), jnp.float32),
        "bitrate_w": xavier(ks[3], (N_FC, 1), 1, N_FC),
        "bitrate_b": jnp.zeros((N_FC,), jnp.float32),
        "buffer_w": xavier(ks[4], (N_FC, 1), 1, N_FC),
        "buffer_b": jnp.zeros((N_FC,), jnp.float32),
        "left_w": xavier(ks[5], (N_FC, 1), 1, N_FC),
        "left_b": jnp.zeros((N_FC,), jnp.float32),
        "fc_w": xavier(ks[6], (N_FC1, NUM_FC_INPUT), NUM_FC_INPUT, N_FC1),
        "fc_b": jnp.zeros((N_FC1,), jnp.float32),
        "out_w": xavier(ks[7], (1, N_FC1), N_FC1, 1),
        "out_b": xavier(ks[8], (1,), N_FC1, 1),
    }


if __name__ == "__main__":
    key = jax.random.PRNGKey(0)
    k_param, k_x = jax.random.split(key)
    params = make_params(k_param)

    B = 4
    x = jax.random.normal(k_x, (B, 6, STATE_MEMORY_LEN), jnp.float32)

    out = jax.jit(critic_forward)(x, params)
    out = jax.block_until_ready(out)

    ref = critic_reference(x, params)
    assert out.shape == (B, 1), out.shape
    # bf16 MXU operands (f32 accumulation) -> relaxed tolerance vs f32 reference.
    np.testing.assert_allclose(np.asarray(out), np.asarray(ref), rtol=5e-2, atol=5e-2)

    print("KERNEL_OK")
</pallas_src>

<mosaic_0001>
module attributes {stable_mosaic.version = 11 : i64} {
  func.func @critic_kernel(%arg0: i32, %arg1: memref<128x48xbf16, #tpu.memory_space<vmem>>, %arg2: memref<48x2048xbf16, #tpu.memory_space<vmem>>, %arg3: memref<1x2048xf32, #tpu.memory_space<vmem>>, %arg4: memref<2048x128xbf16, #tpu.memory_space<vmem>>, %arg5: memref<1x128xf32, #tpu.memory_space<vmem>>, %arg6: memref<1x128xbf16, #tpu.memory_space<vmem>>, %arg7: memref<1x1xf32, #tpu.memory_space<vmem>>, %arg8: memref<1x1x128xf32, #tpu.memory_space<vmem>>) attributes {dimension_semantics = [#tpu.dimension_semantics<parallel>], iteration_bounds = array<i64: 1>, scalar_prefetch = 0 : i64, scratch_operands = 0 : i64, tpu.core_type = #tpu.core_type<tc>, window_params = [{transform_indices = @transform_0, window_bounds = array<i64: 128, 48>}, {pipeline_mode = #tpu.pipeline_mode<synchronous>, transform_indices = @transform_1, window_bounds = array<i64: 48, 2048>}, {pipeline_mode = #tpu.pipeline_mode<synchronous>, transform_indices = @transform_2, window_bounds = array<i64: 1, 2048>}, {pipeline_mode = #tpu.pipeline_mode<synchronous>, transform_indices = @transform_3, window_bounds = array<i64: 2048, 128>}, {pipeline_mode = #tpu.pipeline_mode<synchronous>, transform_indices = @transform_4, window_bounds = array<i64: 1, 128>}, {pipeline_mode = #tpu.pipeline_mode<synchronous>, transform_indices = @transform_5, window_bounds = array<i64: 1, 128>}, {pipeline_mode = #tpu.pipeline_mode<synchronous>, transform_indices = @transform_6, window_bounds = array<i64: 1, 1>}, {transform_indices = @transform_7, window_bounds = array<i64: 1, 1, 128>}]} {
    %c0 = arith.constant 0 : index
    %c0_0 = arith.constant 0 : index
    %0 = vector.load %arg1[%c0, %c0_0] : memref<128x48xbf16, #tpu.memory_space<vmem>>, vector<128x48xbf16>
    %c0_1 = arith.constant 0 : index
    %c0_2 = arith.constant 0 : index
    %1 = vector.load %arg2[%c0_1, %c0_2] : memref<48x2048xbf16, #tpu.memory_space<vmem>>, vector<48x2048xbf16>
    %cst = arith.constant dense<0.000000e+00> : vector<128x2048xf32>
    %2 = tpu.matmul %0, %1, %cst {dimension_numbers = #tpu.dot_dimension_numbers<[1], [0], [0], [1], [0, 0, 1, 1], [], []>} : vector<128x48xbf16>, vector<48x2048xbf16>, vector<128x2048xf32> -> vector<128x2048xf32>
    %c0_3 = arith.constant 0 : index
    %c0_4 = arith.constant 0 : index
    %3 = vector.load %arg3[%c0_3, %c0_4] : memref<1x2048xf32, #tpu.memory_space<vmem>>, vector<1x2048xf32>
    %4 = vector.broadcast %3 : vector<1x2048xf32> to vector<128x2048xf32>
    %5 = arith.addf %2, %4 : vector<128x2048xf32>
    %cst_5 = arith.constant 0.000000e+00 : f32
    %6 = vector.broadcast %cst_5 : f32 to vector<128x2048xf32>
    %7 = arith.maximumf %5, %6 : vector<128x2048xf32>
    %8 = arith.truncf %7 : vector<128x2048xf32> to vector<128x2048xbf16>
    %c0_6 = arith.constant 0 : index
    %c0_7 = arith.constant 0 : index
    %9 = vector.load %arg4[%c0_6, %c0_7] : memref<2048x128xbf16, #tpu.memory_space<vmem>>, vector<2048x128xbf16>
    %cst_8 = arith.constant dense<0.000000e+00> : vector<128x128xf32>
    %10 = tpu.matmul %8, %9, %cst_8 {dimension_numbers = #tpu.dot_dimension_numbers<[1], [0], [0], [1], [0, 0, 1, 1], [], []>} : vector<128x2048xbf16>, vector<2048x128xbf16>, vector<128x128xf32> -> vector<128x128xf32>
    %c0_9 = arith.constant 0 : index
    %c0_10 = arith.constant 0 : index
    %11 = vector.load %arg5[%c0_9, %c0_10] : memref<1x128xf32, #tpu.memory_space<vmem>>, vector<1x128xf32>
    %12 = vector.broadcast %11 : vector<1x128xf32> to vector<128x128xf32>
    %13 = arith.addf %10, %12 : vector<128x128xf32>
    %cst_11 = arith.constant 0.000000e+00 : f32
    %14 = vector.broadcast %cst_11 : f32 to vector<128x128xf32>
    %15 = arith.maximumf %13, %14 : vector<128x128xf32>
    %c0_12 = arith.constant 0 : index
    %c0_13 = arith.constant 0 : index
    %16 = vector.load %arg6[%c0_12, %c0_13] : memref<1x128xbf16, #tpu.memory_space<vmem>>, vector<1x128xbf16>
    %17 = arith.truncf %15 : vector<128x128xf32> to vector<128x128xbf16>
    %cst_14 = arith.constant dense<0.000000e+00> : vector<1x128xf32>
    %18 = tpu.matmul %16, %17, %cst_14 {dimension_numbers = #tpu.dot_dimension_numbers<[1], [1], [0], [0], [0, 0, 1, 0], [], []>} : vector<1x128xbf16>, vector<128x128xbf16>, vector<1x128xf32> -> vector<1x128xf32>
    %c0_15 = arith.constant 0 : index
    %c0_16 = arith.constant 0 : index
    %19 = vector.load %arg7[%c0_15, %c0_16] : memref<1x1xf32, #tpu.memory_space<vmem>>, vector<1x1xf32>
    %20 = vector.broadcast %19 : vector<1x1xf32> to vector<1x128xf32>
    %21 = arith.addf %18, %20 : vector<1x128xf32>
    %c0_17 = arith.constant 0 : index
    %c0_18 = arith.constant 0 : index
    %c0_19 = arith.constant 0 : index
    %22 = vector.load %arg8[%c0_17, %c0_18, %c0_19] : memref<1x1x128xf32, #tpu.memory_space<vmem>>, vector<1x1x128xf32>
    %23 = vector.shape_cast %22 : vector<1x1x128xf32> to vector<1x128xf32>
    %24 = vector.shape_cast %21 : vector<1x128xf32> to vector<1x1x128xf32>
    tpu.vector_store %arg8[%c0_17, %c0_18, %c0_19], %24 {strides = array<i32>} : memref<1x1x128xf32, #tpu.memory_space<vmem>>, vector<1x1x128xf32>,
    return
  }
  func.func @transform_0(%arg0: i32) -> (i32, i32) {
    %c0_i32 = arith.constant 0 : i32
    %c0_i32_0 = arith.constant 0 : i32
    return %arg0, %c0_i32 : i32, i32
  }
  func.func @transform_1(%arg0: i32) -> (i32, i32) {
    %c0_i32 = arith.constant 0 : i32
    %c0_i32_0 = arith.constant 0 : i32
    %c0_i32_1 = arith.constant 0 : i32
    return %c0_i32, %c0_i32_0 : i32, i32
  }
  func.func @transform_2(%arg0: i32) -> (i32, i32) {
    %c0_i32 = arith.constant 0 : i32
    %c0_i32_0 = arith.constant 0 : i32
    %c0_i32_1 = arith.constant 0 : i32
    return %c0_i32, %c0_i32_0 : i32, i32
  }
  func.func @transform_3(%arg0: i32) -> (i32, i32) {
    %c0_i32 = arith.constant 0 : i32
    %c0_i32_0 = arith.constant 0 : i32
    %c0_i32_1 = arith.constant 0 : i32
    return %c0_i32, %c0_i32_0 : i32, i32
  }
  func.func @transform_4(%arg0: i32) -> (i32, i32) {
    %c0_i32 = arith.constant 0 : i32
    %c0_i32_0 = arith.constant 0 : i32
    %c0_i32_1 = arith.constant 0 : i32
    return %c0_i32, %c0_i32_0 : i32, i32
  }
  func.func @transform_5(%arg0: i32) -> (i32, i32) {
    %c0_i32 = arith.constant 0 : i32
    %c0_i32_0 = arith.constant 0 : i32
    %c0_i32_1 = arith.constant 0 : i32
    return %c0_i32, %c0_i32_0 : i32, i32
  }
  func.func @transform_6(%arg0: i32) -> (i32, i32) {
    %c0_i32 = arith.constant 0 : i32
    %c0_i32_0 = arith.constant 0 : i32
    %c0_i32_1 = arith.constant 0 : i32
    return %c0_i32, %c0_i32_0 : i32, i32
  }
  func.func @transform_7(%arg0: i32) -> (i32, i32, i32) {
    %c0_i32 = arith.constant 0 : i32
    %c0_i32_0 = arith.constant 0 : i32
    %c0_i32_1 = arith.constant 0 : i32
    return %arg0, %c0_i32, %c0_i32_0 : i32, i32, i32
  }
}

</mosaic_0001>

<llo_original>
// kernel: custom-call
$region0: #{custom-call}
  %s0 = inlined_call_operand.vmem [shape: f32[1920], index: 0, kind: output, shape index: {}]

// kernel: critic_forward.1
$region0: #{critic_forward.1}
  #allocation0 [shape = 'u32[]', space=smem, size = 0x4, offset = 0x4, fixed_abs, tag = 'smem constant byte address 0x4 - core index']
  #allocation1 [shape = 'u32[144,128]{1,0:T(1,128)}', space=vmem, size = 0x12000, scoped, tag = 'internal scratch']
  #allocation2 [shape = 'f32[1,1]{1,0:T(1,128)S(1)}', space=vmem, size = 0x200, scoped, tag = 'scoped memory for critic_forward.1']
  %s0 = inlined_call_operand.vmem [shape: bf16[128,48], index: 0, kind: input, shape index: {}]
  %s1 = inlined_call_operand.vmem [shape: bf16[48,2048], index: 1, kind: input, shape index: {}]
  %s2 = inlined_call_operand.vmem [shape: f32[1,2048], index: 2, kind: input, shape index: {}]
  %s3 = inlined_call_operand.vmem [shape: bf16[2048,128], index: 3, kind: input, shape index: {}]
  %s4 = inlined_call_operand.vmem [shape: f32[1,128], index: 4, kind: input, shape index: {}]
  %s5 = inlined_call_operand.vmem [shape: bf16[1,128], index: 5, kind: input, shape index: {}]
  %s6 = inlined_call_operand.<no memory space> [shape: f32[1,1], index: 6, kind: input, shape index: {}]
  %s7 = inlined_call_operand.vmem [shape: f32[1,1,128], index: 7, kind: output, shape index: {}]
  %s8 = sld [smem:[#allocation0]]
  $region38: #{critic_forward.1} parent=0
    _
  %s10 = ssub.s32 1, %s8
  %s11 = scalar_select 0, %s10, %s8
  %v12 = vstv %s6
  %13 = vst [vmem:[#allocation2] sm:$0x1] %v12
  // Predicated region
  $region2: #{critic_forward.1} parent=0 // pred_check
    _
  $region3: #{critic_forward.1} parent=0 // pred_check_branch
    %15 = sbr.rel (0) target = $region5
  $region4: #{critic_forward.1} parent=0 // pred_region
    _
  $region5: #{critic_forward.1} parent=0 // pred_fallthru
    _
  // Predicated region
  $region6: #{critic_forward.1} parent=0 // pred_check
    _
  $region7: #{critic_forward.1} parent=0 // pred_check_branch
    %17 = sbr.rel (0) target = $region9
  $region8: #{critic_forward.1} parent=0 // pred_region
    _
  $region9: #{critic_forward.1} parent=0 // pred_fallthru
    _
  // Predicated region
  $region10: #{critic_forward.1} parent=0 // pred_check
    _
  $region11: #{critic_forward.1} parent=0 // pred_check_branch
    %19 = sbr.rel (0) target = $region13
  $region12: #{critic_forward.1} parent=0 // pred_region
    _
  $region13: #{critic_forward.1} parent=0 // pred_fallthru
    _
  // Predicated region
  $region14: #{critic_forward.1} parent=0 // pred_check
    _
  $region15: #{critic_forward.1} parent=0 // pred_check_branch
    %21 = sbr.rel (0) target = $region17
  $region16: #{critic_forward.1} parent=0 // pred_region
    _
  $region17: #{critic_forward.1} parent=0 // pred_fallthru
    _
  // Predicated region
  $region18: #{critic_forward.1} parent=0 // pred_check
    _
  $region19: #{critic_forward.1} parent=0 // pred_check_branch
    %23 = sbr.rel (0) target = $region21
  $region20: #{critic_forward.1} parent=0 // pred_region
    _
  $region21: #{critic_forward.1} parent=0 // pred_fallthru
    _
  // Predicated region
  $region22: #{critic_forward.1} parent=0 // pred_check
    _
  $region23: #{critic_forward.1} parent=0 // pred_check_branch
    %25 = sbr.rel (0) target = $region25
  $region24: #{critic_forward.1} parent=0 // pred_region
    _
  $region25: #{critic_forward.1} parent=0 // pred_fallthru
    _
  // Predicated region
  $region26: #{critic_forward.1} parent=0 // pred_check
    _
  $region27: #{critic_forward.1} parent=0 // pred_check_branch
    %27 = sbr.rel (0) target = $region29
  $region28: #{critic_forward.1} parent=0 // pred_region
    _
  $region29: #{critic_forward.1} parent=0 // pred_fallthru
    _
  %v29 = vld [vmem:[%s0] sm:$0xf]
  %v30 = vld [vmem:[%s0 + $0x4] sm:$0xf]
  %v31 = vld [vmem:[%s0 + $0x8] sm:$0xf]
  %v32 = vld [vmem:[%s0 + $0xc] sm:$0xf]
  %v33 = vld [vmem:[%s0 + $0x10] sm:$0xf]
  %v34 = vld [vmem:[%s0 + $0x14] sm:$0xf]
  %v35 = vld [vmem:[%s0 + $0x18] sm:$0xf]
  %v36 = vld [vmem:[%s0 + $0x1c] sm:$0xf]
  %v37 = vld [vmem:[%s0 + $0x20] sm:$0xf]
  %v38 = vld [vmem:[%s0 + $0x24] sm:$0xf]
  %v39 = vld [vmem:[%s0 + $0x28] sm:$0xf]
  %v40 = vld [vmem:[%s0 + $0x2c] sm:$0xf]
  %v41 = vld [vmem:[%s0 + $0x30] sm:$0xf]
  %v42 = vld [vmem:[%s0 + $0x34] sm:$0xf]
  %v43 = vld [vmem:[%s0 + $0x38] sm:$0xf]
  %v44 = vld [vmem:[%s0 + $0x3c] sm:$0xf]
  %v45 = vld [vmem:[%s1] sm:$0xff]
  %v46 = vld [vmem:[%s1 + $0x8] sm:$0xff]
  %v47 = vld [vmem:[%s1 + $0x10] sm:$0xff]
  %v48 = vld [vmem:[%s1 + $0x18] sm:$0xff]
  %v49 = vld [vmem:[%s1 + $0x20] sm:$0xff]
  %v50 = vld [vmem:[%s1 + $0x28] sm:$0xff]
  %v51 = vld [vmem:[%s1 + $0x30] sm:$0xff]
  %v52 = vld [vmem:[%s1 + $0x38] sm:$0xff]
  %v53 = vld [vmem:[%s1 + $0x40] sm:$0xff]
  %v54 = vld [vmem:[%s1 + $0x48] sm:$0xff]
  %v55 = vld [vmem:[%s1 + $0x50] sm:$0xff]
  %v56 = vld [vmem:[%s1 + $0x58] sm:$0xff]
  %v57 = vld [vmem:[%s1 + $0x60] sm:$0xff]
  %v58 = vld [vmem:[%s1 + $0x68] sm:$0xff]
  %v59 = vld [vmem:[%s1 + $0x70] sm:$0xff]
  %v60 = vld [vmem:[%s1 + $0x78] sm:$0xff]
  %v61 = vld [vmem:[%s1 + $0x80] sm:$0xff]
  %v62 = vld [vmem:[%s1 + $0x88] sm:$0xff]
  %v63 = vld [vmem:[%s1 + $0x90] sm:$0xff]
  %v64 = vld [vmem:[%s1 + $0x98] sm:$0xff]
  %v65 = vld [vmem:[%s1 + $0xa0] sm:$0xff]
  %v66 = vld [vmem:[%s1 + $0xa8] sm:$0xff]
  %v67 = vld [vmem:[%s1 + $0xb0] sm:$0xff]
  %v68 = vld [vmem:[%s1 + $0xb8] sm:$0xff]
  %v69 = vld [vmem:[%s1 + $0xc0] sm:$0xff]
  %v70 = vld [vmem:[%s1 + $0xc8] sm:$0xff]
  %v71 = vld [vmem:[%s1 + $0xd0] sm:$0xff]
  %v72 = vld [vmem:[%s1 + $0xd8] sm:$0xff]
  %v73 = vld [vmem:[%s1 + $0xe0] sm:$0xff]
  %v74 = vld [vmem:[%s1 + $0xe8] sm:$0xff]
  %v75 = vld [vmem:[%s1 + $0xf0] sm:$0xff]
  %v76 = vld [vmem:[%s1 + $0xf8] sm:$0xff]
  %v77 = vld [vmem:[%s1 + $0x100] sm:$0xff]
  %v78 = vld [vmem:[%s1 + $0x108] sm:$0xff]
  %v79 = vld [vmem:[%s1 + $0x110] sm:$0xff]
  %v80 = vld [vmem:[%s1 + $0x118] sm:$0xff]
  %v81 = vld [vmem:[%s1 + $0x120] sm:$0xff]
  %v82 = vld [vmem:[%s1 + $0x128] sm:$0xff]
  %v83 = vld [vmem:[%s1 + $0x130] sm:$0xff]
  %v84 = vld [vmem:[%s1 + $0x138] sm:$0xff]
  %v85 = vld [vmem:[%s1 + $0x140] sm:$0xff]
  %v86 = vld [vmem:[%s1 + $0x148] sm:$0xff]
  %v87 = vld [vmem:[%s1 + $0x150] sm:$0xff]
  %v88 = vld [vmem:[%s1 + $0x158] sm:$0xff]
  %v89 = vld [vmem:[%s1 + $0x160] sm:$0xff]
  %v90 = vld [vmem:[%s1 + $0x168] sm:$0xff]
  %v91 = vld [vmem:[%s1 + $0x170] sm:$0xff]
  %v92 = vld [vmem:[%s1 + $0x178] sm:$0xff]
  %v93 = vld [vmem:[%s2] sm:$0xff]
  %v94 = vld [vmem:[%s2 + $0x8] sm:$0xff]
  %v97 = vlaneseq
  %v98 = vshrl.u32 %v97, 7
  %v99 = vsub.s32 0, %v98
  %v100 = vrot.slane %v93, %v99
  %v101 = vlaneseq
  %v102 = vshrl.u32 %v101, 7
  %v103 = vsub.s32 1, %v102
  %v104 = vrot.slane %v93, %v103
  %v105 = vlaneseq
  %v106 = vshrl.u32 %v105, 7
  %v107 = vsub.s32 2, %v106
  %v108 = vrot.slane %v93, %v107
  %v109 = vlaneseq
  %v110 = vshrl.u32 %v109, 7
  %v111 = vsub.s32 3, %v110
  %v112 = vrot.slane %v93, %v111
  %v113 = vlaneseq
  %v114 = vshrl.u32 %v113, 7
  %v115 = vsub.s32 4, %v114
  %v116 = vrot.slane %v93, %v115
  %v117 = vlaneseq
  %v118 = vshrl.u32 %v117, 7
  %v119 = vsub.s32 5, %v118
  %v120 = vrot.slane %v93, %v119
  %v121 = vlaneseq
  %v122 = vshrl.u32 %v121, 7
  %v123 = vsub.s32 6, %v122
  %v124 = vrot.slane %v93, %v123
  %v125 = vlaneseq
  %v126 = vshrl.u32 %v125, 7
  %v127 = vsub.s32 7, %v126
  %v128 = vrot.slane %v93, %v127
  %v129 = vlaneseq
  %v130 = vshrl.u32 %v129, 7
  %v131 = vsub.s32 0, %v130
  %v132 = vrot.slane %v94, %v131
  %v133 = vlaneseq
  %v134 = vshrl.u32 %v133, 7
  %v135 = vsub.s32 1, %v134
  %v136 = vrot.slane %v94, %v135
  %v137 = vlaneseq
  %v138 = vshrl.u32 %v137, 7
  %v139 = vsub.s32 2, %v138
  %v140 = vrot.slane %v94, %v139
  %v141 = vlaneseq
  %v142 = vshrl.u32 %v141, 7
  %v143 = vsub.s32 3, %v142
  %v144 = vrot.slane %v94, %v143
  %v145 = vlaneseq
  %v146 = vshrl.u32 %v145, 7
  %v147 = vsub.s32 4, %v146
  %v148 = vrot.slane %v94, %v147
  %v149 = vlaneseq
  %v150 = vshrl.u32 %v149, 7
  %v151 = vsub.s32 5, %v150
  %v152 = vrot.slane %v94, %v151
  %v153 = vlaneseq
  %v154 = vshrl.u32 %v153, 7
  %v155 = vsub.s32 6, %v154
  %v156 = vrot.slane %v94, %v155
  %v157 = vlaneseq
  %v158 = vshrl.u32 %v157, 7
  %v159 = vsub.s32 7, %v158
  %v160 = vrot.slane %v94, %v159
  %v193 = vunpack.c.l.b16 %v29
  %v194 = vunpack.c.l.b16 %v30
  %v195 = vunpack.c.l.b16 %v31
  %v196 = vunpack.c.l.b16 %v32
  %v197 = vunpack.c.l.b16 %v33
  %v198 = vunpack.c.l.b16 %v34
  %v199 = vunpack.c.l.b16 %v35
  %v200 = vunpack.c.l.b16 %v36
  %v201 = vunpack.c.l.b16 %v37
  %v202 = vunpack.c.l.b16 %v38
  %v203 = vunpack.c.l.b16 %v39
  %v204 = vunpack.c.l.b16 %v40
  %v205 = vunpack.c.l.b16 %v41
  %v206 = vunpack.c.l.b16 %v42
  %v207 = vunpack.c.l.b16 %v43
  %v208 = vunpack.c.l.b16 %v44
  %v209 = vpack.c.b16 %v194, %v193
  %v210 = vpack.c.b16 %v196, %v195
  %v211 = vpack.c.b16 %v198, %v197
  %v212 = vpack.c.b16 %v200, %v199
  %v213 = vpack.c.b16 %v202, %v201
  %v214 = vpack.c.b16 %v204, %v203
  %v215 = vpack.c.b16 %v206, %v205
  %v216 = vpack.c.b16 %v208, %v207
  %v265 = vunpack.c.l.b16 %v45
  %v266 = vunpack.c.h.b16 %v45
  %v267 = vunpack.c.l.b16 %v46
  %v268 = vunpack.c.h.b16 %v46
  %v269 = vunpack.c.l.b16 %v47
  %v270 = vunpack.c.h.b16 %v47
  %v271 = vunpack.c.l.b16 %v48
  %v272 = vunpack.c.h.b16 %v48
  %v273 = vunpack.c.l.b16 %v49
  %v274 = vunpack.c.h.b16 %v49
  %v275 = vunpack.c.l.b16 %v50
  %v276 = vunpack.c.h.b16 %v50
  %v277 = vunpack.c.l.b16 %v51
  %v278 = vunpack.c.h.b16 %v51
  %v279 = vunpack.c.l.b16 %v52
  %v280 = vunpack.c.h.b16 %v52
  %v281 = vunpack.c.l.b16 %v53
  %v282 = vunpack.c.h.b16 %v53
  %v283 = vunpack.c.l.b16 %v54
  %v284 = vunpack.c.h.b16 %v54
  %v285 = vunpack.c.l.b16 %v55
  %v286 = vunpack.c.h.b16 %v55
  %v287 = vunpack.c.l.b16 %v56
  %v288 = vunpack.c.h.b16 %v56
  %v289 = vunpack.c.l.b16 %v57
  %v290 = vunpack.c.h.b16 %v57
  %v291 = vunpack.c.l.b16 %v58
  %v292 = vunpack.c.h.b16 %v58
  %v293 = vunpack.c.l.b16 %v59
  %v294 = vunpack.c.h.b16 %v59
  %v295 = vunpack.c.l.b16 %v60
  %v296 = vunpack.c.h.b16 %v60
  %v297 = vunpack.c.l.b16 %v61
  %v298 = vunpack.c.h.b16 %v61
  %v299 = vunpack.c.l.b16 %v62
  %v300 = vunpack.c.h.b16 %v62
  %v301 = vunpack.c.l.b16 %v63
  %v302 = vunpack.c.h.b16 %v63
  %v303 = vunpack.c.l.b16 %v64
  %v304 = vunpack.c.h.b16 %v64
  %v305 = vunpack.c.l.b16 %v65
  %v306 = vunpack.c.h.b16 %v65
  %v307 = vunpack.c.l.b16 %v66
  %v308 = vunpack.c.h.b16 %v66
  %v309 = vunpack.c.l.b16 %v67
  %v310 = vunpack.c.h.b16 %v67
  %v311 = vunpack.c.l.b16 %v68
  %v312 = vunpack.c.h.b16 %v68
  %v313 = vunpack.c.l.b16 %v69
  %v314 = vunpack.c.h.b16 %v69
  %v315 = vunpack.c.l.b16 %v70
  %v316 = vunpack.c.h.b16 %v70
  %v317 = vunpack.c.l.b16 %v71
  %v318 = vunpack.c.h.b16 %v71
  %v319 = vunpack.c.l.b16 %v72
  %v320 = vunpack.c.h.b16 %v72
  %v321 = vunpack.c.l.b16 %v73
  %v322 = vunpack.c.h.b16 %v73
  %v323 = vunpack.c.l.b16 %v74
  %v324 = vunpack.c.h.b16 %v74
  %v325 = vunpack.c.l.b16 %v75
  %v326 = vunpack.c.h.b16 %v75
  %v327 = vunpack.c.l.b16 %v76
  %v328 = vunpack.c.h.b16 %v76
  %v329 = vunpack.c.l.b16 %v77
  %v330 = vunpack.c.h.b16 %v77
  %v331 = vunpack.c.l.b16 %v78
  %v332 = vunpack.c.h.b16 %v78
  %v333 = vunpack.c.l.b16 %v79
  %v334 = vunpack.c.h.b16 %v79
  %v335 = vunpack.c.l.b16 %v80
  %v336 = vunpack.c.h.b16 %v80
  %v337 = vunpack.c.l.b16 %v81
  %v338 = vunpack.c.h.b16 %v81
  %v339 = vunpack.c.l.b16 %v82
  %v340 = vunpack.c.h.b16 %v82
  %v341 = vunpack.c.l.b16 %v83
  %v342 = vunpack.c.h.b16 %v83
  %v343 = vunpack.c.l.b16 %v84
  %v344 = vunpack.c.h.b16 %v84
  %v345 = vunpack.c.l.b16 %v85
  %v346 = vunpack.c.h.b16 %v85
  %v347 = vunpack.c.l.b16 %v86
  %v348 = vunpack.c.h.b16 %v86
  %v349 = vunpack.c.l.b16 %v87
  %v350 = vunpack.c.h.b16 %v87
  %v351 = vunpack.c.l.b16 %v88
  %v352 = vunpack.c.h.b16 %v88
  %v353 = vunpack.c.l.b16 %v89
  %v354 = vunpack.c.h.b16 %v89
  %v355 = vunpack.c.l.b16 %v90
  %v356 = vunpack.c.h.b16 %v90
  %v357 = vunpack.c.l.b16 %v91
  %v358 = vunpack.c.h.b16 %v91
  %v359 = vunpack.c.l.b16 %v92
  %v360 = vunpack.c.h.b16 %v92
  %v361 = vpack.c.b16 %v281, %v265
  %v362 = vpack.c.b16 %v282, %v266
  %v363 = vpack.c.b16 %v283, %v267
  %v364 = vpack.c.b16 %v284, %v268
  %v365 = vpack.c.b16 %v285, %v269
  %v366 = vpack.c.b16 %v286, %v270
  %v367 = vpack.c.b16 %v287, %v271
  %v368 = vpack.c.b16 %v288, %v272
  %v369 = vpack.c.b16 %v289, %v273
  %v370 = vpack.c.b16 %v290, %v274
  %v371 = vpack.c.b16 %v291, %v275
  %v372 = vpack.c.b16 %v292, %v276
  %v373 = vpack.c.b16 %v293, %v277
  %v374 = vpack.c.b16 %v294, %v278
  %v375 = vpack.c.b16 %v295, %v279
  %v376 = vpack.c.b16 %v296, %v280
  %v377 = vpack.c.b16 %v313, %v297
  %v378 = vpack.c.b16 %v314, %v298
  %v379 = vpack.c.b16 %v315, %v299
  %v380 = vpack.c.b16 %v316, %v300
  %v381 = vpack.c.b16 %v317, %v301
  %v382 = vpack.c.b16 %v318, %v302
  %v383 = vpack.c.b16 %v319, %v303
  %v384 = vpack.c.b16 %v320, %v304
  %v385 = vpack.c.b16 %v321, %v305
  %v386 = vpack.c.b16 %v322, %v306
  %v387 = vpack.c.b16 %v323, %v307
  %v388 = vpack.c.b16 %v324, %v308
  %v389 = vpack.c.b16 %v325, %v309
  %v390 = vpack.c.b16 %v326, %v310
  %v391 = vpack.c.b16 %v327, %v311
  %v392 = vpack.c.b16 %v328, %v312
  %v393 = vpack.c.b16 %v345, %v329
  %v394 = vpack.c.b16 %v346, %v330
  %v395 = vpack.c.b16 %v347, %v331
  %v396 = vpack.c.b16 %v348, %v332
  %v397 = vpack.c.b16 %v349, %v333
  %v398 = vpack.c.b16 %v350, %v334
  %v399 = vpack.c.b16 %v351, %v335
  %v400 = vpack.c.b16 %v352, %v336
  %v401 = vpack.c.b16 %v353, %v337
  %v402 = vpack.c.b16 %v354, %v338
  %v403 = vpack.c.b16 %v355, %v339
  %v404 = vpack.c.b16 %v356, %v340
  %v405 = vpack.c.b16 %v357, %v341
  %v406 = vpack.c.b16 %v358, %v342
  %v407 = vpack.c.b16 %v359, %v343
  %v408 = vpack.c.b16 %v360, %v344
  %vm457 = vcmask 392192
  %v459 = vsel %vm457, %v209, 0
  %v462 = vsel %vm457, %v210, 0
  %v465 = vsel %vm457, %v211, 0
  %v468 = vsel %vm457, %v212, 0
  %v471 = vsel %vm457, %v213, 0
  %v474 = vsel %vm457, %v214, 0
  %v477 = vsel %vm457, %v215, 0
  %v480 = vsel %vm457, %v216, 0
  %482 = vmatprep.subr.bf16.mxu0 0
  %483 = vmatpush1.bf16.msra.mxu0 0
  %484 = vmatprep.subr.bf16.mxu0 0
  %485 = vmatpush1.bf16.msra.mxu0 0
  %486 = vmatprep.subr.bf16.mxu0 0
  %487 = vmatpush1.bf16.msra.mxu0 0
  %488 = vmatprep.subr.bf16.mxu0 0
  %489 = vmatpush1.bf16.msra.mxu0 0
  %490 = vmatprep.subr.bf16.mxu0 0
  %491 = vmatpush1.bf16.msra.mxu0 0
  %492 = vmatprep.subr.bf16.mxu0 %v394
  %493 = vmatpush1.bf16.msra.mxu0 %v393
  %494 = vmatprep.subr.bf16.mxu0 %v378
  %495 = vmatpush1.bf16.msra.mxu0 %v377
  %496 = vmatprep.subr.bf16.mxu0 %v362
  %497 = vmatpush1.bf16.msra.mxu0 %v361
  %498 = vmatprep.subr.bf16.mxu0 0
  %499 = vmatpush2.bf16.msra.mxu0 0
  %500 = vmatprep.subr.bf16.mxu0 0
  %501 = vmatpush2.bf16.msra.mxu0 0
  %502 = vmatprep.subr.bf16.mxu0 0
  %503 = vmatpush2.bf16.msra.mxu0 0
  %504 = vmatprep.subr.bf16.mxu0 0
  %505 = vmatpush2.bf16.msra.mxu0 0
  %506 = vmatprep.subr.bf16.mxu0 0
  %507 = vmatpush2.bf16.msra.mxu0 0
  %508 = vmatprep.subr.bf16.mxu0 0
  %509 = vmatpush2.bf16.msra.mxu0 0
  %510 = vmatprep.subr.bf16.mxu0 0
  %511 = vmatpush2.bf16.msra.mxu0 0
  %512 = vmatprep.subr.bf16.mxu0 0
  %513 = vmatpush2.bf16.msra.mxu0 0
  %514 = vmatprep.mubr.bf16.mxu0 0
  %515 = vmatmul.mubr.bf16.gmra.mxu0 %v459
  %v516 = vpop.f32.mrf.mxu0
  %v517 = vadd.f32 %v100, %v516
  %v518 = vpop.f32.mrf.mxu0
  %v519 = vadd.f32 %v104, %v518
  %v520 = vpop.f32.mrf.mxu0
  %v521 = vadd.f32 %v100, %v520
  %v522 = vpop.f32.mrf.mxu0
  %v523 = vadd.f32 %v104, %v522
  %524 = vmatprep.mubr.bf16.mxu0 0
  %525 = vmatmul.mubr.bf16.gmra.mxu0 %v462
  %v526 = vpop.f32.mrf.mxu0
  %v527 = vadd.f32 %v100, %v526
  %v528 = vpop.f32.mrf.mxu0
  %v529 = vadd.f32 %v104, %v528
  %v530 = vpop.f32.mrf.mxu0
  %v531 = vadd.f32 %v100, %v530
  %v532 = vpop.f32.mrf.mxu0
  %v533 = vadd.f32 %v104, %v532
  %534 = vmatprep.mubr.bf16.mxu0 0
  %535 = vmatmul.mubr.bf16.gmra.mxu0 %v465
  %v536 = vpop.f32.mrf.mxu0
  %v537 = vadd.f32 %v100, %v536
  %v538 = vpop.f32.mrf.mxu0
  %v539 = vadd.f32 %v104, %v538
  %v540 = vpop.f32.mrf.mxu0
  %v541 = vadd.f32 %v100, %v540
  %v542 = vpop.f32.mrf.mxu0
  %v543 = vadd.f32 %v104, %v542
  %544 = vmatprep.mubr.bf16.mxu0 0
  %545 = vmatmul.mubr.bf16.gmra.mxu0 %v468
  %v546 = vpop.f32.mrf.mxu0
  %v547 = vadd.f32 %v100, %v546
  %v548 = vpop.f32.mrf.mxu0
  %v549 = vadd.f32 %v104, %v548
  %v550 = vpop.f32.mrf.mxu0
  %v551 = vadd.f32 %v100, %v550
  %v552 = vpop.f32.mrf.mxu0
  %v553 = vadd.f32 %v104, %v552
  %554 = vmatprep.mubr.bf16.mxu0 0
  %555 = vmatmul.mubr.bf16.gmra.mxu0 %v471
  %v556 = vpop.f32.mrf.mxu0
  %v557 = vadd.f32 %v100, %v556
  %v558 = vpop.f32.mrf.mxu0
  %v559 = vadd.f32 %v104, %v558
  %v560 = vpop.f32.mrf.mxu0
  %v561 = vadd.f32 %v100, %v560
  %v562 = vpop.f32.mrf.mxu0
  %v563 = vadd.f32 %v104, %v562
  %564 = vmatprep.mubr.bf16.mxu0 0
  %565 = vmatmul.mubr.bf16.gmra.mxu0 %v474
  %v566 = vpop.f32.mrf.mxu0
  %v567 = vadd.f32 %v100, %v566
  %v568 = vpop.f32.mrf.mxu0
  %v569 = vadd.f32 %v104, %v568
  %v570 = vpop.f32.mrf.mxu0
  %v571 = vadd.f32 %v100, %v570
  %v572 = vpop.f32.mrf.mxu0
  %v573 = vadd.f32 %v104, %v572
  %574 = vmatprep.mubr.bf16.mxu0 0
  %575 = vmatmul.mubr.bf16.gmra.mxu0 %v477
  %v576 = vpop.f32.mrf.mxu0
  %v577 = vadd.f32 %v100, %v576
  %v578 = vpop.f32.mrf.mxu0
  %v579 = vadd.f32 %v104, %v578
  %v580 = vpop.f32.mrf.mxu0
  %v581 = vadd.f32 %v100, %v580
  %v582 = vpop.f32.mrf.mxu0
  %v583 = vadd.f32 %v104, %v582
  %584 = vmatprep.mubr.bf16.mxu0 0
  %585 = vmatmul.mubr.bf16.gmra.mxu0 %v480
  %v586 = vpop.f32.mrf.mxu0
  %v587 = vadd.f32 %v100, %v586
  %v588 = vpop.f32.mrf.mxu0
  %v589 = vadd.f32 %v104, %v588
  %v590 = vpop.f32.mrf.mxu0
  %v591 = vadd.f32 %v100, %v590
  %v592 = vpop.f32.mrf.mxu0
  %v593 = vadd.f32 %v104, %v592
  %594 = vdwg.mxu0
  %595 = vmatprep.subr.bf16.mxu0 0
  %596 = vmatpush1.bf16.msra.mxu0 0
  %597 = vmatprep.subr.bf16.mxu0 0
  %598 = vmatpush1.bf16.msra.mxu0 0
  %599 = vmatprep.subr.bf16.mxu0 0
  %600 = vmatpush1.bf16.msra.mxu0 0
  %601 = vmatprep.subr.bf16.mxu0 0
  %602 = vmatpush1.bf16.msra.mxu0 0
  %603 = vmatprep.subr.bf16.mxu0 0
  %604 = vmatpush1.bf16.msra.mxu0 0
  %605 = vmatprep.subr.bf16.mxu0 %v396
  %606 = vmatpush1.bf16.msra.mxu0 %v395
  %607 = vmatprep.subr.bf16.mxu0 %v380
  %608 = vmatpush1.bf16.msra.mxu0 %v379
  %609 = vmatprep.subr.bf16.mxu0 %v364
  %610 = vmatpush1.bf16.msra.mxu0 %v363
  %611 = vmatprep.subr.bf16.mxu0 0
  %612 = vmatpush2.bf16.msra.mxu0 0
  %613 = vmatprep.subr.bf16.mxu0 0
  %614 = vmatpush2.bf16.msra.mxu0 0
  %615 = vmatprep.subr.bf16.mxu0 0
  %616 = vmatpush2.bf16.msra.mxu0 0
  %617 = vmatprep.subr.bf16.mxu0 0
  %618 = vmatpush2.bf16.msra.mxu0 0
  %619 = vmatprep.subr.bf16.mxu0 0
  %620 = vmatpush2.bf16.msra.mxu0 0
  %621 = vmatprep.subr.bf16.mxu0 0
  %622 = vmatpush2.bf16.msra.mxu0 0
  %623 = vmatprep.subr.bf16.mxu0 0
  %624 = vmatpush2.bf16.msra.mxu0 0
  %625 = vmatprep.subr.bf16.mxu0 0
  %626 = vmatpush2.bf16.msra.mxu0 0
  %627 = vmatprep.mubr.bf16.mxu0 0
  %628 = vmatmul.mubr.bf16.gmra.mxu0 %v459
  %v629 = vpop.f32.mrf.mxu0
  %v630 = vadd.f32 %v108, %v629
  %v631 = vpop.f32.mrf.mxu0
  %v632 = vadd.f32 %v112, %v631
  %v633 = vpop.f32.mrf.mxu0
  %v634 = vadd.f32 %v108, %v633
  %v635 = vpop.f32.mrf.mxu0
  %v636 = vadd.f32 %v112, %v635
  %637 = vmatprep.mubr.bf16.mxu0 0
  %638 = vmatmul.mubr.bf16.gmra.mxu0 %v462
  %v639 = vpop.f32.mrf.mxu0
  %v640 = vadd.f32 %v108, %v639
  %v641 = vpop.f32.mrf.mxu0
  %v642 = vadd.f32 %v112, %v641
  %v643 = vpop.f32.mrf.mxu0
  %v644 = vadd.f32 %v108, %v643
  %v645 = vpop.f32.mrf.mxu0
  %v646 = vadd.f32 %v112, %v645
  %647 = vmatprep.mubr.bf16.mxu0 0
  %648 = vmatmul.mubr.bf16.gmra.mxu0 %v465
  %v649 = vpop.f32.mrf.mxu0
  %v650 = vadd.f32 %v108, %v649
  %v651 = vpop.f32.mrf.mxu0
  %v652 = vadd.f32 %v112, %v651
  %v653 = vpop.f32.mrf.mxu0
  %v654 = vadd.f32 %v108, %v653
  %v655 = vpop.f32.mrf.mxu0
  %v656 = vadd.f32 %v112, %v655
  %657 = vmatprep.mubr.bf16.mxu0 0
  %658 = vmatmul.mubr.bf16.gmra.mxu0 %v468
  %v659 = vpop.f32.mrf.mxu0
  %v660 = vadd.f32 %v108, %v659
  %v661 = vpop.f32.mrf.mxu0
  %v662 = vadd.f32 %v112, %v661
  %v663 = vpop.f32.mrf.mxu0
  %v664 = vadd.f32 %v108, %v663
  %v665 = vpop.f32.mrf.mxu0
  %v666 = vadd.f32 %v112, %v665
  %667 = vmatprep.mubr.bf16.mxu0 0
  %668 = vmatmul.mubr.bf16.gmra.mxu0 %v471
  %v669 = vpop.f32.mrf.mxu0
  %v670 = vadd.f32 %v108, %v669
  %v671 = vpop.f32.mrf.mxu0
  %v672 = vadd.f32 %v112, %v671
  %v673 = vpop.f32.mrf.mxu0
  %v674 = vadd.f32 %v108, %v673
  %v675 = vpop.f32.mrf.mxu0
  %v676 = vadd.f32 %v112, %v675
  %677 = vmatprep.mubr.bf16.mxu0 0
  %678 = vmatmul.mubr.bf16.gmra.mxu0 %v474
  %v679 = vpop.f32.mrf.mxu0
  %v680 = vadd.f32 %v108, %v679
  %v681 = vpop.f32.mrf.mxu0
  %v682 = vadd.f32 %v112, %v681
  %v683 = vpop.f32.mrf.mxu0
  %v684 = vadd.f32 %v108, %v683
  %v685 = vpop.f32.mrf.mxu0
  %v686 = vadd.f32 %v112, %v685
  %687 = vmatprep.mubr.bf16.mxu0 0
  %688 = vmatmul.mubr.bf16.gmra.mxu0 %v477
  %v689 = vpop.f32.mrf.mxu0
  %v690 = vadd.f32 %v108, %v689
  %v691 = vpop.f32.mrf.mxu0
  %v692 = vadd.f32 %v112, %v691
  %v693 = vpop.f32.mrf.mxu0
  %v694 = vadd.f32 %v108, %v693
  %v695 = vpop.f32.mrf.mxu0
  %v696 = vadd.f32 %v112, %v695
  %697 = vmatprep.mubr.bf16.mxu0 0
  %698 = vmatmul.mubr.bf16.gmra.mxu0 %v480
  %v699 = vpop.f32.mrf.mxu0
  %v700 = vadd.f32 %v108, %v699
  %v701 = vpop.f32.mrf.mxu0
  %v702 = vadd.f32 %v112, %v701
  %v703 = vpop.f32.mrf.mxu0
  %v704 = vadd.f32 %v108, %v703
  %v705 = vpop.f32.mrf.mxu0
  %v706 = vadd.f32 %v112, %v705
  %707 = vdwg.mxu0
  %708 = vmatprep.subr.bf16.mxu0 0
  %709 = vmatpush1.bf16.msra.mxu0 0
  %710 = vmatprep.subr.bf16.mxu0 0
  %711 = vmatpush1.bf16.msra.mxu0 0
  %712 = vmatprep.subr.bf16.mxu0 0
  %713 = vmatpush1.bf16.msra.mxu0 0
  %714 = vmatprep.subr.bf16.mxu0 0
  %715 = vmatpush1.bf16.msra.mxu0 0
  %716 = vmatprep.subr.bf16.mxu0 0
  %717 = vmatpush1.bf16.msra.mxu0 0
  %718 = vmatprep.subr.bf16.mxu0 %v398
  %719 = vmatpush1.bf16.msra.mxu0 %v397
  %720 = vmatprep.subr.bf16.mxu0 %v382
  %721 = vmatpush1.bf16.msra.mxu0 %v381
  %722 = vmatprep.subr.bf16.mxu0 %v366
  %723 = vmatpush1.bf16.msra.mxu0 %v365
  %724 = vmatprep.subr.bf16.mxu0 0
  %725 = vmatpush2.bf16.msra.mxu0 0
  %726 = vmatprep.subr.bf16.mxu0 0
  %727 = vmatpush2.bf16.msra.mxu0 0
  %728 = vmatprep.subr.bf16.mxu0 0
  %729 = vmatpush2.bf16.msra.mxu0 0
  %730 = vmatprep.subr.bf16.mxu0 0
  %731 = vmatpush2.bf16.msra.mxu0 0
  %732 = vmatprep.subr.bf16.mxu0 0
  %733 = vmatpush2.bf16.msra.mxu0 0
  %734 = vmatprep.subr.bf16.mxu0 0
  %735 = vmatpush2.bf16.msra.mxu0 0
  %736 = vmatprep.subr.bf16.mxu0 0
  %737 = vmatpush2.bf16.msra.mxu0 0
  %738 = vmatprep.subr.bf16.mxu0 0
  %739 = vmatpush2.bf16.msra.mxu0 0
  %740 = vmatprep.mubr.bf16.mxu0 0
  %741 = vmatmul.mubr.bf16.gmra.mxu0 %v459
  %v742 = vpop.f32.mrf.mxu0
  %v743 = vadd.f32 %v116, %v742
  %v744 = vpop.f32.mrf.mxu0
  %v745 = vadd.f32 %v120, %v744
  %v746 = vpop.f32.mrf.mxu0
  %v747 = vadd.f32 %v116, %v746
  %v748 = vpop.f32.mrf.mxu0
  %v749 = vadd.f32 %v120, %v748
  %750 = vmatprep.mubr.bf16.mxu0 0
  %751 = vmatmul.mubr.bf16.gmra.mxu0 %v462
  %v752 = vpop.f32.mrf.mxu0
  %v753 = vadd.f32 %v116, %v752
  %v754 = vpop.f32.mrf.mxu0
  %v755 = vadd.f32 %v120, %v754
  %v756 = vpop.f32.mrf.mxu0
  %v757 = vadd.f32 %v116, %v756
  %v758 = vpop.f32.mrf.mxu0
  %v759 = vadd.f32 %v120, %v758
  %760 = vmatprep.mubr.bf16.mxu0 0
  %761 = vmatmul.mubr.bf16.gmra.mxu0 %v465
  %v762 = vpop.f32.mrf.mxu0
  %v763 = vadd.f32 %v116, %v762
  %v764 = vpop.f32.mrf.mxu0
  %v765 = vadd.f32 %v120, %v764
  %v766 = vpop.f32.mrf.mxu0
  %v767 = vadd.f32 %v116, %v766
  %v768 = vpop.f32.mrf.mxu0
  %v769 = vadd.f32 %v120, %v768
  %770 = vmatprep.mubr.bf16.mxu0 0
  %771 = vmatmul.mubr.bf16.gmra.mxu0 %v468
  %v772 = vpop.f32.mrf.mxu0
  %v773 = vadd.f32 %v116, %v772
  %v774 = vpop.f32.mrf.mxu0
  %v775 = vadd.f32 %v120, %v774
  %v776 = vpop.f32.mrf.mxu0
  %v777 = vadd.f32 %v116, %v776
  %v778 = vpop.f32.mrf.mxu0
  %v779 = vadd.f32 %v120, %v778
  %780 = vmatprep.mubr.bf16.mxu0 0
  %781 = vmatmul.mubr.bf16.gmra.mxu0 %v471
  %v782 = vpop.f32.mrf.mxu0
  %v783 = vadd.f32 %v116, %v782
  %v784 = vpop.f32.mrf.mxu0
  %v785 = vadd.f32 %v120, %v784
  %v786 = vpop.f32.mrf.mxu0
  %v787 = vadd.f32 %v116, %v786
  %v788 = vpop.f32.mrf.mxu0
  %v789 = vadd.f32 %v120, %v788
  %790 = vmatprep.mubr.bf16.mxu0 0
  %791 = vmatmul.mubr.bf16.gmra.mxu0 %v474
  %v792 = vpop.f32.mrf.mxu0
  %v793 = vadd.f32 %v116, %v792
  %v794 = vpop.f32.mrf.mxu0
  %v795 = vadd.f32 %v120, %v794
  %v796 = vpop.f32.mrf.mxu0
  %v797 = vadd.f32 %v116, %v796
  %v798 = vpop.f32.mrf.mxu0
  %v799 = vadd.f32 %v120, %v798
  %800 = vmatprep.mubr.bf16.mxu0 0
  %801 = vmatmul.mubr.bf16.gmra.mxu0 %v477
  %v802 = vpop.f32.mrf.mxu0
  %v803 = vadd.f32 %v116, %v802
  %v804 = vpop.f32.mrf.mxu0
  %v805 = vadd.f32 %v120, %v804
  %v806 = vpop.f32.mrf.mxu0
  %v807 = vadd.f32 %v116, %v806
  %v808 = vpop.f32.mrf.mxu0
  %v809 = vadd.f32 %v120, %v808
  %810 = vmatprep.mubr.bf16.mxu0 0
  %811 = vmatmul.mubr.bf16.gmra.mxu0 %v480
  %v812 = vpop.f32.mrf.mxu0
  %v813 = vadd.f32 %v116, %v812
  %v814 = vpop.f32.mrf.mxu0
  %v815 = vadd.f32 %v120, %v814
  %v816 = vpop.f32.mrf.mxu0
  %v817 = vadd.f32 %v116, %v816
  %v818 = vpop.f32.mrf.mxu0
  %v819 = vadd.f32 %v120, %v818
  %820 = vdwg.mxu0
  %821 = vmatprep.subr.bf16.mxu0 0
  %822 = vmatpush1.bf16.msra.mxu0 0
  %823 = vmatprep.subr.bf16.mxu0 0
  %824 = vmatpush1.bf16.msra.mxu0 0
  %825 = vmatprep.subr.bf16.mxu0 0
  %826 = vmatpush1.bf16.msra.mxu0 0
  %827 = vmatprep.subr.bf16.mxu0 0
  %828 = vmatpush1.bf16.msra.mxu0 0
  %829 = vmatprep.subr.bf16.mxu0 0
  %830 = vmatpush1.bf16.msra.mxu0 0
  %831 = vmatprep.subr.bf16.mxu0 %v400
  %832 = vmatpush1.bf16.msra.mxu0 %v399
  %833 = vmatprep.subr.bf16.mxu0 %v384
  %834 = vmatpush1.bf16.msra.mxu0 %v383
  %835 = vmatprep.subr.bf16.mxu0 %v368
  %836 = vmatpush1.bf16.msra.mxu0 %v367
  %837 = vmatprep.subr.bf16.mxu0 0
  %838 = vmatpush2.bf16.msra.mxu0 0
  %839 = vmatprep.subr.bf16.mxu0 0
  %840 = vmatpush2.bf16.msra.mxu0 0
  %841 = vmatprep.subr.bf16.mxu0 0
  %842 = vmatpush2.bf16.msra.mxu0 0
  %843 = vmatprep.subr.bf16.mxu0 0
  %844 = vmatpush2.bf16.msra.mxu0 0
  %845 = vmatprep.subr.bf16.mxu0 0
  %846 = vmatpush2.bf16.msra.mxu0 0
  %847 = vmatprep.subr.bf16.mxu0 0
  %848 = vmatpush2.bf16.msra.mxu0 0
  %849 = vmatprep.subr.bf16.mxu0 0
  %850 = vmatpush2.bf16.msra.mxu0 0
  %851 = vmatprep.subr.bf16.mxu0 0
  %852 = vmatpush2.bf16.msra.mxu0 0
  %853 = vmatprep.mubr.bf16.mxu0 0
  %854 = vmatmul.mubr.bf16.gmra.mxu0 %v459
  %v855 = vpop.f32.mrf.mxu0
  %v856 = vadd.f32 %v124, %v855
  %v857 = vpop.f32.mrf.mxu0
  %v858 = vadd.f32 %v128, %v857
  %v859 = vpop.f32.mrf.mxu0
  %v860 = vadd.f32 %v124, %v859
  %v861 = vpop.f32.mrf.mxu0
  %v862 = vadd.f32 %v128, %v861
  %863 = vmatprep.mubr.bf16.mxu0 0
  %864 = vmatmul.mubr.bf16.gmra.mxu0 %v462
  %v865 = vpop.f32.mrf.mxu0
  %v866 = vadd.f32 %v124, %v865
  %v867 = vpop.f32.mrf.mxu0
  %v868 = vadd.f32 %v128, %v867
  %v869 = vpop.f32.mrf.mxu0
  %v870 = vadd.f32 %v124, %v869
  %v871 = vpop.f32.mrf.mxu0
  %v872 = vadd.f32 %v128, %v871
  %873 = vmatprep.mubr.bf16.mxu0 0
  %874 = vmatmul.mubr.bf16.gmra.mxu0 %v465
  %v875 = vpop.f32.mrf.mxu0
  %v876 = vadd.f32 %v124, %v875
  %v877 = vpop.f32.mrf.mxu0
  %v878 = vadd.f32 %v128, %v877
  %v879 = vpop.f32.mrf.mxu0
  %v880 = vadd.f32 %v124, %v879
  %v881 = vpop.f32.mrf.mxu0
  %v882 = vadd.f32 %v128, %v881
  %883 = vmatprep.mubr.bf16.mxu0 0
  %884 = vmatmul.mubr.bf16.gmra.mxu0 %v468
  %v885 = vpop.f32.mrf.mxu0
  %v886 = vadd.f32 %v124, %v885
  %v887 = vpop.f32.mrf.mxu0
  %v888 = vadd.f32 %v128, %v887
  %v889 = vpop.f32.mrf.mxu0
  %v890 = vadd.f32 %v124, %v889
  %v891 = vpop.f32.mrf.mxu0
  %v892 = vadd.f32 %v128, %v891
  %893 = vmatprep.mubr.bf16.mxu0 0
  %894 = vmatmul.mubr.bf16.gmra.mxu0 %v471
  %v895 = vpop.f32.mrf.mxu0
  %v896 = vadd.f32 %v124, %v895
  %v897 = vpop.f32.mrf.mxu0
  %v898 = vadd.f32 %v128, %v897
  %v899 = vpop.f32.mrf.mxu0
  %v900 = vadd.f32 %v124, %v899
  %v901 = vpop.f32.mrf.mxu0
  %v902 = vadd.f32 %v128, %v901
  %903 = vmatprep.mubr.bf16.mxu0 0
  %904 = vmatmul.mubr.bf16.gmra.mxu0 %v474
  %v905 = vpop.f32.mrf.mxu0
  %v906 = vadd.f32 %v124, %v905
  %v907 = vpop.f32.mrf.mxu0
  %v908 = vadd.f32 %v128, %v907
  %v909 = vpop.f32.mrf.mxu0
  %v910 = vadd.f32 %v124, %v909
  %v911 = vpop.f32.mrf.mxu0
  %v912 = vadd.f32 %v128, %v911
  %913 = vmatprep.mubr.bf16.mxu0 0
  %914 = vmatmul.mubr.bf16.gmra.mxu0 %v477
  %v915 = vpop.f32.mrf.mxu0
  %v916 = vadd.f32 %v124, %v915
  %v917 = vpop.f32.mrf.mxu0
  %v918 = vadd.f32 %v128, %v917
  %v919 = vpop.f32.mrf.mxu0
  %v920 = vadd.f32 %v124, %v919
  %v921 = vpop.f32.mrf.mxu0
  %v922 = vadd.f32 %v128, %v921
  %923 = vmatprep.mubr.bf16.mxu0 0
  %924 = vmatmul.mubr.bf16.gmra.mxu0 %v480
  %v925 = vpop.f32.mrf.mxu0
  %v926 = vadd.f32 %v124, %v925
  %v927 = vpop.f32.mrf.mxu0
  %v928 = vadd.f32 %v128, %v927
  %v929 = vpop.f32.mrf.mxu0
  %v930 = vadd.f32 %v124, %v929
  %v931 = vpop.f32.mrf.mxu0
  %v932 = vadd.f32 %v128, %v931
  %933 = vdwg.mxu0
  %934 = vmatprep.subr.bf16.mxu0 0
  %935 = vmatpush1.bf16.msra.mxu0 0
  %936 = vmatprep.subr.bf16.mxu0 0
  %937 = vmatpush1.bf16.msra.mxu0 0
  %938 = vmatprep.subr.bf16.mxu0 0
  %939 = vmatpush1.bf16.msra.mxu0 0
  %940 = vmatprep.subr.bf16.mxu0 0
  %941 = vmatpush1.bf16.msra.mxu0 0
  %942 = vmatprep.subr.bf16.mxu0 0
  %943 = vmatpush1.bf16.msra.mxu0 0
  %944 = vmatprep.subr.bf16.mxu0 %v402
  %945 = vmatpush1.bf16.msra.mxu0 %v401
  %946 = vmatprep.subr.bf16.mxu0 %v386
  %947 = vmatpush1.bf16.msra.mxu0 %v385
  %948 = vmatprep.subr.bf16.mxu0 %v370
  %949 = vmatpush1.bf16.msra.mxu0 %v369
  %950 = vmatprep.subr.bf16.mxu0 0
  %951 = vmatpush2.bf16.msra.mxu0 0
  %952 = vmatprep.subr.bf16.mxu0 0
  %953 = vmatpush2.bf16.msra.mxu0 0
  %954 = vmatprep.subr.bf16.mxu0 0
  %955 = vmatpush2.bf16.msra.mxu0 0
  %956 = vmatprep.subr.bf16.mxu0 0
  %957 = vmatpush2.bf16.msra.mxu0 0
  %958 = vmatprep.subr.bf16.mxu0 0
  %959 = vmatpush2.bf16.msra.mxu0 0
  %960 = vmatprep.subr.bf16.mxu0 0
  %961 = vmatpush2.bf16.msra.mxu0 0
  %962 = vmatprep.subr.bf16.mxu0 0
  %963 = vmatpush2.bf16.msra.mxu0 0
  %964 = vmatprep.subr.bf16.mxu0 0
  %965 = vmatpush2.bf16.msra.mxu0 0
  %966 = vmatprep.mubr.bf16.mxu0 0
  %967 = vmatmul.mubr.bf16.gmra.mxu0 %v459
  %v968 = vpop.f32.mrf.mxu0
  %v969 = vadd.f32 %v132, %v968
  %v970 = vpop.f32.mrf.mxu0
  %v971 = vadd.f32 %v136, %v970
  %v972 = vpop.f32.mrf.mxu0
  %v973 = vadd.f32 %v132, %v972
  %v974 = vpop.f32.mrf.mxu0
  %v975 = vadd.f32 %v136, %v974
  %976 = vmatprep.mubr.bf16.mxu0 0
  %977 = vmatmul.mubr.bf16.gmra.mxu0 %v462
  %v978 = vpop.f32.mrf.mxu0
  %v979 = vadd.f32 %v132, %v978
  %v980 = vpop.f32.mrf.mxu0
  %v981 = vadd.f32 %v136, %v980
  %v982 = vpop.f32.mrf.mxu0
  %v983 = vadd.f32 %v132, %v982
  %v984 = vpop.f32.mrf.mxu0
  %v985 = vadd.f32 %v136, %v984
  %986 = vmatprep.mubr.bf16.mxu0 0
  %987 = vmatmul.mubr.bf16.gmra.mxu0 %v465
  %v988 = vpop.f32.mrf.mxu0
  %v989 = vadd.f32 %v132, %v988
  %v990 = vpop.f32.mrf.mxu0
  %v991 = vadd.f32 %v136, %v990
  %v992 = vpop.f32.mrf.mxu0
  %v993 = vadd.f32 %v132, %v992
  %v994 = vpop.f32.mrf.mxu0
  %v995 = vadd.f32 %v136, %v994
  %996 = vmatprep.mubr.bf16.mxu0 0
  %997 = vmatmul.mubr.bf16.gmra.mxu0 %v468
  %v998 = vpop.f32.mrf.mxu0
  %v999 = vadd.f32 %v132, %v998
  %v1000 = vpop.f32.mrf.mxu0
  %v1001 = vadd.f32 %v136, %v1000
  %v1002 = vpop.f32.mrf.mxu0
  %v1003 = vadd.f32 %v132, %v1002
  %v1004 = vpop.f32.mrf.mxu0
  %v1005 = vadd.f32 %v136, %v1004
  %1006 = vmatprep.mubr.bf16.mxu0 0
  %1007 = vmatmul.mubr.bf16.gmra.mxu0 %v471
  %v1008 = vpop.f32.mrf.mxu0
  %v1009 = vadd.f32 %v132, %v1008
  %v1010 = vpop.f32.mrf.mxu0
  %v1011 = vadd.f32 %v136, %v1010
  %v1012 = vpop.f32.mrf.mxu0
  %v1013 = vadd.f32 %v132, %v1012
  %v1014 = vpop.f32.mrf.mxu0
  %v1015 = vadd.f32 %v136, %v1014
  %1016 = vmatprep.mubr.bf16.mxu0 0
  %1017 = vmatmul.mubr.bf16.gmra.mxu0 %v474
  %v1018 = vpop.f32.mrf.mxu0
  %v1019 = vadd.f32 %v132, %v1018
  %v1020 = vpop.f32.mrf.mxu0
  %v1021 = vadd.f32 %v136, %v1020
  %v1022 = vpop.f32.mrf.mxu0
  %v1023 = vadd.f32 %v132, %v1022
  %v1024 = vpop.f32.mrf.mxu0
  %v1025 = vadd.f32 %v136, %v1024
  %1026 = vmatprep.mubr.bf16.mxu0 0
  %1027 = vmatmul.mubr.bf16.gmra.mxu0 %v477
  %v1028 = vpop.f32.mrf.mxu0
  %v1029 = vadd.f32 %v132, %v1028
  %v1030 = vpop.f32.mrf.mxu0
  %v1031 = vadd.f32 %v136, %v1030
  %v1032 = vpop.f32.mrf.mxu0
  %v1033 = vadd.f32 %v132, %v1032
  %v1034 = vpop.f32.mrf.mxu0
  %v1035 = vadd.f32 %v136, %v1034
  %1036 = vmatprep.mubr.bf16.mxu0 0
  %1037 = vmatmul.mubr.bf16.gmra.mxu0 %v480
  %v1038 = vpop.f32.mrf.mxu0
  %v1039 = vadd.f32 %v132, %v1038
  %v1040 = vpop.f32.mrf.mxu0
  %v1041 = vadd.f32 %v136, %v1040
  %v1042 = vpop.f32.mrf.mxu0
  %v1043 = vadd.f32 %v132, %v1042
  %v1044 = vpop.f32.mrf.mxu0
  %v1045 = vadd.f32 %v136, %v1044
  %1046 = vdwg.mxu0
  %1047 = vmatprep.subr.bf16.mxu0 0
  %1048 = vmatpush1.bf16.msra.mxu0 0
  %1049 = vmatprep.subr.bf16.mxu0 0
  %1050 = vmatpush1.bf16.msra.mxu0 0
  %1051 = vmatprep.subr.bf16.mxu0 0
  %1052 = vmatpush1.bf16.msra.mxu0 0
  %1053 = vmatprep.subr.bf16.mxu0 0
  %1054 = vmatpush1.bf16.msra.mxu0 0
  %1055 = vmatprep.subr.bf16.mxu0 0
  %1056 = vmatpush1.bf16.msra.mxu0 0
  %1057 = vmatprep.subr.bf16.mxu0 %v404
  %1058 = vmatpush1.bf16.msra.mxu0 %v403
  %1059 = vmatprep.subr.bf16.mxu0 %v388
  %1060 = vmatpush1.bf16.msra.mxu0 %v387
  %1061 = vmatprep.subr.bf16.mxu0 %v372
  %1062 = vmatpush1.bf16.msra.mxu0 %v371
  %1063 = vmatprep.subr.bf16.mxu0 0
  %1064 = vmatpush2.bf16.msra.mxu0 0
  %1065 = vmatprep.subr.bf16.mxu0 0
  %1066 = vmatpush2.bf16.msra.mxu0 0
  %1067 = vmatprep.subr.bf16.mxu0 0
  %1068 = vmatpush2.bf16.msra.mxu0 0
  %1069 = vmatprep.subr.bf16.mxu0 0
  %1070 = vmatpush2.bf16.msra.mxu0 0
  %1071 = vmatprep.subr.bf16.mxu0 0
  %1072 = vmatpush2.bf16.msra.mxu0 0
  %1073 = vmatprep.subr.bf16.mxu0 0
  %1074 = vmatpush2.bf16.msra.mxu0 0
  %1075 = vmatprep.subr.bf16.mxu0 0
  %1076 = vmatpush2.bf16.msra.mxu0 0
  %1077 = vmatprep.subr.bf16.mxu0 0
  %1078 = vmatpush2.bf16.msra.mxu0 0
  %1079 = vmatprep.mubr.bf16.mxu0 0
  %1080 = vmatmul.mubr.bf16.gmra.mxu0 %v459
  %v1081 = vpop.f32.mrf.mxu0
  %v1082 = vadd.f32 %v140, %v1081
  %v1083 = vpop.f32.mrf.mxu0
  %v1084 = vadd.f32 %v144, %v1083
  %v1085 = vpop.f32.mrf.mxu0
  %v1086 = vadd.f32 %v140, %v1085
  %v1087 = vpop.f32.mrf.mxu0
  %v1088 = vadd.f32 %v144, %v1087
  %1089 = vmatprep.mubr.bf16.mxu0 0
  %1090 = vmatmul.mubr.bf16.gmra.mxu0 %v462
  %v1091 = vpop.f32.mrf.mxu0
  %v1092 = vadd.f32 %v140, %v1091
  %v1093 = vpop.f32.mrf.mxu0
  %v1094 = vadd.f32 %v144, %v1093
  %v1095 = vpop.f32.mrf.mxu0
  %v1096 = vadd.f32 %v140, %v1095
  %v1097 = vpop.f32.mrf.mxu0
  %v1098 = vadd.f32 %v144, %v1097
  %1099 = vmatprep.mubr.bf16.mxu0 0
  %1100 = vmatmul.mubr.bf16.gmra.mxu0 %v465
  %v1101 = vpop.f32.mrf.mxu0
  %v1102 = vadd.f32 %v140, %v1101
  %v1103 = vpop.f32.mrf.mxu0
  %v1104 = vadd.f32 %v144, %v1103
  %v1105 = vpop.f32.mrf.mxu0
  %v1106 = vadd.f32 %v140, %v1105
  %v1107 = vpop.f32.mrf.mxu0
  %v1108 = vadd.f32 %v144, %v1107
  %1109 = vmatprep.mubr.bf16.mxu0 0
  %1110 = vmatmul.mubr.bf16.gmra.mxu0 %v468
  %v1111 = vpop.f32.mrf.mxu0
  %v1112 = vadd.f32 %v140, %v1111
  %v1113 = vpop.f32.mrf.mxu0
  %v1114 = vadd.f32 %v144, %v1113
  %v1115 = vpop.f32.mrf.mxu0
  %v1116 = vadd.f32 %v140, %v1115
  %v1117 = vpop.f32.mrf.mxu0
  %v1118 = vadd.f32 %v144, %v1117
  %1119 = vmatprep.mubr.bf16.mxu0 0
  %1120 = vmatmul.mubr.bf16.gmra.mxu0 %v471
  %v1121 = vpop.f32.mrf.mxu0
  %v1122 = vadd.f32 %v140, %v1121
  %v1123 = vpop.f32.mrf.mxu0
  %v1124 = vadd.f32 %v144, %v1123
  %v1125 = vpop.f32.mrf.mxu0
  %v1126 = vadd.f32 %v140, %v1125
  %v1127 = vpop.f32.mrf.mxu0
  %v1128 = vadd.f32 %v144, %v1127
  %1129 = vmatprep.mubr.bf16.mxu0 0
  %1130 = vmatmul.mubr.bf16.gmra.mxu0 %v474
  %v1131 = vpop.f32.mrf.mxu0
  %v1132 = vadd.f32 %v140, %v1131
  %v1133 = vpop.f32.mrf.mxu0
  %v1134 = vadd.f32 %v144, %v1133
  %v1135 = vpop.f32.mrf.mxu0
  %v1136 = vadd.f32 %v140, %v1135
  %v1137 = vpop.f32.mrf.mxu0
  %v1138 = vadd.f32 %v144, %v1137
  %1139 = vmatprep.mubr.bf16.mxu0 0
  %1140 = vmatmul.mubr.bf16.gmra.mxu0 %v477
  %v1141 = vpop.f32.mrf.mxu0
  %v1142 = vadd.f32 %v140, %v1141
  %v1143 = vpop.f32.mrf.mxu0
  %v1144 = vadd.f32 %v144, %v1143
  %v1145 = vpop.f32.mrf.mxu0
  %v1146 = vadd.f32 %v140, %v1145
  %v1147 = vpop.f32.mrf.mxu0
  %v1148 = vadd.f32 %v144, %v1147
  %1149 = vmatprep.mubr.bf16.mxu0 0
  %1150 = vmatmul.mubr.bf16.gmra.mxu0 %v480
  %v1151 = vpop.f32.mrf.mxu0
  %v1152 = vadd.f32 %v140, %v1151
  %v1153 = vpop.f32.mrf.mxu0
  %v1154 = vadd.f32 %v144, %v1153
  %v1155 = vpop.f32.mrf.mxu0
  %v1156 = vadd.f32 %v140, %v1155
  %v1157 = vpop.f32.mrf.mxu0
  %v1158 = vadd.f32 %v144, %v1157
  %1159 = vdwg.mxu0
  %1160 = vmatprep.subr.bf16.mxu0 0
  %1161 = vmatpush1.bf16.msra.mxu0 0
  %1162 = vmatprep.subr.bf16.mxu0 0
  %1163 = vmatpush1.bf16.msra.mxu0 0
  %1164 = vmatprep.subr.bf16.mxu0 0
  %1165 = vmatpush1.bf16.msra.mxu0 0
  %1166 = vmatprep.subr.bf16.mxu0 0
  %1167 = vmatpush1.bf16.msra.mxu0 0
  %1168 = vmatprep.subr.bf16.mxu0 0
  %1169 = vmatpush1.bf16.msra.mxu0 0
  %1170 = vmatprep.subr.bf16.mxu0 %v406
  %1171 = vmatpush1.bf16.msra.mxu0 %v405
  %1172 = vmatprep.subr.bf16.mxu0 %v390
  %1173 = vmatpush1.bf16.msra.mxu0 %v389
  %1174 = vmatprep.subr.bf16.mxu0 %v374
  %1175 = vmatpush1.bf16.msra.mxu0 %v373
  %1176 = vmatprep.subr.bf16.mxu0 0
  %1177 = vmatpush2.bf16.msra.mxu0 0
  %1178 = vmatprep.subr.bf16.mxu0 0
  %1179 = vmatpush2.bf16.msra.mxu0 0
  %1180 = vmatprep.subr.bf16.mxu0 0
  %1181 = vmatpush2.bf16.msra.mxu0 0
  %1182 = vmatprep.subr.bf16.mxu0 0
  %1183 = vmatpush2.bf16.msra.mxu0 0
  %1184 = vmatprep.subr.bf16.mxu0 0
  %1185 = vmatpush2.bf16.msra.mxu0 0
  %1186 = vmatprep.subr.bf16.mxu0 0
  %1187 = vmatpush2.bf16.msra.mxu0 0
  %1188 = vmatprep.subr.bf16.mxu0 0
  %1189 = vmatpush2.bf16.msra.mxu0 0
  %1190 = vmatprep.subr.bf16.mxu0 0
  %1191 = vmatpush2.bf16.msra.mxu0 0
  %1192 = vmatprep.mubr.bf16.mxu0 0
  %1193 = vmatmul.mubr.bf16.gmra.mxu0 %v459
  %v1194 = vpop.f32.mrf.mxu0
  %v1195 = vadd.f32 %v148, %v1194
  %v1196 = vpop.f32.mrf.mxu0
  %v1197 = vadd.f32 %v152, %v1196
  %v1198 = vpop.f32.mrf.mxu0
  %v1199 = vadd.f32 %v148, %v1198
  %v1200 = vpop.f32.mrf.mxu0
  %v1201 = vadd.f32 %v152, %v1200
  %1202 = vmatprep.mubr.bf16.mxu0 0
  %1203 = vmatmul.mubr.bf16.gmra.mxu0 %v462
  %v1204 = vpop.f32.mrf.mxu0
  %v1205 = vadd.f32 %v148, %v1204
  %v1206 = vpop.f32.mrf.mxu0
  %v1207 = vadd.f32 %v152, %v1206
  %v1208 = vpop.f32.mrf.mxu0
  %v1209 = vadd.f32 %v148, %v1208
  %v1210 = vpop.f32.mrf.mxu0
  %v1211 = vadd.f32 %v152, %v1210
  %1212 = vmatprep.mubr.bf16.mxu0 0
  %1213 = vmatmul.mubr.bf16.gmra.mxu0 %v465
  %v1214 = vpop.f32.mrf.mxu0
  %v1215 = vadd.f32 %v148, %v1214
  %v1216 = vpop.f32.mrf.mxu0
  %v1217 = vadd.f32 %v152, %v1216
  %v1218 = vpop.f32.mrf.mxu0
  %v1219 = vadd.f32 %v148, %v1218
  %v1220 = vpop.f32.mrf.mxu0
  %v1221 = vadd.f32 %v152, %v1220
  %1222 = vmatprep.mubr.bf16.mxu0 0
  %1223 = vmatmul.mubr.bf16.gmra.mxu0 %v468
  %v1224 = vpop.f32.mrf.mxu0
  %v1225 = vadd.f32 %v148, %v1224
  %v1226 = vpop.f32.mrf.mxu0
  %v1227 = vadd.f32 %v152, %v1226
  %v1228 = vpop.f32.mrf.mxu0
  %v1229 = vadd.f32 %v148, %v1228
  %v1230 = vpop.f32.mrf.mxu0
  %v1231 = vadd.f32 %v152, %v1230
  %1232 = vmatprep.mubr.bf16.mxu0 0
  %1233 = vmatmul.mubr.bf16.gmra.mxu0 %v471
  %v1234 = vpop.f32.mrf.mxu0
  %v1235 = vadd.f32 %v148, %v1234
  %v1236 = vpop.f32.mrf.mxu0
  %v1237 = vadd.f32 %v152, %v1236
  %v1238 = vpop.f32.mrf.mxu0
  %v1239 = vadd.f32 %v148, %v1238
  %v1240 = vpop.f32.mrf.mxu0
  %v1241 = vadd.f32 %v152, %v1240
  %1242 = vmatprep.mubr.bf16.mxu0 0
  %1243 = vmatmul.mubr.bf16.gmra.mxu0 %v474
  %v1244 = vpop.f32.mrf.mxu0
  %v1245 = vadd.f32 %v148, %v1244
  %v1246 = vpop.f32.mrf.mxu0
  %v1247 = vadd.f32 %v152, %v1246
  %v1248 = vpop.f32.mrf.mxu0
  %v1249 = vadd.f32 %v148, %v1248
  %v1250 = vpop.f32.mrf.mxu0
  %v1251 = vadd.f32 %v152, %v1250
  %1252 = vmatprep.mubr.bf16.mxu0 0
  %1253 = vmatmul.mubr.bf16.gmra.mxu0 %v477
  %v1254 = vpop.f32.mrf.mxu0
  %v1255 = vadd.f32 %v148, %v1254
  %v1256 = vpop.f32.mrf.mxu0
  %v1257 = vadd.f32 %v152, %v1256
  %v1258 = vpop.f32.mrf.mxu0
  %v1259 = vadd.f32 %v148, %v1258
  %v1260 = vpop.f32.mrf.mxu0
  %v1261 = vadd.f32 %v152, %v1260
  %1262 = vmatprep.mubr.bf16.mxu0 0
  %1263 = vmatmul.mubr.bf16.gmra.mxu0 %v480
  %v1264 = vpop.f32.mrf.mxu0
  %v1265 = vadd.f32 %v148, %v1264
  %v1266 = vpop.f32.mrf.mxu0
  %v1267 = vadd.f32 %v152, %v1266
  %v1268 = vpop.f32.mrf.mxu0
  %v1269 = vadd.f32 %v148, %v1268
  %v1270 = vpop.f32.mrf.mxu0
  %v1271 = vadd.f32 %v152, %v1270
  %1272 = vdwg.mxu0
  %1273 = vmatprep.subr.bf16.mxu0 0
  %1274 = vmatpush1.bf16.msra.mxu0 0
  %1275 = vmatprep.subr.bf16.mxu0 0
  %1276 = vmatpush1.bf16.msra.mxu0 0
  %1277 = vmatprep.subr.bf16.mxu0 0
  %1278 = vmatpush1.bf16.msra.mxu0 0
  %1279 = vmatprep.subr.bf16.mxu0 0
  %1280 = vmatpush1.bf16.msra.mxu0 0
  %1281 = vmatprep.subr.bf16.mxu0 0
  %1282 = vmatpush1.bf16.msra.mxu0 0
  %1283 = vmatprep.subr.bf16.mxu0 %v408
  %1284 = vmatpush1.bf16.msra.mxu0 %v407
  %1285 = vmatprep.subr.bf16.mxu0 %v392
  %1286 = vmatpush1.bf16.msra.mxu0 %v391
  %1287 = vmatprep.subr.bf16.mxu0 %v376
  %1288 = vmatpush1.bf16.msra.mxu0 %v375
  %1289 = vmatprep.subr.bf16.mxu0 0
  %1290 = vmatpush2.bf16.msra.mxu0 0
  %1291 = vmatprep.subr.bf16.mxu0 0
  %1292 = vmatpush2.bf16.msra.mxu0 0
  %1293 = vmatprep.subr.bf16.mxu0 0
  %1294 = vmatpush2.bf16.msra.mxu0 0
  %1295 = vmatprep.subr.bf16.mxu0 0
  %1296 = vmatpush2.bf16.msra.mxu0 0
  %1297 = vmatprep.subr.bf16.mxu0 0
  %1298 = vmatpush2.bf16.msra.mxu0 0
  %1299 = vmatprep.subr.bf16.mxu0 0
  %1300 = vmatpush2.bf16.msra.mxu0 0
  %1301 = vmatprep.subr.bf16.mxu0 0
  %1302 = vmatpush2.bf16.msra.mxu0 0
  %1303 = vmatprep.subr.bf16.mxu0 0
  %1304 = vmatpush2.bf16.msra.mxu0 0
  %1305 = vmatprep.mubr.bf16.mxu0 0
  %1306 = vmatmul.mubr.bf16.gmra.mxu0 %v459
  %v1307 = vpop.f32.mrf.mxu0
  %v1308 = vadd.f32 %v156, %v1307
  %v1309 = vpop.f32.mrf.mxu0
  %v1310 = vadd.f32 %v160, %v1309
  %v1311 = vpop.f32.mrf.mxu0
  %v1312 = vadd.f32 %v156, %v1311
  %v1313 = vpop.f32.mrf.mxu0
  %v1314 = vadd.f32 %v160, %v1313
  %1315 = vmatprep.mubr.bf16.mxu0 0
  %1316 = vmatmul.mubr.bf16.gmra.mxu0 %v462
  %v1317 = vpop.f32.mrf.mxu0
  %v1318 = vadd.f32 %v156, %v1317
  %v1319 = vpop.f32.mrf.mxu0
  %v1320 = vadd.f32 %v160, %v1319
  %v1321 = vpop.f32.mrf.mxu0
  %v1322 = vadd.f32 %v156, %v1321
  %v1323 = vpop.f32.mrf.mxu0
  %v1324 = vadd.f32 %v160, %v1323
  %1325 = vmatprep.mubr.bf16.mxu0 0
  %1326 = vmatmul.mubr.bf16.gmra.mxu0 %v465
  %v1327 = vpop.f32.mrf.mxu0
  %v1328 = vadd.f32 %v156, %v1327
  %v1329 = vpop.f32.mrf.mxu0
  %v1330 = vadd.f32 %v160, %v1329
  %v1331 = vpop.f32.mrf.mxu0
  %v1332 = vadd.f32 %v156, %v1331
  %v1333 = vpop.f32.mrf.mxu0
  %v1334 = vadd.f32 %v160, %v1333
  %1335 = vmatprep.mubr.bf16.mxu0 0
  %1336 = vmatmul.mubr.bf16.gmra.mxu0 %v468
  %v1337 = vpop.f32.mrf.mxu0
  %v1338 = vadd.f32 %v156, %v1337
  %v1339 = vpop.f32.mrf.mxu0
  %v1340 = vadd.f32 %v160, %v1339
  %v1341 = vpop.f32.mrf.mxu0
  %v1342 = vadd.f32 %v156, %v1341
  %v1343 = vpop.f32.mrf.mxu0
  %v1344 = vadd.f32 %v160, %v1343
  %1345 = vmatprep.mubr.bf16.mxu0 0
  %1346 = vmatmul.mubr.bf16.gmra.mxu0 %v471
  %v1347 = vpop.f32.mrf.mxu0
  %v1348 = vadd.f32 %v156, %v1347
  %v1349 = vpop.f32.mrf.mxu0
  %v1350 = vadd.f32 %v160, %v1349
  %v1351 = vpop.f32.mrf.mxu0
  %v1352 = vadd.f32 %v156, %v1351
  %v1353 = vpop.f32.mrf.mxu0
  %v1354 = vadd.f32 %v160, %v1353
  %1355 = vmatprep.mubr.bf16.mxu0 0
  %1356 = vmatmul.mubr.bf16.gmra.mxu0 %v474
  %v1357 = vpop.f32.mrf.mxu0
  %v1358 = vadd.f32 %v156, %v1357
  %v1359 = vpop.f32.mrf.mxu0
  %v1360 = vadd.f32 %v160, %v1359
  %v1361 = vpop.f32.mrf.mxu0
  %v1362 = vadd.f32 %v156, %v1361
  %v1363 = vpop.f32.mrf.mxu0
  %v1364 = vadd.f32 %v160, %v1363
  %1365 = vmatprep.mubr.bf16.mxu0 0
  %1366 = vmatmul.mubr.bf16.gmra.mxu0 %v477
  %v1367 = vpop.f32.mrf.mxu0
  %v1368 = vadd.f32 %v156, %v1367
  %v1369 = vpop.f32.mrf.mxu0
  %v1370 = vadd.f32 %v160, %v1369
  %v1371 = vpop.f32.mrf.mxu0
  %v1372 = vadd.f32 %v156, %v1371
  %v1373 = vpop.f32.mrf.mxu0
  %v1374 = vadd.f32 %v160, %v1373
  %1375 = vmatprep.mubr.bf16.mxu0 0
  %1376 = vmatmul.mubr.bf16.gmra.mxu0 %v480
  %v1377 = vpop.f32.mrf.mxu0
  %v1378 = vadd.f32 %v156, %v1377
  %v1379 = vpop.f32.mrf.mxu0
  %v1380 = vadd.f32 %v160, %v1379
  %v1381 = vpop.f32.mrf.mxu0
  %v1382 = vadd.f32 %v156, %v1381
  %v1383 = vpop.f32.mrf.mxu0
  %v1384 = vadd.f32 %v160, %v1383
  %1385 = vdwg.mxu0
  %v1386 = vmax.f32 %v517, 0.0
  %v1387 = vmax.f32 %v519, 0.0
  %v1388 = vmax.f32 %v630, 0.0
  %v1389 = vmax.f32 %v632, 0.0
  %v1390 = vmax.f32 %v743, 0.0
  %v1391 = vmax.f32 %v745, 0.0
  %v1392 = vmax.f32 %v856, 0.0
  %v1393 = vmax.f32 %v858, 0.0
  %v1394 = vmax.f32 %v969, 0.0
  %v1395 = vmax.f32 %v971, 0.0
  %v1396 = vmax.f32 %v1082, 0.0
  %v1397 = vmax.f32 %v1084, 0.0
  %v1398 = vmax.f32 %v1195, 0.0
  %v1399 = vmax.f32 %v1197, 0.0
  %v1400 = vmax.f32 %v1308, 0.0
  %v1401 = vmax.f32 %v1310, 0.0
  %v1402 = vmax.f32 %v521, 0.0
  %v1403 = vmax.f32 %v523, 0.0
  %v1404 = vmax.f32 %v634, 0.0
  %v1405 = vmax.f32 %v636, 0.0
  %v1406 = vmax.f32 %v747, 0.0
  %v1407 = vmax.f32 %v749, 0.0
  %v1408 = vmax.f32 %v860, 0.0
  %v1409 = vmax.f32 %v862, 0.0
  %v1410 = vmax.f32 %v973, 0.0
  %v1411 = vmax.f32 %v975, 0.0
  %v1412 = vmax.f32 %v1086, 0.0
  %v1413 = vmax.f32 %v1088, 0.0
  %v1414 = vmax.f32 %v1199, 0.0
  %v1415 = vmax.f32 %v1201, 0.0
  %v1416 = vmax.f32 %v1312, 0.0
  %v1417 = vmax.f32 %v1314, 0.0
  %v1418 = vmax.f32 %v527, 0.0
  %v1419 = vmax.f32 %v529, 0.0
  %v1420 = vmax.f32 %v640, 0.0
  %v1421 = vmax.f32 %v642, 0.0
  %v1422 = vmax.f32 %v753, 0.0
  %v1423 = vmax.f32 %v755, 0.0
  %v1424 = vmax.f32 %v866, 0.0
  %v1425 = vmax.f32 %v868, 0.0
  %v1426 = vmax.f32 %v979, 0.0
  %v1427 = vmax.f32 %v981, 0.0
  %v1428 = vmax.f32 %v1092, 0.0
  %v1429 = vmax.f32 %v1094, 0.0
  %v1430 = vmax.f32 %v1205, 0.0
  %v1431 = vmax.f32 %v1207, 0.0
  %v1432 = vmax.f32 %v1318, 0.0
  %v1433 = vmax.f32 %v1320, 0.0
  %v1434 = vmax.f32 %v531, 0.0
  %v1435 = vmax.f32 %v533, 0.0
  %v1436 = vmax.f32 %v644, 0.0
  %v1437 = vmax.f32 %v646, 0.0
  %v1438 = vmax.f32 %v757, 0.0
  %v1439 = vmax.f32 %v759, 0.0
  %v1440 = vmax.f32 %v870, 0.0
  %v1441 = vmax.f32 %v872, 0.0
  %v1442 = vmax.f32 %v983, 0.0
  %v1443 = vmax.f32 %v985, 0.0
  %v1444 = vmax.f32 %v1096, 0.0
  %v1445 = vmax.f32 %v1098, 0.0
  %v1446 = vmax.f32 %v1209, 0.0
  %v1447 = vmax.f32 %v1211, 0.0
  %v1448 = vmax.f32 %v1322, 0.0
  %v1449 = vmax.f32 %v1324, 0.0
  %v1450 = vmax.f32 %v537, 0.0
  %v1451 = vmax.f32 %v539, 0.0
  %v1452 = vmax.f32 %v650, 0.0
  %v1453 = vmax.f32 %v652, 0.0
  %v1454 = vmax.f32 %v763, 0.0
  %v1455 = vmax.f32 %v765, 0.0
  %v1456 = vmax.f32 %v876, 0.0
  %v1457 = vmax.f32 %v878, 0.0
  %v1458 = vmax.f32 %v989, 0.0
  %v1459 = vmax.f32 %v991, 0.0
  %v1460 = vmax.f32 %v1102, 0.0
  %v1461 = vmax.f32 %v1104, 0.0
  %v1462 = vmax.f32 %v1215, 0.0
  %v1463 = vmax.f32 %v1217, 0.0
  %v1464 = vmax.f32 %v1328, 0.0
  %v1465 = vmax.f32 %v1330, 0.0
  %v1466 = vmax.f32 %v541, 0.0
  %v1467 = vmax.f32 %v543, 0.0
  %v1468 = vmax.f32 %v654, 0.0
  %v1469 = vmax.f32 %v656, 0.0
  %v1470 = vmax.f32 %v767, 0.0
  %v1471 = vmax.f32 %v769, 0.0
  %v1472 = vmax.f32 %v880, 0.0
  %v1473 = vmax.f32 %v882, 0.0
  %v1474 = vmax.f32 %v993, 0.0
  %v1475 = vmax.f32 %v995, 0.0
  %v1476 = vmax.f32 %v1106, 0.0
  %v1477 = vmax.f32 %v1108, 0.0
  %v1478 = vmax.f32 %v1219, 0.0
  %v1479 = vmax.f32 %v1221, 0.0
  %v1480 = vmax.f32 %v1332, 0.0
  %v1481 = vmax.f32 %v1334, 0.0
  %v1482 = vmax.f32 %v547, 0.0
  %v1483 = vmax.f32 %v549, 0.0
  %v1484 = vmax.f32 %v660, 0.0
  %v1485 = vmax.f32 %v662, 0.0
  %v1486 = vmax.f32 %v773, 0.0
  %v1487 = vmax.f32 %v775, 0.0
  %v1488 = vmax.f32 %v886, 0.0
  %v1489 = vmax.f32 %v888, 0.0
  %v1490 = vmax.f32 %v999, 0.0
  %v1491 = vmax.f32 %v1001, 0.0
  %v1492 = vmax.f32 %v1112, 0.0
  %v1493 = vmax.f32 %v1114, 0.0
  %v1494 = vmax.f32 %v1225, 0.0
  %v1495 = vmax.f32 %v1227, 0.0
  %v1496 = vmax.f32 %v1338, 0.0
  %v1497 = vmax.f32 %v1340, 0.0
  %v1498 = vmax.f32 %v551, 0.0
  %v1499 = vmax.f32 %v553, 0.0
  %v1500 = vmax.f32 %v664, 0.0
  %v1501 = vmax.f32 %v666, 0.0
  %v1502 = vmax.f32 %v777, 0.0
  %v1503 = vmax.f32 %v779, 0.0
  %v1504 = vmax.f32 %v890, 0.0
  %v1505 = vmax.f32 %v892, 0.0
  %v1506 = vmax.f32 %v1003, 0.0
  %v1507 = vmax.f32 %v1005, 0.0
  %v1508 = vmax.f32 %v1116, 0.0
  %v1509 = vmax.f32 %v1118, 0.0
  %v1510 = vmax.f32 %v1229, 0.0
  %v1511 = vmax.f32 %v1231, 0.0
  %v1512 = vmax.f32 %v1342, 0.0
  %v1513 = vmax.f32 %v1344, 0.0
  %v1514 = vmax.f32 %v557, 0.0
  %v1515 = vmax.f32 %v559, 0.0
  %v1516 = vmax.f32 %v670, 0.0
  %v1517 = vmax.f32 %v672, 0.0
  %v1518 = vmax.f32 %v783, 0.0
  %v1519 = vmax.f32 %v785, 0.0
  %v1520 = vmax.f32 %v896, 0.0
  %v1521 = vmax.f32 %v898, 0.0
  %v1522 = vmax.f32 %v1009, 0.0
  %v1523 = vmax.f32 %v1011, 0.0
  %v1524 = vmax.f32 %v1122, 0.0
  %v1525 = vmax.f32 %v1124, 0.0
  %v1526 = vmax.f32 %v1235, 0.0
  %v1527 = vmax.f32 %v1237, 0.0
  %v1528 = vmax.f32 %v1348, 0.0
  %v1529 = vmax.f32 %v1350, 0.0
  %v1530 = vmax.f32 %v561, 0.0
  %v1531 = vmax.f32 %v563, 0.0
  %v1532 = vmax.f32 %v674, 0.0
  %v1533 = vmax.f32 %v676, 0.0
  %v1534 = vmax.f32 %v787, 0.0
  %v1535 = vmax.f32 %v789, 0.0
  %v1536 = vmax.f32 %v900, 0.0
  %v1537 = vmax.f32 %v902, 0.0
  %v1538 = vmax.f32 %v1013, 0.0
  %v1539 = vmax.f32 %v1015, 0.0
  %v1540 = vmax.f32 %v1126, 0.0
  %v1541 = vmax.f32 %v1128, 0.0
  %v1542 = vmax.f32 %v1239, 0.0
  %v1543 = vmax.f32 %v1241, 0.0
  %v1544 = vmax.f32 %v1352, 0.0
  %v1545 = vmax.f32 %v1354, 0.0
  %v1546 = vmax.f32 %v567, 0.0
  %v1547 = vmax.f32 %v569, 0.0
  %v1548 = vmax.f32 %v680, 0.0
  %v1549 = vmax.f32 %v682, 0.0
  %v1550 = vmax.f32 %v793, 0.0
  %v1551 = vmax.f32 %v795, 0.0
  %v1552 = vmax.f32 %v906, 0.0
  %v1553 = vmax.f32 %v908, 0.0
  %v1554 = vmax.f32 %v1019, 0.0
  %v1555 = vmax.f32 %v1021, 0.0
  %v1556 = vmax.f32 %v1132, 0.0
  %v1557 = vmax.f32 %v1134, 0.0
  %v1558 = vmax.f32 %v1245, 0.0
  %v1559 = vmax.f32 %v1247, 0.0
  %v1560 = vmax.f32 %v1358, 0.0
  %v1561 = vmax.f32 %v1360, 0.0
  %v1562 = vmax.f32 %v571, 0.0
  %v1563 = vmax.f32 %v573, 0.0
  %v1564 = vmax.f32 %v684, 0.0
  %v1565 = vmax.f32 %v686, 0.0
  %v1566 = vmax.f32 %v797, 0.0
  %v1567 = vmax.f32 %v799, 0.0
  %v1568 = vmax.f32 %v910, 0.0
  %v1569 = vmax.f32 %v912, 0.0
  %v1570 = vmax.f32 %v1023, 0.0
  %v1571 = vmax.f32 %v1025, 0.0
  %v1572 = vmax.f32 %v1136, 0.0
  %v1573 = vmax.f32 %v1138, 0.0
  %v1574 = vmax.f32 %v1249, 0.0
  %v1575 = vmax.f32 %v1251, 0.0
  %v1576 = vmax.f32 %v1362, 0.0
  %v1577 = vmax.f32 %v1364, 0.0
  %v1578 = vmax.f32 %v577, 0.0
  %v1579 = vmax.f32 %v579, 0.0
  %v1580 = vmax.f32 %v690, 0.0
  %v1581 = vmax.f32 %v692, 0.0
  %v1582 = vmax.f32 %v803, 0.0
  %v1583 = vmax.f32 %v805, 0.0
  %v1584 = vmax.f32 %v916, 0.0
  %v1585 = vmax.f32 %v918, 0.0
  %v1586 = vmax.f32 %v1029, 0.0
  %v1587 = vmax.f32 %v1031, 0.0
  %v1588 = vmax.f32 %v1142, 0.0
  %v1589 = vmax.f32 %v1144, 0.0
  %v1590 = vmax.f32 %v1255, 0.0
  %v1591 = vmax.f32 %v1257, 0.0
  %v1592 = vmax.f32 %v1368, 0.0
  %v1593 = vmax.f32 %v1370, 0.0
  %v1594 = vmax.f32 %v581, 0.0
  %v1595 = vmax.f32 %v583, 0.0
  %v1596 = vmax.f32 %v694, 0.0
  %v1597 = vmax.f32 %v696, 0.0
  %v1598 = vmax.f32 %v807, 0.0
  %v1599 = vmax.f32 %v809, 0.0
  %v1600 = vmax.f32 %v920, 0.0
  %v1601 = vmax.f32 %v922, 0.0
  %v1602 = vmax.f32 %v1033, 0.0
  %v1603 = vmax.f32 %v1035, 0.0
  %v1604 = vmax.f32 %v1146, 0.0
  %v1605 = vmax.f32 %v1148, 0.0
  %v1606 = vmax.f32 %v1259, 0.0
  %v1607 = vmax.f32 %v1261, 0.0
  %v1608 = vmax.f32 %v1372, 0.0
  %v1609 = vmax.f32 %v1374, 0.0
  %v1610 = vmax.f32 %v587, 0.0
  %v1611 = vmax.f32 %v589, 0.0
  %v1612 = vmax.f32 %v700, 0.0
  %v1613 = vmax.f32 %v702, 0.0
  %v1614 = vmax.f32 %v813, 0.0
  %v1615 = vmax.f32 %v815, 0.0
  %v1616 = vmax.f32 %v926, 0.0
  %v1617 = vmax.f32 %v928, 0.0
  %v1618 = vmax.f32 %v1039, 0.0
  %v1619 = vmax.f32 %v1041, 0.0
  %v1620 = vmax.f32 %v1152, 0.0
  %v1621 = vmax.f32 %v1154, 0.0
  %v1622 = vmax.f32 %v1265, 0.0
  %v1623 = vmax.f32 %v1267, 0.0
  %v1624 = vmax.f32 %v1378, 0.0
  %v1625 = vmax.f32 %v1380, 0.0
  %v1626 = vmax.f32 %v591, 0.0
  %v1627 = vmax.f32 %v593, 0.0
  %v1628 = vmax.f32 %v704, 0.0
  %v1629 = vmax.f32 %v706, 0.0
  %v1630 = vmax.f32 %v817, 0.0
  %v1631 = vmax.f32 %v819, 0.0
  %v1632 = vmax.f32 %v930, 0.0
  %v1633 = vmax.f32 %v932, 0.0
  %v1634 = vmax.f32 %v1043, 0.0
  %v1635 = vmax.f32 %v1045, 0.0
  %v1636 = vmax.f32 %v1156, 0.0
  %v1637 = vmax.f32 %v1158, 0.0
  %v1638 = vmax.f32 %v1269, 0.0
  %v1639 = vmax.f32 %v1271, 0.0
  %v1640 = vmax.f32 %v1382, 0.0
  %v1641 = vmax.f32 %v1384, 0.0
  %v1642 = vpack.c.bf16 %v1402, %v1386
  %v1643 = vpack.c.bf16 %v1403, %v1387
  %v1644 = vpack.c.bf16 %v1404, %v1388
  %v1645 = vpack.c.bf16 %v1405, %v1389
  %v1646 = vpack.c.bf16 %v1406, %v1390
  %v1647 = vpack.c.bf16 %v1407, %v1391
  %v1648 = vpack.c.bf16 %v1408, %v1392
  %v1649 = vpack.c.bf16 %v1409, %v1393
  %v1650 = vpack.c.bf16 %v1410, %v1394
  %v1651 = vpack.c.bf16 %v1411, %v1395
  %v1652 = vpack.c.bf16 %v1412, %v1396
  %v1653 = vpack.c.bf16 %v1413, %v1397
  %v1654 = vpack.c.bf16 %v1414, %v1398
  %v1655 = vpack.c.bf16 %v1415, %v1399
  %v1656 = vpack.c.bf16 %v1416, %v1400
  %v1657 = vpack.c.bf16 %v1417, %v1401
  %v1658 = vpack.c.bf16 %v1434, %v1418
  %v1659 = vpack.c.bf16 %v1435, %v1419
  %v1660 = vpack.c.bf16 %v1436, %v1420
  %v1661 = vpack.c.bf16 %v1437, %v1421
  %v1662 = vpack.c.bf16 %v1438, %v1422
  %v1663 = vpack.c.bf16 %v1439, %v1423
  %v1664 = vpack.c.bf16 %v1440, %v1424
  %v1665 = vpack.c.bf16 %v1441, %v1425
  %v1666 = vpack.c.bf16 %v1442, %v1426
  %v1667 = vpack.c.bf16 %v1443, %v1427
  %v1668 = vpack.c.bf16 %v1444, %v1428
  %v1669 = vpack.c.bf16 %v1445, %v1429
  %v1670 = vpack.c.bf16 %v1446, %v1430
  %v1671 = vpack.c.bf16 %v1447, %v1431
  %v1672 = vpack.c.bf16 %v1448, %v1432
  %v1673 = vpack.c.bf16 %v1449, %v1433
  %v1674 = vpack.c.bf16 %v1466, %v1450
  %v1675 = vpack.c.bf16 %v1467, %v1451
  %v1676 = vpack.c.bf16 %v1468, %v1452
  %v1677 = vpack.c.bf16 %v1469, %v1453
  %v1678 = vpack.c.bf16 %v1470, %v1454
  %v1679 = vpack.c.bf16 %v1471, %v1455
  %v1680 = vpack.c.bf16 %v1472, %v1456
  %v1681 = vpack.c.bf16 %v1473, %v1457
  %v1682 = vpack.c.bf16 %v1474, %v1458
  %v1683 = vpack.c.bf16 %v1475, %v1459
  %v1684 = vpack.c.bf16 %v1476, %v1460
  %v1685 = vpack.c.bf16 %v1477, %v1461
  %v1686 = vpack.c.bf16 %v1478, %v1462
  %v1687 = vpack.c.bf16 %v1479, %v1463
  %v1688 = vpack.c.bf16 %v1480, %v1464
  %v1689 = vpack.c.bf16 %v1481, %v1465
  %v1690 = vpack.c.bf16 %v1498, %v1482
  %v1691 = vpack.c.bf16 %v1499, %v1483
  %v1692 = vpack.c.bf16 %v1500, %v1484
  %v1693 = vpack.c.bf16 %v1501, %v1485
  %v1694 = vpack.c.bf16 %v1502, %v1486
  %v1695 = vpack.c.bf16 %v1503, %v1487
  %v1696 = vpack.c.bf16 %v1504, %v1488
  %v1697 = vpack.c.bf16 %v1505, %v1489
  %v1698 = vpack.c.bf16 %v1506, %v1490
  %v1699 = vpack.c.bf16 %v1507, %v1491
  %v1700 = vpack.c.bf16 %v1508, %v1492
  %v1701 = vpack.c.bf16 %v1509, %v1493
  %v1702 = vpack.c.bf16 %v1510, %v1494
  %v1703 = vpack.c.bf16 %v1511, %v1495
  %v1704 = vpack.c.bf16 %v1512, %v1496
  %v1705 = vpack.c.bf16 %v1513, %v1497
  %v1706 = vpack.c.bf16 %v1530, %v1514
  %v1707 = vpack.c.bf16 %v1531, %v1515
  %v1708 = vpack.c.bf16 %v1532, %v1516
  %v1709 = vpack.c.bf16 %v1533, %v1517
  %v1710 = vpack.c.bf16 %v1534, %v1518
  %v1711 = vpack.c.bf16 %v1535, %v1519
  %v1712 = vpack.c.bf16 %v1536, %v1520
  %v1713 = vpack.c.bf16 %v1537, %v1521
  %v1714 = vpack.c.bf16 %v1538, %v1522
  %v1715 = vpack.c.bf16 %v1539, %v1523
  %v1716 = vpack.c.bf16 %v1540, %v1524
  %v1717 = vpack.c.bf16 %v1541, %v1525
  %v1718 = vpack.c.bf16 %v1542, %v1526
  %v1719 = vpack.c.bf16 %v1543, %v1527
  %v1720 = vpack.c.bf16 %v1544, %v1528
  %v1721 = vpack.c.bf16 %v1545, %v1529
  %v1722 = vpack.c.bf16 %v1562, %v1546
  %v1723 = vpack.c.bf16 %v1563, %v1547
  %v1724 = vpack.c.bf16 %v1564, %v1548
  %v1725 = vpack.c.bf16 %v1565, %v1549
  %v1726 = vpack.c.bf16 %v1566, %v1550
  %v1727 = vpack.c.bf16 %v1567, %v1551
  %v1728 = vpack.c.bf16 %v1568, %v1552
  %v1729 = vpack.c.bf16 %v1569, %v1553
  %v1730 = vpack.c.bf16 %v1570, %v1554
  %v1731 = vpack.c.bf16 %v1571, %v1555
  %v1732 = vpack.c.bf16 %v1572, %v1556
  %v1733 = vpack.c.bf16 %v1573, %v1557
  %v1734 = vpack.c.bf16 %v1574, %v1558
  %v1735 = vpack.c.bf16 %v1575, %v1559
  %v1736 = vpack.c.bf16 %v1576, %v1560
  %v1737 = vpack.c.bf16 %v1577, %v1561
  %v1738 = vpack.c.bf16 %v1594, %v1578
  %v1739 = vpack.c.bf16 %v1595, %v1579
  %v1740 = vpack.c.bf16 %v1596, %v1580
  %v1741 = vpack.c.bf16 %v1597, %v1581
  %v1742 = vpack.c.bf16 %v1598, %v1582
  %v1743 = vpack.c.bf16 %v1599, %v1583
  %v1744 = vpack.c.bf16 %v1600, %v1584
  %v1745 = vpack.c.bf16 %v1601, %v1585
  %v1746 = vpack.c.bf16 %v1602, %v1586
  %v1747 = vpack.c.bf16 %v1603, %v1587
  %v1748 = vpack.c.bf16 %v1604, %v1588
  %v1749 = vpack.c.bf16 %v1605, %v1589
  %v1750 = vpack.c.bf16 %v1606, %v1590
  %v1751 = vpack.c.bf16 %v1607, %v1591
  %v1752 = vpack.c.bf16 %v1608, %v1592
  %v1753 = vpack.c.bf16 %v1609, %v1593
  %v1754 = vpack.c.bf16 %v1626, %v1610
  %v1755 = vpack.c.bf16 %v1627, %v1611
  %v1756 = vpack.c.bf16 %v1628, %v1612
  %v1757 = vpack.c.bf16 %v1629, %v1613
  %v1758 = vpack.c.bf16 %v1630, %v1614
  %v1759 = vpack.c.bf16 %v1631, %v1615
  %v1760 = vpack.c.bf16 %v1632, %v1616
  %v1761 = vpack.c.bf16 %v1633, %v1617
  %v1762 = vpack.c.bf16 %v1634, %v1618
  %v1763 = vpack.c.bf16 %v1635, %v1619
  %v1764 = vpack.c.bf16 %v1636, %v1620
  %v1765 = vpack.c.bf16 %v1637, %v1621
  %v1766 = vpack.c.bf16 %v1638, %v1622
  %v1767 = vpack.c.bf16 %v1639, %v1623
  %v1768 = vpack.c.bf16 %v1640, %v1624
  %v1769 = vpack.c.bf16 %v1641, %v1625
  %v1770 = vld [vmem:[%s3] sm:$0xf]
  %v1771 = vld [vmem:[%s3 + $0x4] sm:$0xf]
  %v1772 = vld [vmem:[%s3 + $0x8] sm:$0xf]
  %v1773 = vld [vmem:[%s3 + $0xc] sm:$0xf]
  %v1774 = vld [vmem:[%s3 + $0x10] sm:$0xf]
  %v1775 = vld [vmem:[%s3 + $0x14] sm:$0xf]
  %v1776 = vld [vmem:[%s3 + $0x18] sm:$0xf]
  %v1777 = vld [vmem:[%s3 + $0x1c] sm:$0xf]
  %v1778 = vld [vmem:[%s3 + $0x20] sm:$0xf]
  %v1779 = vld [vmem:[%s3 + $0x24] sm:$0xf]
  %v1780 = vld [vmem:[%s3 + $0x28] sm:$0xf]
  %v1781 = vld [vmem:[%s3 + $0x2c] sm:$0xf]
  %v1782 = vld [vmem:[%s3 + $0x30] sm:$0xf]
  %v1783 = vld [vmem:[%s3 + $0x34] sm:$0xf]
  %v1784 = vld [vmem:[%s3 + $0x38] sm:$0xf]
  %v1785 = vld [vmem:[%s3 + $0x3c] sm:$0xf]
  %v1786 = vld [vmem:[%s3 + $0x40] sm:$0xf]
  %v1787 = vld [vmem:[%s3 + $0x44] sm:$0xf]
  %v1788 = vld [vmem:[%s3 + $0x48] sm:$0xf]
  %v1789 = vld [vmem:[%s3 + $0x4c] sm:$0xf]
  %v1790 = vld [vmem:[%s3 + $0x50] sm:$0xf]
  %v1791 = vld [vmem:[%s3 + $0x54] sm:$0xf]
  %v1792 = vld [vmem:[%s3 + $0x58] sm:$0xf]
  %v1793 = vld [vmem:[%s3 + $0x5c] sm:$0xf]
  %v1794 = vld [vmem:[%s3 + $0x60] sm:$0xf]
  %v1795 = vld [vmem:[%s3 + $0x64] sm:$0xf]
  %v1796 = vld [vmem:[%s3 + $0x68] sm:$0xf]
  %v1797 = vld [vmem:[%s3 + $0x6c] sm:$0xf]
  %v1798 = vld [vmem:[%s3 + $0x70] sm:$0xf]
  %v1799 = vld [vmem:[%s3 + $0x74] sm:$0xf]
  %v1800 = vld [vmem:[%s3 + $0x78] sm:$0xf]
  %v1801 = vld [vmem:[%s3 + $0x7c] sm:$0xf]
  %v1802 = vld [vmem:[%s3 + $0x80] sm:$0xf]
  %v1803 = vld [vmem:[%s3 + $0x84] sm:$0xf]
  %v1804 = vld [vmem:[%s3 + $0x88] sm:$0xf]
  %v1805 = vld [vmem:[%s3 + $0x8c] sm:$0xf]
  %v1806 = vld [vmem:[%s3 + $0x90] sm:$0xf]
  %v1807 = vld [vmem:[%s3 + $0x94] sm:$0xf]
  %v1808 = vld [vmem:[%s3 + $0x98] sm:$0xf]
  %v1809 = vld [vmem:[%s3 + $0x9c] sm:$0xf]
  %v1810 = vld [vmem:[%s3 + $0xa0] sm:$0xf]
  %v1811 = vld [vmem:[%s3 + $0xa4] sm:$0xf]
  %v1812 = vld [vmem:[%s3 + $0xa8] sm:$0xf]
  %v1813 = vld [vmem:[%s3 + $0xac] sm:$0xf]
  %v1814 = vld [vmem:[%s3 + $0xb0] sm:$0xf]
  %v1815 = vld [vmem:[%s3 + $0xb4] sm:$0xf]
  %v1816 = vld [vmem:[%s3 + $0xb8] sm:$0xf]
  %v1817 = vld [vmem:[%s3 + $0xbc] sm:$0xf]
  %v1818 = vld [vmem:[%s3 + $0xc0] sm:$0xf]
  %v1819 = vld [vmem:[%s3 + $0xc4] sm:$0xf]
  %v1820 = vld [vmem:[%s3 + $0xc8] sm:$0xf]
  %v1821 = vld [vmem:[%s3 + $0xcc] sm:$0xf]
  %v1822 = vld [vmem:[%s3 + $0xd0] sm:$0xf]
  %v1823 = vld [vmem:[%s3 + $0xd4] sm:$0xf]
  %v1824 = vld [vmem:[%s3 + $0xd8] sm:$0xf]
  %v1825 = vld [vmem:[%s3 + $0xdc] sm:$0xf]
  %v1826 = vld [vmem:[%s3 + $0xe0] sm:$0xf]
  %v1827 = vld [vmem:[%s3 + $0xe4] sm:$0xf]
  %v1828 = vld [vmem:[%s3 + $0xe8] sm:$0xf]
  %v1829 = vld [vmem:[%s3 + $0xec] sm:$0xf]
  %v1830 = vld [vmem:[%s3 + $0xf0] sm:$0xf]
  %v1831 = vld [vmem:[%s3 + $0xf4] sm:$0xf]
  %v1832 = vld [vmem:[%s3 + $0xf8] sm:$0xf]
  %v1833 = vld [vmem:[%s3 + $0xfc] sm:$0xf]
  %v1834 = vld [vmem:[%s3 + $0x100] sm:$0xf]
  %v1835 = vld [vmem:[%s3 + $0x104] sm:$0xf]
  %v1836 = vld [vmem:[%s3 + $0x108] sm:$0xf]
  %v1837 = vld [vmem:[%s3 + $0x10c] sm:$0xf]
  %v1838 = vld [vmem:[%s3 + $0x110] sm:$0xf]
  %v1839 = vld [vmem:[%s3 + $0x114] sm:$0xf]
  %v1840 = vld [vmem:[%s3 + $0x118] sm:$0xf]
  %v1841 = vld [vmem:[%s3 + $0x11c] sm:$0xf]
  %v1842 = vld [vmem:[%s3 + $0x120] sm:$0xf]
  %v1843 = vld [vmem:[%s3 + $0x124] sm:$0xf]
  %v1844 = vld [vmem:[%s3 + $0x128] sm:$0xf]
  %v1845 = vld [vmem:[%s3 + $0x12c] sm:$0xf]
  %v1846 = vld [vmem:[%s3 + $0x130] sm:$0xf]
  %v1847 = vld [vmem:[%s3 + $0x134] sm:$0xf]
  %v1848 = vld [vmem:[%s3 + $0x138] sm:$0xf]
  %v1849 = vld [vmem:[%s3 + $0x13c] sm:$0xf]
  %v1850 = vld [vmem:[%s3 + $0x140] sm:$0xf]
  %v1851 = vld [vmem:[%s3 + $0x144] sm:$0xf]
  %v1852 = vld [vmem:[%s3 + $0x148] sm:$0xf]
  %v1853 = vld [vmem:[%s3 + $0x14c] sm:$0xf]
  %v1854 = vld [vmem:[%s3 + $0x150] sm:$0xf]
  %v1855 = vld [vmem:[%s3 + $0x154] sm:$0xf]
  %v1856 = vld [vmem:[%s3 + $0x158] sm:$0xf]
  %v1857 = vld [vmem:[%s3 + $0x15c] sm:$0xf]
  %v1858 = vld [vmem:[%s3 + $0x160] sm:$0xf]
  %v1859 = vld [vmem:[%s3 + $0x164] sm:$0xf]
  %v1860 = vld [vmem:[%s3 + $0x168] sm:$0xf]
  %v1861 = vld [vmem:[%s3 + $0x16c] sm:$0xf]
  %v1862 = vld [vmem:[%s3 + $0x170] sm:$0xf]
  %v1863 = vld [vmem:[%s3 + $0x174] sm:$0xf]
  %v1864 = vld [vmem:[%s3 + $0x178] sm:$0xf]
  %v1865 = vld [vmem:[%s3 + $0x17c] sm:$0xf]
  %v1866 = vld [vmem:[%s3 + $0x180] sm:$0xf]
  %v1867 = vld [vmem:[%s3 + $0x184] sm:$0xf]
  %v1868 = vld [vmem:[%s3 + $0x188] sm:$0xf]
  %v1869 = vld [vmem:[%s3 + $0x18c] sm:$0xf]
  %v1870 = vld [vmem:[%s3 + $0x190] sm:$0xf]
  %v1871 = vld [vmem:[%s3 + $0x194] sm:$0xf]
  %v1872 = vld [vmem:[%s3 + $0x198] sm:$0xf]
  %v1873 = vld [vmem:[%s3 + $0x19c] sm:$0xf]
  %v1874 = vld [vmem:[%s3 + $0x1a0] sm:$0xf]
  %v1875 = vld [vmem:[%s3 + $0x1a4] sm:$0xf]
  %v1876 = vld [vmem:[%s3 + $0x1a8] sm:$0xf]
  %v1877 = vld [vmem:[%s3 + $0x1ac] sm:$0xf]
  %v1878 = vld [vmem:[%s3 + $0x1b0] sm:$0xf]
  %v1879 = vld [vmem:[%s3 + $0x1b4] sm:$0xf]
  %v1880 = vld [vmem:[%s3 + $0x1b8] sm:$0xf]
  %v1881 = vld [vmem:[%s3 + $0x1bc] sm:$0xf]
  %v1882 = vld [vmem:[%s3 + $0x1c0] sm:$0xf]
  %v1883 = vld [vmem:[%s3 + $0x1c4] sm:$0xf]
  %v1884 = vld [vmem:[%s3 + $0x1c8] sm:$0xf]
  %v1885 = vld [vmem:[%s3 + $0x1cc] sm:$0xf]
  %v1886 = vld [vmem:[%s3 + $0x1d0] sm:$0xf]
  %v1887 = vld [vmem:[%s3 + $0x1d4] sm:$0xf]
  %v1888 = vld [vmem:[%s3 + $0x1d8] sm:$0xf]
  %v1889 = vld [vmem:[%s3 + $0x1dc] sm:$0xf]
  %v1890 = vld [vmem:[%s3 + $0x1e0] sm:$0xf]
  %v1891 = vld [vmem:[%s3 + $0x1e4] sm:$0xf]
  %v1892 = vld [vmem:[%s3 + $0x1e8] sm:$0xf]
  %v1893 = vld [vmem:[%s3 + $0x1ec] sm:$0xf]
  %v1894 = vld [vmem:[%s3 + $0x1f0] sm:$0xf]
  %v1895 = vld [vmem:[%s3 + $0x1f4] sm:$0xf]
  %v1896 = vld [vmem:[%s3 + $0x1f8] sm:$0xf]
  %v1897 = vld [vmem:[%s3 + $0x1fc] sm:$0xf]
  %v1898 = vld [vmem:[%s3 + $0x200] sm:$0xf]
  %v1899 = vld [vmem:[%s3 + $0x204] sm:$0xf]
  %v1900 = vld [vmem:[%s3 + $0x208] sm:$0xf]
  %v1901 = vld [vmem:[%s3 + $0x20c] sm:$0xf]
  %v1902 = vld [vmem:[%s3 + $0x210] sm:$0xf]
  %v1903 = vld [vmem:[%s3 + $0x214] sm:$0xf]
  %v1904 = vld [vmem:[%s3 + $0x218] sm:$0xf]
  %v1905 = vld [vmem:[%s3 + $0x21c] sm:$0xf]
  %v1906 = vld [vmem:[%s3 + $0x220] sm:$0xf]
  %v1907 = vld [vmem:[%s3 + $0x224] sm:$0xf]
  %v1908 = vld [vmem:[%s3 + $0x228] sm:$0xf]
  %v1909 = vld [vmem:[%s3 + $0x22c] sm:$0xf]
  %v1910 = vld [vmem:[%s3 + $0x230] sm:$0xf]
  %v1911 = vld [vmem:[%s3 + $0x234] sm:$0xf]
  %v1912 = vld [vmem:[%s3 + $0x238] sm:$0xf]
  %v1913 = vld [vmem:[%s3 + $0x23c] sm:$0xf]
  %v1914 = vld [vmem:[%s3 + $0x240] sm:$0xf]
  %v1915 = vld [vmem:[%s3 + $0x244] sm:$0xf]
  %v1916 = vld [vmem:[%s3 + $0x248] sm:$0xf]
  %v1917 = vld [vmem:[%s3 + $0x24c] sm:$0xf]
  %v1918 = vld [vmem:[%s3 + $0x250] sm:$0xf]
  %v1919 = vld [vmem:[%s3 + $0x254] sm:$0xf]
  %v1920 = vld [vmem:[%s3 + $0x258] sm:$0xf]
  %v1921 = vld [vmem:[%s3 + $0x25c] sm:$0xf]
  %v1922 = vld [vmem:[%s3 + $0x260] sm:$0xf]
  %v1923 = vld [vmem:[%s3 + $0x264] sm:$0xf]
  %v1924 = vld [vmem:[%s3 + $0x268] sm:$0xf]
  %v1925 = vld [vmem:[%s3 + $0x26c] sm:$0xf]
  %v1926 = vld [vmem:[%s3 + $0x270] sm:$0xf]
  %v1927 = vld [vmem:[%s3 + $0x274] sm:$0xf]
  %v1928 = vld [vmem:[%s3 + $0x278] sm:$0xf]
  %v1929 = vld [vmem:[%s3 + $0x27c] sm:$0xf]
  %v1930 = vld [vmem:[%s3 + $0x280] sm:$0xf]
  %v1931 = vld [vmem:[%s3 + $0x284] sm:$0xf]
  %v1932 = vld [vmem:[%s3 + $0x288] sm:$0xf]
  %v1933 = vld [vmem:[%s3 + $0x28c] sm:$0xf]
  %v1934 = vld [vmem:[%s3 + $0x290] sm:$0xf]
  %v1935 = vld [vmem:[%s3 + $0x294] sm:$0xf]
  %v1936 = vld [vmem:[%s3 + $0x298] sm:$0xf]
  %v1937 = vld [vmem:[%s3 + $0x29c] sm:$0xf]
  %v1938 = vld [vmem:[%s3 + $0x2a0] sm:$0xf]
  %v1939 = vld [vmem:[%s3 + $0x2a4] sm:$0xf]
  %v1940 = vld [vmem:[%s3 + $0x2a8] sm:$0xf]
  %v1941 = vld [vmem:[%s3 + $0x2ac] sm:$0xf]
  %v1942 = vld [vmem:[%s3 + $0x2b0] sm:$0xf]
  %v1943 = vld [vmem:[%s3 + $0x2b4] sm:$0xf]
  %v1944 = vld [vmem:[%s3 + $0x2b8] sm:$0xf]
  %v1945 = vld [vmem:[%s3 + $0x2bc] sm:$0xf]
  %v1946 = vld [vmem:[%s3 + $0x2c0] sm:$0xf]
  %v1947 = vld [vmem:[%s3 + $0x2c4] sm:$0xf]
  %v1948 = vld [vmem:[%s3 + $0x2c8] sm:$0xf]
  %v1949 = vld [vmem:[%s3 + $0x2cc] sm:$0xf]
  %v1950 = vld [vmem:[%s3 + $0x2d0] sm:$0xf]
  %v1951 = vld [vmem:[%s3 + $0x2d4] sm:$0xf]
  %v1952 = vld [vmem:[%s3 + $0x2d8] sm:$0xf]
  %v1953 = vld [vmem:[%s3 + $0x2dc] sm:$0xf]
  %v1954 = vld [vmem:[%s3 + $0x2e0] sm:$0xf]
  %v1955 = vld [vmem:[%s3 + $0x2e4] sm:$0xf]
  %v1956 = vld [vmem:[%s3 + $0x2e8] sm:$0xf]
  %v1957 = vld [vmem:[%s3 + $0x2ec] sm:$0xf]
  %v1958 = vld [vmem:[%s3 + $0x2f0] sm:$0xf]
  %v1959 = vld [vmem:[%s3 + $0x2f4] sm:$0xf]
  %v1960 = vld [vmem:[%s3 + $0x2f8] sm:$0xf]
  %v1961 = vld [vmem:[%s3 + $0x2fc] sm:$0xf]
  %v1962 = vld [vmem:[%s3 + $0x300] sm:$0xf]
  %v1963 = vld [vmem:[%s3 + $0x304] sm:$0xf]
  %v1964 = vld [vmem:[%s3 + $0x308] sm:$0xf]
  %v1965 = vld [vmem:[%s3 + $0x30c] sm:$0xf]
  %v1966 = vld [vmem:[%s3 + $0x310] sm:$0xf]
  %v1967 = vld [vmem:[%s3 + $0x314] sm:$0xf]
  %v1968 = vld [vmem:[%s3 + $0x318] sm:$0xf]
  %v1969 = vld [vmem:[%s3 + $0x31c] sm:$0xf]
  %v1970 = vld [vmem:[%s3 + $0x320] sm:$0xf]
  %v1971 = vld [vmem:[%s3 + $0x324] sm:$0xf]
  %v1972 = vld [vmem:[%s3 + $0x328] sm:$0xf]
  %v1973 = vld [vmem:[%s3 + $0x32c] sm:$0xf]
  %v1974 = vld [vmem:[%s3 + $0x330] sm:$0xf]
  %v1975 = vld [vmem:[%s3 + $0x334] sm:$0xf]
  %v1976 = vld [vmem:[%s3 + $0x338] sm:$0xf]
  %v1977 = vld [vmem:[%s3 + $0x33c] sm:$0xf]
  %v1978 = vld [vmem:[%s3 + $0x340] sm:$0xf]
  %v1979 = vld [vmem:[%s3 + $0x344] sm:$0xf]
  %v1980 = vld [vmem:[%s3 + $0x348] sm:$0xf]
  %v1981 = vld [vmem:[%s3 + $0x34c] sm:$0xf]
  %v1982 = vld [vmem:[%s3 + $0x350] sm:$0xf]
  %v1983 = vld [vmem:[%s3 + $0x354] sm:$0xf]
  %v1984 = vld [vmem:[%s3 + $0x358] sm:$0xf]
  %v1985 = vld [vmem:[%s3 + $0x35c] sm:$0xf]
  %v1986 = vld [vmem:[%s3 + $0x360] sm:$0xf]
  %v1987 = vld [vmem:[%s3 + $0x364] sm:$0xf]
  %v1988 = vld [vmem:[%s3 + $0x368] sm:$0xf]
  %v1989 = vld [vmem:[%s3 + $0x36c] sm:$0xf]
  %v1990 = vld [vmem:[%s3 + $0x370] sm:$0xf]
  %v1991 = vld [vmem:[%s3 + $0x374] sm:$0xf]
  %v1992 = vld [vmem:[%s3 + $0x378] sm:$0xf]
  %v1993 = vld [vmem:[%s3 + $0x37c] sm:$0xf]
  %v1994 = vld [vmem:[%s3 + $0x380] sm:$0xf]
  %v1995 = vld [vmem:[%s3 + $0x384] sm:$0xf]
  %v1996 = vld [vmem:[%s3 + $0x388] sm:$0xf]
  %v1997 = vld [vmem:[%s3 + $0x38c] sm:$0xf]
  %v1998 = vld [vmem:[%s3 + $0x390] sm:$0xf]
  %v1999 = vld [vmem:[%s3 + $0x394] sm:$0xf]
  %v2000 = vld [vmem:[%s3 + $0x398] sm:$0xf]
  %v2001 = vld [vmem:[%s3 + $0x39c] sm:$0xf]
  %v2002 = vld [vmem:[%s3 + $0x3a0] sm:$0xf]
  %v2003 = vld [vmem:[%s3 + $0x3a4] sm:$0xf]
  %v2004 = vld [vmem:[%s3 + $0x3a8] sm:$0xf]
  %v2005 = vld [vmem:[%s3 + $0x3ac] sm:$0xf]
  %v2006 = vld [vmem:[%s3 + $0x3b0] sm:$0xf]
  %v2007 = vld [vmem:[%s3 + $0x3b4] sm:$0xf]
  %v2008 = vld [vmem:[%s3 + $0x3b8] sm:$0xf]
  %v2009 = vld [vmem:[%s3 + $0x3bc] sm:$0xf]
  %v2010 = vld [vmem:[%s3 + $0x3c0] sm:$0xf]
  %v2011 = vld [vmem:[%s3 + $0x3c4] sm:$0xf]
  %v2012 = vld [vmem:[%s3 + $0x3c8] sm:$0xf]
  %v2013 = vld [vmem:[%s3 + $0x3cc] sm:$0xf]
  %v2014 = vld [vmem:[%s3 + $0x3d0] sm:$0xf]
  %v2015 = vld [vmem:[%s3 + $0x3d4] sm:$0xf]
  %v2016 = vld [vmem:[%s3 + $0x3d8] sm:$0xf]
  %v2017 = vld [vmem:[%s3 + $0x3dc] sm:$0xf]
  %v2018 = vld [vmem:[%s3 + $0x3e0] sm:$0xf]
  %v2019 = vld [vmem:[%s3 + $0x3e4] sm:$0xf]
  %v2020 = vld [vmem:[%s3 + $0x3e8] sm:$0xf]
  %v2021 = vld [vmem:[%s3 + $0x3ec] sm:$0xf]
  %v2022 = vld [vmem:[%s3 + $0x3f0] sm:$0xf]
  %v2023 = vld [vmem:[%s3 + $0x3f4] sm:$0xf]
  %v2024 = vld [vmem:[%s3 + $0x3f8] sm:$0xf]
  %v2025 = vld [vmem:[%s3 + $0x3fc] sm:$0xf]
  %v2026 = vld [vmem:[%s4] sm:$0x1]
  %v2028 = vlaneseq
  %v2029 = vshrl.u32 %v2028, 7
  %v2030 = vsub.s32 0, %v2029
  %v2031 = vrot.slane %v2026, %v2030
  %v2289 = vunpack.c.l.b16 %v1770
  %v2290 = vunpack.c.l.b16 %v1771
  %v2291 = vunpack.c.l.b16 %v1772
  %v2292 = vunpack.c.l.b16 %v1773
  %v2293 = vunpack.c.l.b16 %v1774
  %v2294 = vunpack.c.l.b16 %v1775
  %v2295 = vunpack.c.l.b16 %v1776
  %v2296 = vunpack.c.l.b16 %v1777
  %v2297 = vunpack.c.l.b16 %v1778
  %v2298 = vunpack.c.l.b16 %v1779
  %v2299 = vunpack.c.l.b16 %v1780
  %v2300 = vunpack.c.l.b16 %v1781
  %v2301 = vunpack.c.l.b16 %v1782
  %v2302 = vunpack.c.l.b16 %v1783
  %v2303 = vunpack.c.l.b16 %v1784
  %v2304 = vunpack.c.l.b16 %v1785
  %v2305 = vunpack.c.l.b16 %v1786
  %v2306 = vunpack.c.l.b16 %v1787
  %v2307 = vunpack.c.l.b16 %v1788
  %v2308 = vunpack.c.l.b16 %v1789
  %v2309 = vunpack.c.l.b16 %v1790
  %v2310 = vunpack.c.l.b16 %v1791
  %v2311 = vunpack.c.l.b16 %v1792
  %v2312 = vunpack.c.l.b16 %v1793
  %v2313 = vunpack.c.l.b16 %v1794
  %v2314 = vunpack.c.l.b16 %v1795
  %v2315 = vunpack.c.l.b16 %v1796
  %v2316 = vunpack.c.l.b16 %v1797
  %v2317 = vunpack.c.l.b16 %v1798
  %v2318 = vunpack.c.l.b16 %v1799
  %v2319 = vunpack.c.l.b16 %v1800
  %v2320 = vunpack.c.l.b16 %v1801
  %v2321 = vunpack.c.l.b16 %v1802
  %v2322 = vunpack.c.l.b16 %v1803
  %v2323 = vunpack.c.l.b16 %v1804
  %v2324 = vunpack.c.l.b16 %v1805
  %v2325 = vunpack.c.l.b16 %v1806
  %v2326 = vunpack.c.l.b16 %v1807
  %v2327 = vunpack.c.l.b16 %v1808
  %v2328 = vunpack.c.l.b16 %v1809
  %v2329 = vunpack.c.l.b16 %v1810
  %v2330 = vunpack.c.l.b16 %v1811
  %v2331 = vunpack.c.l.b16 %v1812
  %v2332 = vunpack.c.l.b16 %v1813
  %v2333 = vunpack.c.l.b16 %v1814
  %v2334 = vunpack.c.l.b16 %v1815
  %v2335 = vunpack.c.l.b16 %v1816
  %v2336 = vunpack.c.l.b16 %v1817
  %v2337 = vunpack.c.l.b16 %v1818
  %v2338 = vunpack.c.l.b16 %v1819
  %v2339 = vunpack.c.l.b16 %v1820
  %v2340 = vunpack.c.l.b16 %v1821
  %v2341 = vunpack.c.l.b16 %v1822
  %v2342 = vunpack.c.l.b16 %v1823
  %v2343 = vunpack.c.l.b16 %v1824
  %v2344 = vunpack.c.l.b16 %v1825
  %v2345 = vunpack.c.l.b16 %v1826
  %v2346 = vunpack.c.l.b16 %v1827
  %v2347 = vunpack.c.l.b16 %v1828
  %v2348 = vunpack.c.l.b16 %v1829
  %v2349 = vunpack.c.l.b16 %v1830
  %v2350 = vunpack.c.l.b16 %v1831
  %v2351 = vunpack.c.l.b16 %v1832
  %v2352 = vunpack.c.l.b16 %v1833
  %v2353 = vunpack.c.l.b16 %v1834
  %v2354 = vunpack.c.l.b16 %v1835
  %v2355 = vunpack.c.l.b16 %v1836
  %v2356 = vunpack.c.l.b16 %v1837
  %v2357 = vunpack.c.l.b16 %v1838
  %v2358 = vunpack.c.l.b16 %v1839
  %v2359 = vunpack.c.l.b16 %v1840
  %v2360 = vunpack.c.l.b16 %v1841
  %v2361 = vunpack.c.l.b16 %v1842
  %v2362 = vunpack.c.l.b16 %v1843
  %v2363 = vunpack.c.l.b16 %v1844
  %v2364 = vunpack.c.l.b16 %v1845
  %v2365 = vunpack.c.l.b16 %v1846
  %v2366 = vunpack.c.l.b16 %v1847
  %v2367 = vunpack.c.l.b16 %v1848
  %v2368 = vunpack.c.l.b16 %v1849
  %v2369 = vunpack.c.l.b16 %v1850
  %v2370 = vunpack.c.l.b16 %v1851
  %v2371 = vunpack.c.l.b16 %v1852
  %v2372 = vunpack.c.l.b16 %v1853
  %v2373 = vunpack.c.l.b16 %v1854
  %v2374 = vunpack.c.l.b16 %v1855
  %v2375 = vunpack.c.l.b16 %v1856
  %v2376 = vunpack.c.l.b16 %v1857
  %v2377 = vunpack.c.l.b16 %v1858
  %v2378 = vunpack.c.l.b16 %v1859
  %v2379 = vunpack.c.l.b16 %v1860
  %v2380 = vunpack.c.l.b16 %v1861
  %v2381 = vunpack.c.l.b16 %v1862
  %v2382 = vunpack.c.l.b16 %v1863
  %v2383 = vunpack.c.l.b16 %v1864
  %v2384 = vunpack.c.l.b16 %v1865
  %v2385 = vunpack.c.l.b16 %v1866
  %v2386 = vunpack.c.l.b16 %v1867
  %v2387 = vunpack.c.l.b16 %v1868
  %v2388 = vunpack.c.l.b16 %v1869
  %v2389 = vunpack.c.l.b16 %v1870
  %v2390 = vunpack.c.l.b16 %v1871
  %v2391 = vunpack.c.l.b16 %v1872
  %v2392 = vunpack.c.l.b16 %v1873
  %v2393 = vunpack.c.l.b16 %v1874
  %v2394 = vunpack.c.l.b16 %v1875
  %v2395 = vunpack.c.l.b16 %v1876
  %v2396 = vunpack.c.l.b16 %v1877
  %v2397 = vunpack.c.l.b16 %v1878
  %v2398 = vunpack.c.l.b16 %v1879
  %v2399 = vunpack.c.l.b16 %v1880
  %v2400 = vunpack.c.l.b16 %v1881
  %v2401 = vunpack.c.l.b16 %v1882
  %v2402 = vunpack.c.l.b16 %v1883
  %v2403 = vunpack.c.l.b16 %v1884
  %v2404 = vunpack.c.l.b16 %v1885
  %v2405 = vunpack.c.l.b16 %v1886
  %v2406 = vunpack.c.l.b16 %v1887
  %v2407 = vunpack.c.l.b16 %v1888
  %v2408 = vunpack.c.l.b16 %v1889
  %v2409 = vunpack.c.l.b16 %v1890
  %v2410 = vunpack.c.l.b16 %v1891
  %v2411 = vunpack.c.l.b16 %v1892
  %v2412 = vunpack.c.l.b16 %v1893
  %v2413 = vunpack.c.l.b16 %v1894
  %v2414 = vunpack.c.l.b16 %v1895
  %v2415 = vunpack.c.l.b16 %v1896
  %v2416 = vunpack.c.l.b16 %v1897
  %v2417 = vunpack.c.l.b16 %v1898
  %v2418 = vunpack.c.l.b16 %v1899
  %v2419 = vunpack.c.l.b16 %v1900
  %v2420 = vunpack.c.l.b16 %v1901
  %v2421 = vunpack.c.l.b16 %v1902
  %v2422 = vunpack.c.l.b16 %v1903
  %v2423 = vunpack.c.l.b16 %v1904
  %v2424 = vunpack.c.l.b16 %v1905
  %v2425 = vunpack.c.l.b16 %v1906
  %v2426 = vunpack.c.l.b16 %v1907
  %v2427 = vunpack.c.l.b16 %v1908
  %v2428 = vunpack.c.l.b16 %v1909
  %v2429 = vunpack.c.l.b16 %v1910
  %v2430 = vunpack.c.l.b16 %v1911
  %v2431 = vunpack.c.l.b16 %v1912
  %v2432 = vunpack.c.l.b16 %v1913
  %v2433 = vunpack.c.l.b16 %v1914
  %v2434 = vunpack.c.l.b16 %v1915
  %v2435 = vunpack.c.l.b16 %v1916
  %v2436 = vunpack.c.l.b16 %v1917
  %v2437 = vunpack.c.l.b16 %v1918
  %v2438 = vunpack.c.l.b16 %v1919
  %v2439 = vunpack.c.l.b16 %v1920
  %v2440 = vunpack.c.l.b16 %v1921
  %v2441 = vunpack.c.l.b16 %v1922
  %v2442 = vunpack.c.l.b16 %v1923
  %v2443 = vunpack.c.l.b16 %v1924
  %v2444 = vunpack.c.l.b16 %v1925
  %v2445 = vunpack.c.l.b16 %v1926
  %v2446 = vunpack.c.l.b16 %v1927
  %v2447 = vunpack.c.l.b16 %v1928
  %v2448 = vunpack.c.l.b16 %v1929
  %v2449 = vunpack.c.l.b16 %v1930
  %v2450 = vunpack.c.l.b16 %v1931
  %v2451 = vunpack.c.l.b16 %v1932
  %v2452 = vunpack.c.l.b16 %v1933
  %v2453 = vunpack.c.l.b16 %v1934
  %v2454 = vunpack.c.l.b16 %v1935
  %v2455 = vunpack.c.l.b16 %v1936
  %v2456 = vunpack.c.l.b16 %v1937
  %v2457 = vunpack.c.l.b16 %v1938
  %v2458 = vunpack.c.l.b16 %v1939
  %v2459 = vunpack.c.l.b16 %v1940
  %v2460 = vunpack.c.l.b16 %v1941
  %v2461 = vunpack.c.l.b16 %v1942
  %v2462 = vunpack.c.l.b16 %v1943
  %v2463 = vunpack.c.l.b16 %v1944
  %v2464 = vunpack.c.l.b16 %v1945
  %v2465 = vunpack.c.l.b16 %v1946
  %v2466 = vunpack.c.l.b16 %v1947
  %v2467 = vunpack.c.l.b16 %v1948
  %v2468 = vunpack.c.l.b16 %v1949
  %v2469 = vunpack.c.l.b16 %v1950
  %v2470 = vunpack.c.l.b16 %v1951
  %v2471 = vunpack.c.l.b16 %v1952
  %v2472 = vunpack.c.l.b16 %v1953
  %v2473 = vunpack.c.l.b16 %v1954
  %v2474 = vunpack.c.l.b16 %v1955
  %v2475 = vunpack.c.l.b16 %v1956
  %v2476 = vunpack.c.l.b16 %v1957
  %v2477 = vunpack.c.l.b16 %v1958
  %v2478 = vunpack.c.l.b16 %v1959
  %v2479 = vunpack.c.l.b16 %v1960
  %v2480 = vunpack.c.l.b16 %v1961
  %v2481 = vunpack.c.l.b16 %v1962
  %v2482 = vunpack.c.l.b16 %v1963
  %v2483 = vunpack.c.l.b16 %v1964
  %v2484 = vunpack.c.l.b16 %v1965
  %v2485 = vunpack.c.l.b16 %v1966
  %v2486 = vunpack.c.l.b16 %v1967
  %v2487 = vunpack.c.l.b16 %v1968
  %v2488 = vunpack.c.l.b16 %v1969
  %v2489 = vunpack.c.l.b16 %v1970
  %v2490 = vunpack.c.l.b16 %v1971
  %v2491 = vunpack.c.l.b16 %v1972
  %v2492 = vunpack.c.l.b16 %v1973
  %v2493 = vunpack.c.l.b16 %v1974
  %v2494 = vunpack.c.l.b16 %v1975
  %v2495 = vunpack.c.l.b16 %v1976
  %v2496 = vunpack.c.l.b16 %v1977
  %v2497 = vunpack.c.l.b16 %v1978
  %v2498 = vunpack.c.l.b16 %v1979
  %v2499 = vunpack.c.l.b16 %v1980
  %v2500 = vunpack.c.l.b16 %v1981
  %v2501 = vunpack.c.l.b16 %v1982
  %v2502 = vunpack.c.l.b16 %v1983
  %v2503 = vunpack.c.l.b16 %v1984
  %v2504 = vunpack.c.l.b16 %v1985
  %v2505 = vunpack.c.l.b16 %v1986
  %v2506 = vunpack.c.l.b16 %v1987
  %v2507 = vunpack.c.l.b16 %v1988
  %v2508 = vunpack.c.l.b16 %v1989
  %v2509 = vunpack.c.l.b16 %v1990
  %v2510 = vunpack.c.l.b16 %v1991
  %v2511 = vunpack.c.l.b16 %v1992
  %v2512 = vunpack.c.l.b16 %v1993
  %v2513 = vunpack.c.l.b16 %v1994
  %v2514 = vunpack.c.l.b16 %v1995
  %v2515 = vunpack.c.l.b16 %v1996
  %v2516 = vunpack.c.l.b16 %v1997
  %v2517 = vunpack.c.l.b16 %v1998
  %v2518 = vunpack.c.l.b16 %v1999
  %v2519 = vunpack.c.l.b16 %v2000
  %v2520 = vunpack.c.l.b16 %v2001
  %v2521 = vunpack.c.l.b16 %v2002
  %v2522 = vunpack.c.l.b16 %v2003
  %v2523 = vunpack.c.l.b16 %v2004
  %v2524 = vunpack.c.l.b16 %v2005
  %v2525 = vunpack.c.l.b16 %v2006
  %v2526 = vunpack.c.l.b16 %v2007
  %v2527 = vunpack.c.l.b16 %v2008
  %v2528 = vunpack.c.l.b16 %v2009
  %v2529 = vunpack.c.l.b16 %v2010
  %v2530 = vunpack.c.l.b16 %v2011
  %v2531 = vunpack.c.l.b16 %v2012
  %v2532 = vunpack.c.l.b16 %v2013
  %v2533 = vunpack.c.l.b16 %v2014
  %v2534 = vunpack.c.l.b16 %v2015
  %v2535 = vunpack.c.l.b16 %v2016
  %v2536 = vunpack.c.l.b16 %v2017
  %v2537 = vunpack.c.l.b16 %v2018
  %v2538 = vunpack.c.l.b16 %v2019
  %v2539 = vunpack.c.l.b16 %v2020
  %v2540 = vunpack.c.l.b16 %v2021
  %v2541 = vunpack.c.l.b16 %v2022
  %v2542 = vunpack.c.l.b16 %v2023
  %v2543 = vunpack.c.l.b16 %v2024
  %v2544 = vunpack.c.l.b16 %v2025
  %v2545 = vpack.c.b16 %v2290, %v2289
  %v2546 = vpack.c.b16 %v2292, %v2291
  %v2547 = vpack.c.b16 %v2294, %v2293
  %v2548 = vpack.c.b16 %v2296, %v2295
  %v2549 = vpack.c.b16 %v2298, %v2297
  %v2550 = vpack.c.b16 %v2300, %v2299
  %v2551 = vpack.c.b16 %v2302, %v2301
  %v2552 = vpack.c.b16 %v2304, %v2303
  %v2553 = vpack.c.b16 %v2306, %v2305
  %v2554 = vpack.c.b16 %v2308, %v2307
  %v2555 = vpack.c.b16 %v2310, %v2309
  %v2556 = vpack.c.b16 %v2312, %v2311
  %v2557 = vpack.c.b16 %v2314, %v2313
  %v2558 = vpack.c.b16 %v2316, %v2315
  %v2559 = vpack.c.b16 %v2318, %v2317
  %v2560 = vpack.c.b16 %v2320, %v2319
  %v2561 = vpack.c.b16 %v2322, %v2321
  %v2562 = vpack.c.b16 %v2324, %v2323
  %v2563 = vpack.c.b16 %v2326, %v2325
  %v2564 = vpack.c.b16 %v2328, %v2327
  %v2565 = vpack.c.b16 %v2330, %v2329
  %v2566 = vpack.c.b16 %v2332, %v2331
  %v2567 = vpack.c.b16 %v2334, %v2333
  %v2568 = vpack.c.b16 %v2336, %v2335
  %v2569 = vpack.c.b16 %v2338, %v2337
  %v2570 = vpack.c.b16 %v2340, %v2339
  %v2571 = vpack.c.b16 %v2342, %v2341
  %v2572 = vpack.c.b16 %v2344, %v2343
  %v2573 = vpack.c.b16 %v2346, %v2345
  %v2574 = vpack.c.b16 %v2348, %v2347
  %v2575 = vpack.c.b16 %v2350, %v2349
  %v2576 = vpack.c.b16 %v2352, %v2351
  %v2577 = vpack.c.b16 %v2354, %v2353
  %v2578 = vpack.c.b16 %v2356, %v2355
  %v2579 = vpack.c.b16 %v2358, %v2357
  %v2580 = vpack.c.b16 %v2360, %v2359
  %v2581 = vpack.c.b16 %v2362, %v2361
  %v2582 = vpack.c.b16 %v2364, %v2363
  %v2583 = vpack.c.b16 %v2366, %v2365
  %v2584 = vpack.c.b16 %v2368, %v2367
  %v2585 = vpack.c.b16 %v2370, %v2369
  %v2586 = vpack.c.b16 %v2372, %v2371
  %v2587 = vpack.c.b16 %v2374, %v2373
  %v2588 = vpack.c.b16 %v2376, %v2375
  %v2589 = vpack.c.b16 %v2378, %v2377
  %v2590 = vpack.c.b16 %v2380, %v2379
  %v2591 = vpack.c.b16 %v2382, %v2381
  %v2592 = vpack.c.b16 %v2384, %v2383
  %v2593 = vpack.c.b16 %v2386, %v2385
  %v2594 = vpack.c.b16 %v2388, %v2387
  %v2595 = vpack.c.b16 %v2390, %v2389
  %v2596 = vpack.c.b16 %v2392, %v2391
  %v2597 = vpack.c.b16 %v2394, %v2393
  %v2598 = vpack.c.b16 %v2396, %v2395
  %v2599 = vpack.c.b16 %v2398, %v2397
  %v2600 = vpack.c.b16 %v2400, %v2399
  %v2601 = vpack.c.b16 %v2402, %v2401
  %v2602 = vpack.c.b16 %v2404, %v2403
  %v2603 = vpack.c.b16 %v2406, %v2405
  %v2604 = vpack.c.b16 %v2408, %v2407
  %v2605 = vpack.c.b16 %v2410, %v2409
  %v2606 = vpack.c.b16 %v2412, %v2411
  %v2607 = vpack.c.b16 %v2414, %v2413
  %v2608 = vpack.c.b16 %v2416, %v2415
  %v2609 = vpack.c.b16 %v2418, %v2417
  %v2610 = vpack.c.b16 %v2420, %v2419
  %v2611 = vpack.c.b16 %v2422, %v2421
  %v2612 = vpack.c.b16 %v2424, %v2423
  %v2613 = vpack.c.b16 %v2426, %v2425
  %v2614 = vpack.c.b16 %v2428, %v2427
  %v2615 = vpack.c.b16 %v2430, %v2429
  %v2616 = vpack.c.b16 %v2432, %v2431
  %v2617 = vpack.c.b16 %v2434, %v2433
  %v2618 = vpack.c.b16 %v2436, %v2435
  %v2619 = vpack.c.b16 %v2438, %v2437
  %v2620 = vpack.c.b16 %v2440, %v2439
  %v2621 = vpack.c.b16 %v2442, %v2441
  %v2622 = vpack.c.b16 %v2444, %v2443
  %v2623 = vpack.c.b16 %v2446, %v2445
  %v2624 = vpack.c.b16 %v2448, %v2447
  %v2625 = vpack.c.b16 %v2450, %v2449
  %v2626 = vpack.c.b16 %v2452, %v2451
  %v2627 = vpack.c.b16 %v2454, %v2453
  %v2628 = vpack.c.b16 %v2456, %v2455
  %v2629 = vpack.c.b16 %v2458, %v2457
  %v2630 = vpack.c.b16 %v2460, %v2459
  %v2631 = vpack.c.b16 %v2462, %v2461
  %v2632 = vpack.c.b16 %v2464, %v2463
  %v2633 = vpack.c.b16 %v2466, %v2465
  %v2634 = vpack.c.b16 %v2468, %v2467
  %v2635 = vpack.c.b16 %v2470, %v2469
  %v2636 = vpack.c.b16 %v2472, %v2471
  %v2637 = vpack.c.b16 %v2474, %v2473
  %v2638 = vpack.c.b16 %v2476, %v2475
  %v2639 = vpack.c.b16 %v2478, %v2477
  %v2640 = vpack.c.b16 %v2480, %v2479
  %v2641 = vpack.c.b16 %v2482, %v2481
  %v2642 = vpack.c.b16 %v2484, %v2483
  %v2643 = vpack.c.b16 %v2486, %v2485
  %v2644 = vpack.c.b16 %v2488, %v2487
  %v2645 = vpack.c.b16 %v2490, %v2489
  %v2646 = vpack.c.b16 %v2492, %v2491
  %v2647 = vpack.c.b16 %v2494, %v2493
  %v2648 = vpack.c.b16 %v2496, %v2495
  %v2649 = vpack.c.b16 %v2498, %v2497
  %v2650 = vpack.c.b16 %v2500, %v2499
  %v2651 = vpack.c.b16 %v2502, %v2501
  %v2652 = vpack.c.b16 %v2504, %v2503
  %v2653 = vpack.c.b16 %v2506, %v2505
  %v2654 = vpack.c.b16 %v2508, %v2507
  %v2655 = vpack.c.b16 %v2510, %v2509
  %v2656 = vpack.c.b16 %v2512, %v2511
  %v2657 = vpack.c.b16 %v2514, %v2513
  %v2658 = vpack.c.b16 %v2516, %v2515
  %v2659 = vpack.c.b16 %v2518, %v2517
  %v2660 = vpack.c.b16 %v2520, %v2519
  %v2661 = vpack.c.b16 %v2522, %v2521
  %v2662 = vpack.c.b16 %v2524, %v2523
  %v2663 = vpack.c.b16 %v2526, %v2525
  %v2664 = vpack.c.b16 %v2528, %v2527
  %v2665 = vpack.c.b16 %v2530, %v2529
  %v2666 = vpack.c.b16 %v2532, %v2531
  %v2667 = vpack.c.b16 %v2534, %v2533
  %v2668 = vpack.c.b16 %v2536, %v2535
  %v2669 = vpack.c.b16 %v2538, %v2537
  %v2670 = vpack.c.b16 %v2540, %v2539
  %v2671 = vpack.c.b16 %v2542, %v2541
  %v2672 = vpack.c.b16 %v2544, %v2543
  %2801 = vmatprep.subr.bf16.mxu0 0
  %2802 = vmatpush1.bf16.msra.mxu0 %v2552
  %2803 = vmatprep.subr.bf16.mxu0 0
  %2804 = vmatpush1.bf16.msra.mxu0 %v2551
  %2805 = vmatprep.subr.bf16.mxu0 0
  %2806 = vmatpush1.bf16.msra.mxu0 %v2550
  %2807 = vmatprep.subr.bf16.mxu0 0
  %2808 = vmatpush1.bf16.msra.mxu0 %v2549
  %2809 = vmatprep.subr.bf16.mxu0 0
  %2810 = vmatpush1.bf16.msra.mxu0 %v2548
  %2811 = vmatprep.subr.bf16.mxu0 0
  %2812 = vmatpush1.bf16.msra.mxu0 %v2547
  %2813 = vmatprep.subr.bf16.mxu0 0
  %2814 = vmatpush1.bf16.msra.mxu0 %v2546
  %2815 = vmatprep.subr.bf16.mxu0 0
  %2816 = vmatpush1.bf16.msra.mxu0 %v2545
  %2817 = vmatprep.subr.bf16.mxu0 0
  %2818 = vmatpush2.bf16.msra.mxu0 %v2560
  %2819 = vmatprep.subr.bf16.mxu0 0
  %2820 = vmatpush2.bf16.msra.mxu0 %v2559
  %2821 = vmatprep.subr.bf16.mxu0 0
  %2822 = vmatpush2.bf16.msra.mxu0 %v2558
  %2823 = vmatprep.subr.bf16.mxu0 0
  %2824 = vmatpush2.bf16.msra.mxu0 %v2557
  %2825 = vmatprep.subr.bf16.mxu0 0
  %2826 = vmatpush2.bf16.msra.mxu0 %v2556
  %2827 = vmatprep.subr.bf16.mxu0 0
  %2828 = vmatpush2.bf16.msra.mxu0 %v2555
  %2829 = vmatprep.subr.bf16.mxu0 0
  %2830 = vmatpush2.bf16.msra.mxu0 %v2554
  %2831 = vmatprep.subr.bf16.mxu0 0
  %2832 = vmatpush2.bf16.msra.mxu0 %v2553
  %2833 = vmatprep.mubr.bf16.mxu0 %v1643
  %2834 = vmatmul.mubr.bf16.gmra.mxu0 %v1642
  %v2835 = vpop.f32.mrf.mxu0
  %v2836 = vadd.f32 %v2031, %v2835
  %v2837 = vpop.f32.mrf.mxu0
  %v2838 = vpop.f32.mrf.mxu0
  %v2839 = vadd.f32 %v2031, %v2838
  %v2840 = vpop.f32.mrf.mxu0
  %2841 = vmatprep.mubr.bf16.mxu0 %v1659
  %2842 = vmatmul.mubr.bf16.gmra.mxu0 %v1658
  %v2843 = vpop.f32.mrf.mxu0
  %v2844 = vadd.f32 %v2031, %v2843
  %v2845 = vpop.f32.mrf.mxu0
  %v2846 = vpop.f32.mrf.mxu0
  %v2847 = vadd.f32 %v2031, %v2846
  %v2848 = vpop.f32.mrf.mxu0
  %2849 = vmatprep.mubr.bf16.mxu0 %v1675
  %2850 = vmatmul.mubr.bf16.gmra.mxu0 %v1674
  %v2851 = vpop.f32.mrf.mxu0
  %v2852 = vadd.f32 %v2031, %v2851
  %v2853 = vpop.f32.mrf.mxu0
  %v2854 = vpop.f32.mrf.mxu0
  %v2855 = vadd.f32 %v2031, %v2854
  %v2856 = vpop.f32.mrf.mxu0
  %2857 = vmatprep.mubr.bf16.mxu0 %v1691
  %2858 = vmatmul.mubr.bf16.gmra.mxu0 %v1690
  %v2859 = vpop.f32.mrf.mxu0
  %v2860 = vadd.f32 %v2031, %v2859
  %v2861 = vpop.f32.mrf.mxu0
  %v2862 = vpop.f32.mrf.mxu0
  %v2863 = vadd.f32 %v2031, %v2862
  %v2864 = vpop.f32.mrf.mxu0
  %2865 = vmatprep.mubr.bf16.mxu0 %v1707
  %2866 = vmatmul.mubr.bf16.gmra.mxu0 %v1706
  %v2867 = vpop.f32.mrf.mxu0
  %v2868 = vadd.f32 %v2031, %v2867
  %v2869 = vpop.f32.mrf.mxu0
  %v2870 = vpop.f32.mrf.mxu0
  %v2871 = vadd.f32 %v2031, %v2870
  %v2872 = vpop.f32.mrf.mxu0
  %2873 = vmatprep.mubr.bf16.mxu0 %v1723
  %2874 = vmatmul.mubr.bf16.gmra.mxu0 %v1722
  %v2875 = vpop.f32.mrf.mxu0
  %v2876 = vadd.f32 %v2031, %v2875
  %v2877 = vpop.f32.mrf.mxu0
  %v2878 = vpop.f32.mrf.mxu0
  %v2879 = vadd.f32 %v2031, %v2878
  %v2880 = vpop.f32.mrf.mxu0
  %2881 = vmatprep.mubr.bf16.mxu0 %v1739
  %2882 = vmatmul.mubr.bf16.gmra.mxu0 %v1738
  %v2883 = vpop.f32.mrf.mxu0
  %v2884 = vadd.f32 %v2031, %v2883
  %v2885 = vpop.f32.mrf.mxu0
  %v2886 = vpop.f32.mrf.mxu0
  %v2887 = vadd.f32 %v2031, %v2886
  %v2888 = vpop.f32.mrf.mxu0
  %2889 = vmatprep.mubr.bf16.mxu0 %v1755
  %2890 = vmatmul.mubr.bf16.gmra.mxu0 %v1754
  %v2891 = vpop.f32.mrf.mxu0
  %v2892 = vadd.f32 %v2031, %v2891
  %v2893 = vpop.f32.mrf.mxu0
  %v2894 = vpop.f32.mrf.mxu0
  %v2895 = vadd.f32 %v2031, %v2894
  %v2896 = vpop.f32.mrf.mxu0
  %2897 = vdwg.mxu0
  %2898 = vmatprep.subr.bf16.mxu0 0
  %2899 = vmatpush1.bf16.msra.mxu0 %v2568
  %2900 = vmatprep.subr.bf16.mxu0 0
  %2901 = vmatpush1.bf16.msra.mxu0 %v2567
  %2902 = vmatprep.subr.bf16.mxu0 0
  %2903 = vmatpush1.bf16.msra.mxu0 %v2566
  %2904 = vmatprep.subr.bf16.mxu0 0
  %2905 = vmatpush1.bf16.msra.mxu0 %v2565
  %2906 = vmatprep.subr.bf16.mxu0 0
  %2907 = vmatpush1.bf16.msra.mxu0 %v2564
  %2908 = vmatprep.subr.bf16.mxu0 0
  %2909 = vmatpush1.bf16.msra.mxu0 %v2563
  %2910 = vmatprep.subr.bf16.mxu0 0
  %2911 = vmatpush1.bf16.msra.mxu0 %v2562
  %2912 = vmatprep.subr.bf16.mxu0 0
  %2913 = vmatpush1.bf16.msra.mxu0 %v2561
  %2914 = vmatprep.subr.bf16.mxu0 0
  %2915 = vmatpush2.bf16.msra.mxu0 %v2576
  %2916 = vmatprep.subr.bf16.mxu0 0
  %2917 = vmatpush2.bf16.msra.mxu0 %v2575
  %2918 = vmatprep.subr.bf16.mxu0 0
  %2919 = vmatpush2.bf16.msra.mxu0 %v2574
  %2920 = vmatprep.subr.bf16.mxu0 0
  %2921 = vmatpush2.bf16.msra.mxu0 %v2573
  %2922 = vmatprep.subr.bf16.mxu0 0
  %2923 = vmatpush2.bf16.msra.mxu0 %v2572
  %2924 = vmatprep.subr.bf16.mxu0 0
  %2925 = vmatpush2.bf16.msra.mxu0 %v2571
  %2926 = vmatprep.subr.bf16.mxu0 0
  %2927 = vmatpush2.bf16.msra.mxu0 %v2570
  %2928 = vmatprep.subr.bf16.mxu0 0
  %2929 = vmatpush2.bf16.msra.mxu0 %v2569
  %2930 = vmatprep.mubr.bf16.mxu0 %v1645
  %2931 = vmatmul.mubr.bf16.gmra.mxu0 %v1644
  %v2932 = vpop.f32.mrf.mxu0
  %v2933 = vadd.f32 %v2836, %v2932
  %v2934 = vpop.f32.mrf.mxu0
  %v2935 = vpop.f32.mrf.mxu0
  %v2936 = vadd.f32 %v2839, %v2935
  %v2937 = vpop.f32.mrf.mxu0
  %2938 = vmatprep.mubr.bf16.mxu0 %v1661
  %2939 = vmatmul.mubr.bf16.gmra.mxu0 %v1660
  %v2940 = vpop.f32.mrf.mxu0
  %v2941 = vadd.f32 %v2844, %v2940
  %v2942 = vpop.f32.mrf.mxu0
  %v2943 = vpop.f32.mrf.mxu0
  %v2944 = vadd.f32 %v2847, %v2943
  %v2945 = vpop.f32.mrf.mxu0
  %2946 = vmatprep.mubr.bf16.mxu0 %v1677
  %2947 = vmatmul.mubr.bf16.gmra.mxu0 %v1676
  %v2948 = vpop.f32.mrf.mxu0
  %v2949 = vadd.f32 %v2852, %v2948
  %v2950 = vpop.f32.mrf.mxu0
  %v2951 = vpop.f32.mrf.mxu0
  %v2952 = vadd.f32 %v2855, %v2951
  %v2953 = vpop.f32.mrf.mxu0
  %2954 = vmatprep.mubr.bf16.mxu0 %v1693
  %2955 = vmatmul.mubr.bf16.gmra.mxu0 %v1692
  %v2956 = vpop.f32.mrf.mxu0
  %v2957 = vadd.f32 %v2860, %v2956
  %v2958 = vpop.f32.mrf.mxu0
  %v2959 = vpop.f32.mrf.mxu0
  %v2960 = vadd.f32 %v2863, %v2959
  %v2961 = vpop.f32.mrf.mxu0
  %2962 = vmatprep.mubr.bf16.mxu0 %v1709
  %2963 = vmatmul.mubr.bf16.gmra.mxu0 %v1708
  %v2964 = vpop.f32.mrf.mxu0
  %v2965 = vadd.f32 %v2868, %v2964
  %v2966 = vpop.f32.mrf.mxu0
  %v2967 = vpop.f32.mrf.mxu0
  %v2968 = vadd.f32 %v2871, %v2967
  %v2969 = vpop.f32.mrf.mxu0
  %2970 = vmatprep.mubr.bf16.mxu0 %v1725
  %2971 = vmatmul.mubr.bf16.gmra.mxu0 %v1724
  %v2972 = vpop.f32.mrf.mxu0
  %v2973 = vadd.f32 %v2876, %v2972
  %v2974 = vpop.f32.mrf.mxu0
  %v2975 = vpop.f32.mrf.mxu0
  %v2976 = vadd.f32 %v2879, %v2975
  %v2977 = vpop.f32.mrf.mxu0
  %2978 = vmatprep.mubr.bf16.mxu0 %v1741
  %2979 = vmatmul.mubr.bf16.gmra.mxu0 %v1740
  %v2980 = vpop.f32.mrf.mxu0
  %v2981 = vadd.f32 %v2884, %v2980
  %v2982 = vpop.f32.mrf.mxu0
  %v2983 = vpop.f32.mrf.mxu0
  %v2984 = vadd.f32 %v2887, %v2983
  %v2985 = vpop.f32.mrf.mxu0
  %2986 = vmatprep.mubr.bf16.mxu0 %v1757
  %2987 = vmatmul.mubr.bf16.gmra.mxu0 %v1756
  %v2988 = vpop.f32.mrf.mxu0
  %v2989 = vadd.f32 %v2892, %v2988
  %v2990 = vpop.f32.mrf.mxu0
  %v2991 = vpop.f32.mrf.mxu0
  %v2992 = vadd.f32 %v2895, %v2991
  %v2993 = vpop.f32.mrf.mxu0
  %2994 = vdwg.mxu0
  %2995 = vmatprep.subr.bf16.mxu0 0
  %2996 = vmatpush1.bf16.msra.mxu0 %v2584
  %2997 = vmatprep.subr.bf16.mxu0 0
  %2998 = vmatpush1.bf16.msra.mxu0 %v2583
  %2999 = vmatprep.subr.bf16.mxu0 0
  %3000 = vmatpush1.bf16.msra.mxu0 %v2582
  %3001 = vmatprep.subr.bf16.mxu0 0
  %3002 = vmatpush1.bf16.msra.mxu0 %v2581
  %3003 = vmatprep.subr.bf16.mxu0 0
  %3004 = vmatpush1.bf16.msra.mxu0 %v2580
  %3005 = vmatprep.subr.bf16.mxu0 0
  %3006 = vmatpush1.bf16.msra.mxu0 %v2579
  %3007 = vmatprep.subr.bf16.mxu0 0
  %3008 = vmatpush1.bf16.msra.mxu0 %v2578
  %3009 = vmatprep.subr.bf16.mxu0 0
  %3010 = vmatpush1.bf16.msra.mxu0 %v2577
  %3011 = vmatprep.subr.bf16.mxu0 0
  %3012 = vmatpush2.bf16.msra.mxu0 %v2592
  %3013 = vmatprep.subr.bf16.mxu0 0
  %3014 = vmatpush2.bf16.msra.mxu0 %v2591
  %3015 = vmatprep.subr.bf16.mxu0 0
  %3016 = vmatpush2.bf16.msra.mxu0 %v2590
  %3017 = vmatprep.subr.bf16.mxu0 0
  %3018 = vmatpush2.bf16.msra.mxu0 %v2589
  %3019 = vmatprep.subr.bf16.mxu0 0
  %3020 = vmatpush2.bf16.msra.mxu0 %v2588
  %3021 = vmatprep.subr.bf16.mxu0 0
  %3022 = vmatpush2.bf16.msra.mxu0 %v2587
  %3023 = vmatprep.subr.bf16.mxu0 0
  %3024 = vmatpush2.bf16.msra.mxu0 %v2586
  %3025 = vmatprep.subr.bf16.mxu0 0
  %3026 = vmatpush2.bf16.msra.mxu0 %v2585
  %3027 = vmatprep.mubr.bf16.mxu0 %v1647
  %3028 = vmatmul.mubr.bf16.gmra.mxu0 %v1646
  %v3029 = vpop.f32.mrf.mxu0
  %v3030 = vadd.f32 %v2933, %v3029
  %v3031 = vpop.f32.mrf.mxu0
  %v3032 = vpop.f32.mrf.mxu0
  %v3033 = vadd.f32 %v2936, %v3032
  %v3034 = vpop.f32.mrf.mxu0
  %3035 = vmatprep.mubr.bf16.mxu0 %v1663
  %3036 = vmatmul.mubr.bf16.gmra.mxu0 %v1662
  %v3037 = vpop.f32.mrf.mxu0
  %v3038 = vadd.f32 %v2941, %v3037
  %v3039 = vpop.f32.mrf.mxu0
  %v3040 = vpop.f32.mrf.mxu0
  %v3041 = vadd.f32 %v2944, %v3040
  %v3042 = vpop.f32.mrf.mxu0
  %3043 = vmatprep.mubr.bf16.mxu0 %v1679
  %3044 = vmatmul.mubr.bf16.gmra.mxu0 %v1678
  %v3045 = vpop.f32.mrf.mxu0
  %v3046 = vadd.f32 %v2949, %v3045
  %v3047 = vpop.f32.mrf.mxu0
  %v3048 = vpop.f32.mrf.mxu0
  %v3049 = vadd.f32 %v2952, %v3048
  %v3050 = vpop.f32.mrf.mxu0
  %3051 = vmatprep.mubr.bf16.mxu0 %v1695
  %3052 = vmatmul.mubr.bf16.gmra.mxu0 %v1694
  %v3053 = vpop.f32.mrf.mxu0
  %v3054 = vadd.f32 %v2957, %v3053
  %v3055 = vpop.f32.mrf.mxu0
  %v3056 = vpop.f32.mrf.mxu0
  %v3057 = vadd.f32 %v2960, %v3056
  %v3058 = vpop.f32.mrf.mxu0
  %3059 = vmatprep.mubr.bf16.mxu0 %v1711
  %3060 = vmatmul.mubr.bf16.gmra.mxu0 %v1710
  %v3061 = vpop.f32.mrf.mxu0
  %v3062 = vadd.f32 %v2965, %v3061
  %v3063 = vpop.f32.mrf.mxu0
  %v3064 = vpop.f32.mrf.mxu0
  %v3065 = vadd.f32 %v2968, %v3064
  %v3066 = vpop.f32.mrf.mxu0
  %3067 = vmatprep.mubr.bf16.mxu0 %v1727
  %3068 = vmatmul.mubr.bf16.gmra.mxu0 %v1726
  %v3069 = vpop.f32.mrf.mxu0
  %v3070 = vadd.f32 %v2973, %v3069
  %v3071 = vpop.f32.mrf.mxu0
  %v3072 = vpop.f32.mrf.mxu0
  %v3073 = vadd.f32 %v2976, %v3072
  %v3074 = vpop.f32.mrf.mxu0
  %3075 = vmatprep.mubr.bf16.mxu0 %v1743
  %3076 = vmatmul.mubr.bf16.gmra.mxu0 %v1742
  %v3077 = vpop.f32.mrf.mxu0
  %v3078 = vadd.f32 %v2981, %v3077
  %v3079 = vpop.f32.mrf.mxu0
  %v3080 = vpop.f32.mrf.mxu0
  %v3081 = vadd.f32 %v2984, %v3080
  %v3082 = vpop.f32.mrf.mxu0
  %3083 = vmatprep.mubr.bf16.mxu0 %v1759
  %3084 = vmatmul.mubr.bf16.gmra.mxu0 %v1758
  %v3085 = vpop.f32.mrf.mxu0
  %v3086 = vadd.f32 %v2989, %v3085
  %v3087 = vpop.f32.mrf.mxu0
  %v3088 = vpop.f32.mrf.mxu0
  %v3089 = vadd.f32 %v2992, %v3088
  %v3090 = vpop.f32.mrf.mxu0
  %3091 = vdwg.mxu0
  %3092 = vmatprep.subr.bf16.mxu0 0
  %3093 = vmatpush1.bf16.msra.mxu0 %v2600
  %3094 = vmatprep.subr.bf16.mxu0 0
  %3095 = vmatpush1.bf16.msra.mxu0 %v2599
  %3096 = vmatprep.subr.bf16.mxu0 0
  %3097 = vmatpush1.bf16.msra.mxu0 %v2598
  %3098 = vmatprep.subr.bf16.mxu0 0
  %3099 = vmatpush1.bf16.msra.mxu0 %v2597
  %3100 = vmatprep.subr.bf16.mxu0 0
  %3101 = vmatpush1.bf16.msra.mxu0 %v2596
  %3102 = vmatprep.subr.bf16.mxu0 0
  %3103 = vmatpush1.bf16.msra.mxu0 %v2595
  %3104 = vmatprep.subr.bf16.mxu0 0
  %3105 = vmatpush1.bf16.msra.mxu0 %v2594
  %3106 = vmatprep.subr.bf16.mxu0 0
  %3107 = vmatpush1.bf16.msra.mxu0 %v2593
  %3108 = vmatprep.subr.bf16.mxu0 0
  %3109 = vmatpush2.bf16.msra.mxu0 %v2608
  %3110 = vmatprep.subr.bf16.mxu0 0
  %3111 = vmatpush2.bf16.msra.mxu0 %v2607
  %3112 = vmatprep.subr.bf16.mxu0 0
  %3113 = vmatpush2.bf16.msra.mxu0 %v2606
  %3114 = vmatprep.subr.bf16.mxu0 0
  %3115 = vmatpush2.bf16.msra.mxu0 %v2605
  %3116 = vmatprep.subr.bf16.mxu0 0
  %3117 = vmatpush2.bf16.msra.mxu0 %v2604
  %3118 = vmatprep.subr.bf16.mxu0 0
  %3119 = vmatpush2.bf16.msra.mxu0 %v2603
  %3120 = vmatprep.subr.bf16.mxu0 0
  %3121 = vmatpush2.bf16.msra.mxu0 %v2602
  %3122 = vmatprep.subr.bf16.mxu0 0
  %3123 = vmatpush2.bf16.msra.mxu0 %v2601
  %3124 = vmatprep.mubr.bf16.mxu0 %v1649
  %3125 = vmatmul.mubr.bf16.gmra.mxu0 %v1648
  %v3126 = vpop.f32.mrf.mxu0
  %v3127 = vadd.f32 %v3030, %v3126
  %v3128 = vpop.f32.mrf.mxu0
  %v3129 = vpop.f32.mrf.mxu0
  %v3130 = vadd.f32 %v3033, %v3129
  %v3131 = vpop.f32.mrf.mxu0
  %3132 = vmatprep.mubr.bf16.mxu0 %v1665
  %3133 = vmatmul.mubr.bf16.gmra.mxu0 %v1664
  %v3134 = vpop.f32.mrf.mxu0
  %v3135 = vadd.f32 %v3038, %v3134
  %v3136 = vpop.f32.mrf.mxu0
  %v3137 = vpop.f32.mrf.mxu0
  %v3138 = vadd.f32 %v3041, %v3137
  %v3139 = vpop.f32.mrf.mxu0
  %3140 = vmatprep.mubr.bf16.mxu0 %v1681
  %3141 = vmatmul.mubr.bf16.gmra.mxu0 %v1680
  %v3142 = vpop.f32.mrf.mxu0
  %v3143 = vadd.f32 %v3046, %v3142
  %v3144 = vpop.f32.mrf.mxu0
  %v3145 = vpop.f32.mrf.mxu0
  %v3146 = vadd.f32 %v3049, %v3145
  %v3147 = vpop.f32.mrf.mxu0
  %3148 = vmatprep.mubr.bf16.mxu0 %v1697
  %3149 = vmatmul.mubr.bf16.gmra.mxu0 %v1696
  %v3150 = vpop.f32.mrf.mxu0
  %v3151 = vadd.f32 %v3054, %v3150
  %v3152 = vpop.f32.mrf.mxu0
  %v3153 = vpop.f32.mrf.mxu0
  %v3154 = vadd.f32 %v3057, %v3153
  %v3155 = vpop.f32.mrf.mxu0
  %3156 = vmatprep.mubr.bf16.mxu0 %v1713
  %3157 = vmatmul.mubr.bf16.gmra.mxu0 %v1712
  %v3158 = vpop.f32.mrf.mxu0
  %v3159 = vadd.f32 %v3062, %v3158
  %v3160 = vpop.f32.mrf.mxu0
  %v3161 = vpop.f32.mrf.mxu0
  %v3162 = vadd.f32 %v3065, %v3161
  %v3163 = vpop.f32.mrf.mxu0
  %3164 = vmatprep.mubr.bf16.mxu0 %v1729
  %3165 = vmatmul.mubr.bf16.gmra.mxu0 %v1728
  %v3166 = vpop.f32.mrf.mxu0
  %v3167 = vadd.f32 %v3070, %v3166
  %v3168 = vpop.f32.mrf.mxu0
  %v3169 = vpop.f32.mrf.mxu0
  %v3170 = vadd.f32 %v3073, %v3169
  %v3171 = vpop.f32.mrf.mxu0
  %3172 = vmatprep.mubr.bf16.mxu0 %v1745
  %3173 = vmatmul.mubr.bf16.gmra.mxu0 %v1744
  %v3174 = vpop.f32.mrf.mxu0
  %v3175 = vadd.f32 %v3078, %v3174
  %v3176 = vpop.f32.mrf.mxu0
  %v3177 = vpop.f32.mrf.mxu0
  %v3178 = vadd.f32 %v3081, %v3177
  %v3179 = vpop.f32.mrf.mxu0
  %3180 = vmatprep.mubr.bf16.mxu0 %v1761
  %3181 = vmatmul.mubr.bf16.gmra.mxu0 %v1760
  %v3182 = vpop.f32.mrf.mxu0
  %v3183 = vadd.f32 %v3086, %v3182
  %v3184 = vpop.f32.mrf.mxu0
  %v3185 = vpop.f32.mrf.mxu0
  %v3186 = vadd.f32 %v3089, %v3185
  %v3187 = vpop.f32.mrf.mxu0
  %3188 = vdwg.mxu0
  %3189 = vmatprep.subr.bf16.mxu0 0
  %3190 = vmatpush1.bf16.msra.mxu0 %v2616
  %3191 = vmatprep.subr.bf16.mxu0 0
  %3192 = vmatpush1.bf16.msra.mxu0 %v2615
  %3193 = vmatprep.subr.bf16.mxu0 0
  %3194 = vmatpush1.bf16.msra.mxu0 %v2614
  %3195 = vmatprep.subr.bf16.mxu0 0
  %3196 = vmatpush1.bf16.msra.mxu0 %v2613
  %3197 = vmatprep.subr.bf16.mxu0 0
  %3198 = vmatpush1.bf16.msra.mxu0 %v2612
  %3199 = vmatprep.subr.bf16.mxu0 0
  %3200 = vmatpush1.bf16.msra.mxu0 %v2611
  %3201 = vmatprep.subr.bf16.mxu0 0
  %3202 = vmatpush1.bf16.msra.mxu0 %v2610
  %3203 = vmatprep.subr.bf16.mxu0 0
  %3204 = vmatpush1.bf16.msra.mxu0 %v2609
  %3205 = vmatprep.subr.bf16.mxu0 0
  %3206 = vmatpush2.bf16.msra.mxu0 %v2624
  %3207 = vmatprep.subr.bf16.mxu0 0
  %3208 = vmatpush2.bf16.msra.mxu0 %v2623
  %3209 = vmatprep.subr.bf16.mxu0 0
  %3210 = vmatpush2.bf16.msra.mxu0 %v2622
  %3211 = vmatprep.subr.bf16.mxu0 0
  %3212 = vmatpush2.bf16.msra.mxu0 %v2621
  %3213 = vmatprep.subr.bf16.mxu0 0
  %3214 = vmatpush2.bf16.msra.mxu0 %v2620
  %3215 = vmatprep.subr.bf16.mxu0 0
  %3216 = vmatpush2.bf16.msra.mxu0 %v2619
  %3217 = vmatprep.subr.bf16.mxu0 0
  %3218 = vmatpush2.bf16.msra.mxu0 %v2618
  %3219 = vmatprep.subr.bf16.mxu0 0
  %3220 = vmatpush2.bf16.msra.mxu0 %v2617
  %3221 = vmatprep.mubr.bf16.mxu0 %v1651
  %3222 = vmatmul.mubr.bf16.gmra.mxu0 %v1650
  %v3223 = vpop.f32.mrf.mxu0
  %v3224 = vadd.f32 %v3127, %v3223
  %v3225 = vpop.f32.mrf.mxu0
  %v3226 = vpop.f32.mrf.mxu0
  %v3227 = vadd.f32 %v3130, %v3226
  %v3228 = vpop.f32.mrf.mxu0
  %3229 = vmatprep.mubr.bf16.mxu0 %v1667
  %3230 = vmatmul.mubr.bf16.gmra.mxu0 %v1666
  %v3231 = vpop.f32.mrf.mxu0
  %v3232 = vadd.f32 %v3135, %v3231
  %v3233 = vpop.f32.mrf.mxu0
  %v3234 = vpop.f32.mrf.mxu0
  %v3235 = vadd.f32 %v3138, %v3234
  %v3236 = vpop.f32.mrf.mxu0
  %3237 = vmatprep.mubr.bf16.mxu0 %v1683
  %3238 = vmatmul.mubr.bf16.gmra.mxu0 %v1682
  %v3239 = vpop.f32.mrf.mxu0
  %v3240 = vadd.f32 %v3143, %v3239
  %v3241 = vpop.f32.mrf.mxu0
  %v3242 = vpop.f32.mrf.mxu0
  %v3243 = vadd.f32 %v3146, %v3242
  %v3244 = vpop.f32.mrf.mxu0
  %3245 = vmatprep.mubr.bf16.mxu0 %v1699
  %3246 = vmatmul.mubr.bf16.gmra.mxu0 %v1698
  %v3247 = vpop.f32.mrf.mxu0
  %v3248 = vadd.f32 %v3151, %v3247
  %v3249 = vpop.f32.mrf.mxu0
  %v3250 = vpop.f32.mrf.mxu0
  %v3251 = vadd.f32 %v3154, %v3250
  %v3252 = vpop.f32.mrf.mxu0
  %3253 = vmatprep.mubr.bf16.mxu0 %v1715
  %3254 = vmatmul.mubr.bf16.gmra.mxu0 %v1714
  %v3255 = vpop.f32.mrf.mxu0
  %v3256 = vadd.f32 %v3159, %v3255
  %v3257 = vpop.f32.mrf.mxu0
  %v3258 = vpop.f32.mrf.mxu0
  %v3259 = vadd.f32 %v3162, %v3258
  %v3260 = vpop.f32.mrf.mxu0
  %3261 = vmatprep.mubr.bf16.mxu0 %v1731
  %3262 = vmatmul.mubr.bf16.gmra.mxu0 %v1730
  %v3263 = vpop.f32.mrf.mxu0
  %v3264 = vadd.f32 %v3167, %v3263
  %v3265 = vpop.f32.mrf.mxu0
  %v3266 = vpop.f32.mrf.mxu0
  %v3267 = vadd.f32 %v3170, %v3266
  %v3268 = vpop.f32.mrf.mxu0
  %3269 = vmatprep.mubr.bf16.mxu0 %v1747
  %3270 = vmatmul.mubr.bf16.gmra.mxu0 %v1746
  %v3271 = vpop.f32.mrf.mxu0
  %v3272 = vadd.f32 %v3175, %v3271
  %v3273 = vpop.f32.mrf.mxu0
  %v3274 = vpop.f32.mrf.mxu0
  %v3275 = vadd.f32 %v3178, %v3274
  %v3276 = vpop.f32.mrf.mxu0
  %3277 = vmatprep.mubr.bf16.mxu0 %v1763
  %3278 = vmatmul.mubr.bf16.gmra.mxu0 %v1762
  %v3279 = vpop.f32.mrf.mxu0
  %v3280 = vadd.f32 %v3183, %v3279
  %v3281 = vpop.f32.mrf.mxu0
  %v3282 = vpop.f32.mrf.mxu0
  %v3283 = vadd.f32 %v3186, %v3282
  %v3284 = vpop.f32.mrf.mxu0
  %3285 = vdwg.mxu0
  %3286 = vmatprep.subr.bf16.mxu0 0
  %3287 = vmatpush1.bf16.msra.mxu0 %v2632
  %3288 = vmatprep.subr.bf16.mxu0 0
  %3289 = vmatpush1.bf16.msra.mxu0 %v2631
  %3290 = vmatprep.subr.bf16.mxu0 0
  %3291 = vmatpush1.bf16.msra.mxu0 %v2630
  %3292 = vmatprep.subr.bf16.mxu0 0
  %3293 = vmatpush1.bf16.msra.mxu0 %v2629
  %3294 = vmatprep.subr.bf16.mxu0 0
  %3295 = vmatpush1.bf16.msra.mxu0 %v2628
  %3296 = vmatprep.subr.bf16.mxu0 0
  %3297 = vmatpush1.bf16.msra.mxu0 %v2627
  %3298 = vmatprep.subr.bf16.mxu0 0
  %3299 = vmatpush1.bf16.msra.mxu0 %v2626
  %3300 = vmatprep.subr.bf16.mxu0 0
  %3301 = vmatpush1.bf16.msra.mxu0 %v2625
  %3302 = vmatprep.subr.bf16.mxu0 0
  %3303 = vmatpush2.bf16.msra.mxu0 %v2640
  %3304 = vmatprep.subr.bf16.mxu0 0
  %3305 = vmatpush2.bf16.msra.mxu0 %v2639
  %3306 = vmatprep.subr.bf16.mxu0 0
  %3307 = vmatpush2.bf16.msra.mxu0 %v2638
  %3308 = vmatprep.subr.bf16.mxu0 0
  %3309 = vmatpush2.bf16.msra.mxu0 %v2637
  %3310 = vmatprep.subr.bf16.mxu0 0
  %3311 = vmatpush2.bf16.msra.mxu0 %v2636
  %3312 = vmatprep.subr.bf16.mxu0 0
  %3313 = vmatpush2.bf16.msra.mxu0 %v2635
  %3314 = vmatprep.subr.bf16.mxu0 0
  %3315 = vmatpush2.bf16.msra.mxu0 %v2634
  %3316 = vmatprep.subr.bf16.mxu0 0
  %3317 = vmatpush2.bf16.msra.mxu0 %v2633
  %3318 = vmatprep.mubr.bf16.mxu0 %v1653
  %3319 = vmatmul.mubr.bf16.gmra.mxu0 %v1652
  %v3320 = vpop.f32.mrf.mxu0
  %v3321 = vadd.f32 %v3224, %v3320
  %v3322 = vpop.f32.mrf.mxu0
  %v3323 = vpop.f32.mrf.mxu0
  %v3324 = vadd.f32 %v3227, %v3323
  %v3325 = vpop.f32.mrf.mxu0
  %3326 = vmatprep.mubr.bf16.mxu0 %v1669
  %3327 = vmatmul.mubr.bf16.gmra.mxu0 %v1668
  %v3328 = vpop.f32.mrf.mxu0
  %v3329 = vadd.f32 %v3232, %v3328
  %v3330 = vpop.f32.mrf.mxu0
  %v3331 = vpop.f32.mrf.mxu0
  %v3332 = vadd.f32 %v3235, %v3331
  %v3333 = vpop.f32.mrf.mxu0
  %3334 = vmatprep.mubr.bf16.mxu0 %v1685
  %3335 = vmatmul.mubr.bf16.gmra.mxu0 %v1684
  %v3336 = vpop.f32.mrf.mxu0
  %v3337 = vadd.f32 %v3240, %v3336
  %v3338 = vpop.f32.mrf.mxu0
  %v3339 = vpop.f32.mrf.mxu0
  %v3340 = vadd.f32 %v3243, %v3339
  %v3341 = vpop.f32.mrf.mxu0
  %3342 = vmatprep.mubr.bf16.mxu0 %v1701
  %3343 = vmatmul.mubr.bf16.gmra.mxu0 %v1700
  %v3344 = vpop.f32.mrf.mxu0
  %v3345 = vadd.f32 %v3248, %v3344
  %v3346 = vpop.f32.mrf.mxu0
  %v3347 = vpop.f32.mrf.mxu0
  %v3348 = vadd.f32 %v3251, %v3347
  %v3349 = vpop.f32.mrf.mxu0
  %3350 = vmatprep.mubr.bf16.mxu0 %v1717
  %3351 = vmatmul.mubr.bf16.gmra.mxu0 %v1716
  %v3352 = vpop.f32.mrf.mxu0
  %v3353 = vadd.f32 %v3256, %v3352
  %v3354 = vpop.f32.mrf.mxu0
  %v3355 = vpop.f32.mrf.mxu0
  %v3356 = vadd.f32 %v3259, %v3355
  %v3357 = vpop.f32.mrf.mxu0
  %3358 = vmatprep.mubr.bf16.mxu0 %v1733
  %3359 = vmatmul.mubr.bf16.gmra.mxu0 %v1732
  %v3360 = vpop.f32.mrf.mxu0
  %v3361 = vadd.f32 %v3264, %v3360
  %v3362 = vpop.f32.mrf.mxu0
  %v3363 = vpop.f32.mrf.mxu0
  %v3364 = vadd.f32 %v3267, %v3363
  %v3365 = vpop.f32.mrf.mxu0
  %3366 = vmatprep.mubr.bf16.mxu0 %v1749
  %3367 = vmatmul.mubr.bf16.gmra.mxu0 %v1748
  %v3368 = vpop.f32.mrf.mxu0
  %v3369 = vadd.f32 %v3272, %v3368
  %v3370 = vpop.f32.mrf.mxu0
  %v3371 = vpop.f32.mrf.mxu0
  %v3372 = vadd.f32 %v3275, %v3371
  %v3373 = vpop.f32.mrf.mxu0
  %3374 = vmatprep.mubr.bf16.mxu0 %v1765
  %3375 = vmatmul.mubr.bf16.gmra.mxu0 %v1764
  %v3376 = vpop.f32.mrf.mxu0
  %v3377 = vadd.f32 %v3280, %v3376
  %v3378 = vpop.f32.mrf.mxu0
  %v3379 = vpop.f32.mrf.mxu0
  %v3380 = vadd.f32 %v3283, %v3379
  %v3381 = vpop.f32.mrf.mxu0
  %3382 = vdwg.mxu0
  %3383 = vmatprep.subr.bf16.mxu0 0
  %3384 = vmatpush1.bf16.msra.mxu0 %v2648
  %3385 = vmatprep.subr.bf16.mxu0 0
  %3386 = vmatpush1.bf16.msra.mxu0 %v2647
  %3387 = vmatprep.subr.bf16.mxu0 0
  %3388 = vmatpush1.bf16.msra.mxu0 %v2646
  %3389 = vmatprep.subr.bf16.mxu0 0
  %3390 = vmatpush1.bf16.msra.mxu0 %v2645
  %3391 = vmatprep.subr.bf16.mxu0 0
  %3392 = vmatpush1.bf16.msra.mxu0 %v2644
  %3393 = vmatprep.subr.bf16.mxu0 0
  %3394 = vmatpush1.bf16.msra.mxu0 %v2643
  %3395 = vmatprep.subr.bf16.mxu0 0
  %3396 = vmatpush1.bf16.msra.mxu0 %v2642
  %3397 = vmatprep.subr.bf16.mxu0 0
  %3398 = vmatpush1.bf16.msra.mxu0 %v2641
  %3399 = vmatprep.subr.bf16.mxu0 0
  %3400 = vmatpush2.bf16.msra.mxu0 %v2656
  %3401 = vmatprep.subr.bf16.mxu0 0
  %3402 = vmatpush2.bf16.msra.mxu0 %v2655
  %3403 = vmatprep.subr.bf16.mxu0 0
  %3404 = vmatpush2.bf16.msra.mxu0 %v2654
  %3405 = vmatprep.subr.bf16.mxu0 0
  %3406 = vmatpush2.bf16.msra.mxu0 %v2653
  %3407 = vmatprep.subr.bf16.mxu0 0
  %3408 = vmatpush2.bf16.msra.mxu0 %v2652
  %3409 = vmatprep.subr.bf16.mxu0 0
  %3410 = vmatpush2.bf16.msra.mxu0 %v2651
  %3411 = vmatprep.subr.bf16.mxu0 0
  %3412 = vmatpush2.bf16.msra.mxu0 %v2650
  %3413 = vmatprep.subr.bf16.mxu0 0
  %3414 = vmatpush2.bf16.msra.mxu0 %v2649
  %3415 = vmatprep.mubr.bf16.mxu0 %v1655
  %3416 = vmatmul.mubr.bf16.gmra.mxu0 %v1654
  %v3417 = vpop.f32.mrf.mxu0
  %v3418 = vadd.f32 %v3321, %v3417
  %v3419 = vpop.f32.mrf.mxu0
  %v3420 = vpop.f32.mrf.mxu0
  %v3421 = vadd.f32 %v3324, %v3420
  %v3422 = vpop.f32.mrf.mxu0
  %3423 = vmatprep.mubr.bf16.mxu0 %v1671
  %3424 = vmatmul.mubr.bf16.gmra.mxu0 %v1670
  %v3425 = vpop.f32.mrf.mxu0
  %v3426 = vadd.f32 %v3329, %v3425
  %v3427 = vpop.f32.mrf.mxu0
  %v3428 = vpop.f32.mrf.mxu0
  %v3429 = vadd.f32 %v3332, %v3428
  %v3430 = vpop.f32.mrf.mxu0
  %3431 = vmatprep.mubr.bf16.mxu0 %v1687
  %3432 = vmatmul.mubr.bf16.gmra.mxu0 %v1686
  %v3433 = vpop.f32.mrf.mxu0
  %v3434 = vadd.f32 %v3337, %v3433
  %v3435 = vpop.f32.mrf.mxu0
  %v3436 = vpop.f32.mrf.mxu0
  %v3437 = vadd.f32 %v3340, %v3436
  %v3438 = vpop.f32.mrf.mxu0
  %3439 = vmatprep.mubr.bf16.mxu0 %v1703
  %3440 = vmatmul.mubr.bf16.gmra.mxu0 %v1702
  %v3441 = vpop.f32.mrf.mxu0
  %v3442 = vadd.f32 %v3345, %v3441
  %v3443 = vpop.f32.mrf.mxu0
  %v3444 = vpop.f32.mrf.mxu0
  %v3445 = vadd.f32 %v3348, %v3444
  %v3446 = vpop.f32.mrf.mxu0
  %3447 = vmatprep.mubr.bf16.mxu0 %v1719
  %3448 = vmatmul.mubr.bf16.gmra.mxu0 %v1718
  %v3449 = vpop.f32.mrf.mxu0
  %v3450 = vadd.f32 %v3353, %v3449
  %v3451 = vpop.f32.mrf.mxu0
  %v3452 = vpop.f32.mrf.mxu0
  %v3453 = vadd.f32 %v3356, %v3452
  %v3454 = vpop.f32.mrf.mxu0
  %3455 = vmatprep.mubr.bf16.mxu0 %v1735
  %3456 = vmatmul.mubr.bf16.gmra.mxu0 %v1734
  %v3457 = vpop.f32.mrf.mxu0
  %v3458 = vadd.f32 %v3361, %v3457
  %v3459 = vpop.f32.mrf.mxu0
  %v3460 = vpop.f32.mrf.mxu0
  %v3461 = vadd.f32 %v3364, %v3460
  %v3462 = vpop.f32.mrf.mxu0
  %3463 = vmatprep.mubr.bf16.mxu0 %v1751
  %3464 = vmatmul.mubr.bf16.gmra.mxu0 %v1750
  %v3465 = vpop.f32.mrf.mxu0
  %v3466 = vadd.f32 %v3369, %v3465
  %v3467 = vpop.f32.mrf.mxu0
  %v3468 = vpop.f32.mrf.mxu0
  %v3469 = vadd.f32 %v3372, %v3468
  %v3470 = vpop.f32.mrf.mxu0
  %3471 = vmatprep.mubr.bf16.mxu0 %v1767
  %3472 = vmatmul.mubr.bf16.gmra.mxu0 %v1766
  %v3473 = vpop.f32.mrf.mxu0
  %v3474 = vadd.f32 %v3377, %v3473
  %v3475 = vpop.f32.mrf.mxu0
  %v3476 = vpop.f32.mrf.mxu0
  %v3477 = vadd.f32 %v3380, %v3476
  %v3478 = vpop.f32.mrf.mxu0
  %3479 = vdwg.mxu0
  %3480 = vmatprep.subr.bf16.mxu0 0
  %3481 = vmatpush1.bf16.msra.mxu0 %v2664
  %3482 = vmatprep.subr.bf16.mxu0 0
  %3483 = vmatpush1.bf16.msra.mxu0 %v2663
  %3484 = vmatprep.subr.bf16.mxu0 0
  %3485 = vmatpush1.bf16.msra.mxu0 %v2662
  %3486 = vmatprep.subr.bf16.mxu0 0
  %3487 = vmatpush1.bf16.msra.mxu0 %v2661
  %3488 = vmatprep.subr.bf16.mxu0 0
  %3489 = vmatpush1.bf16.msra.mxu0 %v2660
  %3490 = vmatprep.subr.bf16.mxu0 0
  %3491 = vmatpush1.bf16.msra.mxu0 %v2659
  %3492 = vmatprep.subr.bf16.mxu0 0
  %3493 = vmatpush1.bf16.msra.mxu0 %v2658
  %3494 = vmatprep.subr.bf16.mxu0 0
  %3495 = vmatpush1.bf16.msra.mxu0 %v2657
  %3496 = vmatprep.subr.bf16.mxu0 0
  %3497 = vmatpush2.bf16.msra.mxu0 %v2672
  %3498 = vmatprep.subr.bf16.mxu0 0
  %3499 = vmatpush2.bf16.msra.mxu0 %v2671
  %3500 = vmatprep.subr.bf16.mxu0 0
  %3501 = vmatpush2.bf16.msra.mxu0 %v2670
  %3502 = vmatprep.subr.bf16.mxu0 0
  %3503 = vmatpush2.bf16.msra.mxu0 %v2669
  %3504 = vmatprep.subr.bf16.mxu0 0
  %3505 = vmatpush2.bf16.msra.mxu0 %v2668
  %3506 = vmatprep.subr.bf16.mxu0 0
  %3507 = vmatpush2.bf16.msra.mxu0 %v2667
  %3508 = vmatprep.subr.bf16.mxu0 0
  %3509 = vmatpush2.bf16.msra.mxu0 %v2666
  %3510 = vmatprep.subr.bf16.mxu0 0
  %3511 = vmatpush2.bf16.msra.mxu0 %v2665
  %3512 = vmatprep.mubr.bf16.mxu0 %v1657
  %3513 = vmatmul.mubr.bf16.gmra.mxu0 %v1656
  %v3514 = vpop.f32.mrf.mxu0
  %v3515 = vadd.f32 %v3418, %v3514
  %v3516 = vpop.f32.mrf.mxu0
  %v3517 = vpop.f32.mrf.mxu0
  %v3518 = vadd.f32 %v3421, %v3517
  %v3519 = vpop.f32.mrf.mxu0
  %3520 = vmatprep.mubr.bf16.mxu0 %v1673
  %3521 = vmatmul.mubr.bf16.gmra.mxu0 %v1672
  %v3522 = vpop.f32.mrf.mxu0
  %v3523 = vadd.f32 %v3426, %v3522
  %v3524 = vpop.f32.mrf.mxu0
  %v3525 = vpop.f32.mrf.mxu0
  %v3526 = vadd.f32 %v3429, %v3525
  %v3527 = vpop.f32.mrf.mxu0
  %3528 = vmatprep.mubr.bf16.mxu0 %v1689
  %3529 = vmatmul.mubr.bf16.gmra.mxu0 %v1688
  %v3530 = vpop.f32.mrf.mxu0
  %v3531 = vadd.f32 %v3434, %v3530
  %v3532 = vpop.f32.mrf.mxu0
  %v3533 = vpop.f32.mrf.mxu0
  %v3534 = vadd.f32 %v3437, %v3533
  %v3535 = vpop.f32.mrf.mxu0
  %3536 = vmatprep.mubr.bf16.mxu0 %v1705
  %3537 = vmatmul.mubr.bf16.gmra.mxu0 %v1704
  %v3538 = vpop.f32.mrf.mxu0
  %v3539 = vadd.f32 %v3442, %v3538
  %v3540 = vpop.f32.mrf.mxu0
  %v3541 = vpop.f32.mrf.mxu0
  %v3542 = vadd.f32 %v3445, %v3541
  %v3543 = vpop.f32.mrf.mxu0
  %3544 = vmatprep.mubr.bf16.mxu0 %v1721
  %3545 = vmatmul.mubr.bf16.gmra.mxu0 %v1720
  %v3546 = vpop.f32.mrf.mxu0
  %v3547 = vadd.f32 %v3450, %v3546
  %v3548 = vpop.f32.mrf.mxu0
  %v3549 = vpop.f32.mrf.mxu0
  %v3550 = vadd.f32 %v3453, %v3549
  %v3551 = vpop.f32.mrf.mxu0
  %3552 = vmatprep.mubr.bf16.mxu0 %v1737
  %3553 = vmatmul.mubr.bf16.gmra.mxu0 %v1736
  %v3554 = vpop.f32.mrf.mxu0
  %v3555 = vadd.f32 %v3458, %v3554
  %v3556 = vpop.f32.mrf.mxu0
  %v3557 = vpop.f32.mrf.mxu0
  %v3558 = vadd.f32 %v3461, %v3557
  %v3559 = vpop.f32.mrf.mxu0
  %3560 = vmatprep.mubr.bf16.mxu0 %v1753
  %3561 = vmatmul.mubr.bf16.gmra.mxu0 %v1752
  %v3562 = vpop.f32.mrf.mxu0
  %v3563 = vadd.f32 %v3466, %v3562
  %v3564 = vpop.f32.mrf.mxu0
  %v3565 = vpop.f32.mrf.mxu0
  %v3566 = vadd.f32 %v3469, %v3565
  %v3567 = vpop.f32.mrf.mxu0
  %3568 = vmatprep.mubr.bf16.mxu0 %v1769
  %3569 = vmatmul.mubr.bf16.gmra.mxu0 %v1768
  %v3570 = vpop.f32.mrf.mxu0
  %v3571 = vadd.f32 %v3474, %v3570
  %v3572 = vpop.f32.mrf.mxu0
  %v3573 = vpop.f32.mrf.mxu0
  %v3574 = vadd.f32 %v3477, %v3573
  %v3575 = vpop.f32.mrf.mxu0
  %3576 = vdwg.mxu0
  %v3577 = vmax.f32 %v3515, 0.0
  %v3578 = vmax.f32 %v3518, 0.0
  %v3579 = vmax.f32 %v3523, 0.0
  %v3580 = vmax.f32 %v3526, 0.0
  %v3581 = vmax.f32 %v3531, 0.0
  %v3582 = vmax.f32 %v3534, 0.0
  %v3583 = vmax.f32 %v3539, 0.0
  %v3584 = vmax.f32 %v3542, 0.0
  %v3585 = vmax.f32 %v3547, 0.0
  %v3586 = vmax.f32 %v3550, 0.0
  %v3587 = vmax.f32 %v3555, 0.0
  %v3588 = vmax.f32 %v3558, 0.0
  %v3589 = vmax.f32 %v3563, 0.0
  %v3590 = vmax.f32 %v3566, 0.0
  %v3591 = vmax.f32 %v3571, 0.0
  %v3592 = vmax.f32 %v3574, 0.0
  %v3593 = vld [vmem:[%s5] sm:$0x1]
  %v3594 = vpack.c.bf16 %v3578, %v3577
  %v3595 = vpack.c.bf16 %v3580, %v3579
  %v3596 = vpack.c.bf16 %v3582, %v3581
  %v3597 = vpack.c.bf16 %v3584, %v3583
  %v3598 = vpack.c.bf16 %v3586, %v3585
  %v3599 = vpack.c.bf16 %v3588, %v3587
  %v3600 = vpack.c.bf16 %v3590, %v3589
  %v3601 = vpack.c.bf16 %v3592, %v3591
  %v3602 = vld [vmem:[#allocation2] sm:$0x1]
  %3604 = vset.pattern.permute.xlu0 0
  %3605 = vperm.xlu0 %3604, %v3602
  %v3606 = vpop.permute.xlu0 %3605
  %v3608 = vlaneseq
  %v3609 = vshrl.u32 %v3608, 7
  %v3610 = vsub.s32 0, %v3609
  %v3611 = vrot.slane %v3606, %v3610
  %3612 = vmatprep.subr.bf16.mxu0 0
  %3613 = vmatpush1.bf16.xpose.msra.mxu0 %v3601
  %3614 = vmatprep.subr.bf16.mxu0 0
  %3615 = vmatpush1.bf16.xpose.msra.mxu0 %v3600
  %3616 = vmatprep.subr.bf16.mxu0 0
  %3617 = vmatpush1.bf16.xpose.msra.mxu0 %v3599
  %3618 = vmatprep.subr.bf16.mxu0 0
  %3619 = vmatpush1.bf16.xpose.msra.mxu0 %v3598
  %3620 = vmatprep.subr.bf16.mxu0 0
  %3621 = vmatpush1.bf16.xpose.msra.mxu0 %v3597
  %3622 = vmatprep.subr.bf16.mxu0 0
  %3623 = vmatpush1.bf16.xpose.msra.mxu0 %v3596
  %3624 = vmatprep.subr.bf16.mxu0 0
  %3625 = vmatpush1.bf16.xpose.msra.mxu0 %v3595
  %3626 = vmatprep.subr.bf16.mxu0 0
  %3627 = vmatpush1.bf16.xpose.msra.mxu0 %v3594
  %3628 = vmatprep.subr.bf16.mxu0 0
  %3629 = vmatpush2.bf16.xpose.msra.mxu0 0
  %3630 = vmatprep.subr.bf16.mxu0 0
  %3631 = vmatpush2.bf16.xpose.msra.mxu0 0
  %3632 = vmatprep.subr.bf16.mxu0 0
  %3633 = vmatpush2.bf16.xpose.msra.mxu0 0
  %3634 = vmatprep.subr.bf16.mxu0 0
  %3635 = vmatpush2.bf16.xpose.msra.mxu0 0
  %3636 = vmatprep.subr.bf16.mxu0 0
  %3637 = vmatpush2.bf16.xpose.msra.mxu0 0
  %3638 = vmatprep.subr.bf16.mxu0 0
  %3639 = vmatpush2.bf16.xpose.msra.mxu0 0
  %3640 = vmatprep.subr.bf16.mxu0 0
  %3641 = vmatpush2.bf16.xpose.msra.mxu0 0
  %3642 = vmatprep.subr.bf16.mxu0 0
  %3643 = vmatpush2.bf16.xpose.msra.mxu0 0
  %3644 = vmatprep.mubr.bf16.mxu0 0
  %3645 = vmatmul.mubr.bf16.gmra.mxu0 %v3593
  %v3646 = vpop.f32.mrf.mxu0
  %v3647 = vadd.f32 %v3611, %v3646
  %v3648 = vpop.f32.mrf.mxu0
  %v3649 = vpop.f32.mrf.mxu0
  %v3650 = vpop.f32.mrf.mxu0
  %3651 = vdwg.mxu0
  %3652 = vst [vmem:[%s7] sm:$0x1] %v3647
  // Predicated region
  $region30: #{critic_forward.1} parent=0 // pred_check
    _
  $region31: #{critic_forward.1} parent=0 // pred_check_branch
    %3654 = sbr.rel (0) target = $region33
  $region32: #{critic_forward.1} parent=0 // pred_region
    _
  $region33: #{critic_forward.1} parent=0 // pred_fallthru
    _
  // Predicated region
  $region34: #{critic_forward.1} parent=0 // pred_check
    _
  $region35: #{critic_forward.1} parent=0 // pred_check_branch
    %3656 = sbr.rel (0) target = $region37
  $region36: #{critic_forward.1} parent=0 // pred_region
    _
  $region37: #{critic_forward.1} parent=0 // pred_fallthru
    _

</llo_original>
